<compile_context>
chip_gen: v7x
topology: tpu7x:2x2x1
jax: 0.10.0
libtpu: 0.0.40
codegen_flags: <defaults>
</compile_context>

<pallas_src>
import functools

import numpy as np
import jax
import jax.numpy as jnp
from jax.experimental import pallas as pl
from jax.experimental.pallas import tpu as pltpu


def _round8(n):
    return (n + 7) // 8 * 8


# ---------------------------------------------------------------------------
# Slab layouts (shared between host-side packing and the kernel)
# ---------------------------------------------------------------------------

def _weight_layout(Cl, Cm, Cs, Co):
    """Row offsets of each conv weight inside the packed bf16 weight slab."""
    segs = [
        ("lpre",  Cl, 5 * 5 * Cl),
        ("lpost", Co, 3 * 3 * Cl),
        ("m",     Co, 3 * 3 * Cm),
        ("spre",  Cm, 3 * 3 * Cs),
        ("spost", Co, 3 * 3 * Cm),
        ("t0",    Cm, 3 * Co),
        ("t1",    Cl, 3 * 3 * Cm),
        ("t2",    3,  Cl),
    ]
    offs, r, width = {}, 0, 0
    for name, rows, cols in segs:
        offs[name] = (r, rows, cols)
        r += _round8(rows)
        width = max(width, cols)
    return offs, r, width


def _aux_layout(F, Hl, Wl, Hm, Wm, Hs, Ws):
    """Row offsets of the selector matrices inside the packed bf16 aux slab."""
    Wpl, Wpm, Wps = Wl + 4, Wm + 2, Ws + 2
    Lpm = (Hm + 3) * Wpm
    rows = {
        "S": F * Hl * Wpl - Wpl - 1,   # 2x2 max+avg pooling selector
        "U": F * Hs * Wps,             # bilinear 2x upsample into padded layout
        "P": F * Hm * Wpm,             # wide layout -> padded layout selector
    }
    offs, r = {}, 0
    for name in ("S", "U", "P"):
        offs[name] = (r, rows[name])
        r += _round8(rows[name])
    return offs, r, F * Lpm


def _bilinear_up2_matrix(n):
    """1-D matrix A (n, 2n): out = x @ A, bilinear 2x, align_corners=False."""
    a = np.zeros((n, 2 * n), np.float32)
    for o in range(2 * n):
        src = (o + 0.5) / 2.0 - 0.5
        i0 = int(np.floor(src))
        f = src - i0
        lo = min(max(i0, 0), n - 1)
        hi = min(max(i0 + 1, 0), n - 1)
        a[lo, o] += 1.0 - f
        a[hi, o] += f
    return a


def _pick_batch_fold(n):
    """Batch elements folded into one grid step.

    Single-TensorCore chips (v5e/v6e) want the whole batch folded into one
    lane-dense grid step; multi-core chips (v7x, megacore v4/v5p) want the grid
    kept >= 2 so every core gets a batch group.
    """
    multi_core = False
    try:
        kind = jax.devices()[0].device_kind.lower()
        lite = ("lite" in kind) or ("v5e" in kind) or ("v6e" in kind)
        multi_core = (not lite) and any(t in kind for t in ("v7", "v4", "v5"))
    except Exception:
        pass
    fold = max(1, n // 2) if (multi_core and n >= 2) else n
    while n % fold:
        fold -= 1
    return fold


# ---------------------------------------------------------------------------
# Parameter init (deterministic; eval-mode BN folded into the weights)
# ---------------------------------------------------------------------------

def _init_conv_bn(key, k, cin, cout, eps=1e-5):
    k1, k2, k3 = jax.random.split(key, 3)
    # layout: (cout, (ki*k + kj)*cin + ci)  ==  torch (cout, cin, ki, kj)
    w = 0.1 * jax.random.normal(k1, (cout, k * k * cin), jnp.float32)
    gamma = 1.0 + 0.1 * jax.random.normal(k2, (cout,), jnp.float32)
    beta = 0.1 * jax.random.normal(k3, (cout,), jnp.float32)
    running_mean = jnp.zeros((cout,), jnp.float32)
    running_var = jnp.ones((cout,), jnp.float32)
    scale = gamma / jnp.sqrt(running_var + eps)
    shift = beta - running_mean * scale
    return np.asarray(w * scale[:, None]), np.asarray(shift)


def init_siu_params(key, in_dim_l, in_dim_m, in_dim_s, out_dim):
    keys = jax.random.split(key, 9)
    p = {}
    p["lpre"] = _init_conv_bn(keys[0], 5, in_dim_l, in_dim_l)
    p["lpost"] = _init_conv_bn(keys[1], 3, in_dim_l, out_dim)
    p["m"] = _init_conv_bn(keys[2], 3, in_dim_m, out_dim)
    p["spre"] = _init_conv_bn(keys[3], 3, in_dim_s, in_dim_m)
    p["spost"] = _init_conv_bn(keys[4], 3, in_dim_m, out_dim)
    p["t0"] = _init_conv_bn(keys[5], 1, 3 * out_dim, in_dim_m)
    p["t1"] = _init_conv_bn(keys[6], 3, in_dim_m, in_dim_l)
    w2 = np.asarray(0.1 * jax.random.normal(keys[7], (3, in_dim_l), jnp.float32))
    b2 = np.asarray(0.1 * jax.random.normal(keys[8], (3,), jnp.float32))
    p["t2"] = (w2, b2)                     # final plain conv (bias, no BN/act)
    return p


def pack_siu_constants(params, shapes, fold):
    """Pack weights/biases + pooling/upsample/padding selectors into 3 slabs."""
    (Cl, Cm, Cs, Co, Hl, Wl, Hm, Wm, Hs, Ws) = shapes
    F = fold
    woffs, wrows, wwidth = _weight_layout(Cl, Cm, Cs, Co)
    w_slab = np.zeros((wrows, wwidth), np.float32)
    b_slab = np.zeros((wrows, 1), np.float32)
    for name, (r0, rows, cols) in woffs.items():
        w, b = params[name]
        assert w.shape == (rows, cols)
        w_slab[r0:r0 + rows, :cols] = w
        b_slab[r0:r0 + rows, 0] = b

    Wpl, Wpm, Wps = Wl + 4, Wm + 2, Ws + 2
    Lpm = (Hm + 3) * Wpm
    aoffs, arows, awidth = _aux_layout(F, Hl, Wl, Hm, Wm, Hs, Ws)
    aux = np.zeros((arows, awidth), np.float32)

    # S: 2x2 (max + avg) pooling selector; writes straight into the zero-padded
    #    middle-scale layout needed by the next 3x3 conv (borders stay zero).
    r0, _ = aoffs["S"]
    for f in range(F):
        for j in range(Hm):
            for i in range(Wm):
                src = f * Hl * Wpl + (2 * j) * Wpl + 2 * i
                dst = f * Lpm + (j + 1) * Wpm + (i + 1)
                aux[r0 + src, dst] = 1.0

    # U: bilinear 2x upsample (align_corners=False) from the wide small-scale
    #    layout into the padded middle-scale layout (junk source cols -> 0).
    r0, _ = aoffs["U"]
    ah = _bilinear_up2_matrix(Hs)
    aw = _bilinear_up2_matrix(Ws)
    for f in range(F):
        for hs in range(Hs):
            for ws in range(Ws):
                for hm in range(Hm):
                    for wm in range(Wm):
                        v = ah[hs, hm] * aw[ws, wm]
                        if v != 0.0:
                            aux[r0 + f * Hs * Wps + hs * Wps + ws,
                                f * Lpm + (hm + 1) * Wpm + (wm + 1)] = v

    # P: drop the junk columns of a wide (Hm, Wpm) map and re-emit it in the
    #    zero-padded layout for the following 3x3 conv.
    r0, _ = aoffs["P"]
    for f in range(F):
        for j in range(Hm):
            for i in range(Wm):
                aux[r0 + f * Hm * Wpm + j * Wpm + i,
                    f * Lpm + (j + 1) * Wpm + (i + 1)] = 1.0

    return (jnp.asarray(w_slab, jnp.bfloat16),
            jnp.asarray(b_slab, jnp.float32),
            jnp.asarray(aux, jnp.bfloat16))


# ---------------------------------------------------------------------------
# Fused SIU forward (single pallas_call)
# ---------------------------------------------------------------------------

def siu_forward(l, m, s, w_slab, b_slab, aux_slab, *, out_dim, fold):
    N, Cl, Hl, Wl = l.shape
    _, Cm, Hm, Wm = m.shape
    _, Cs, Hs, Ws = s.shape
    Co = out_dim
    F = fold
    assert N % F == 0
    assert (Hl, Wl) == (2 * Hm, 2 * Wm) and (Hm, Wm) == (2 * Hs, 2 * Ws)
    Ng = N // F

    Wpl, Wpm, Wps = Wl + 4, Wm + 2, Ws + 2
    Lpl, Lpm, Lps = (Hl + 5) * Wpl, (Hm + 3) * Wpm, (Hs + 3) * Wps
    Lwl, Lwm, Lws = Hl * Wpl, Hm * Wpm, Hs * Wps

    woffs, wrows, wwidth = _weight_layout(Cl, Cm, Cs, Co)
    aoffs, arows, awidth = _aux_layout(F, Hl, Wl, Hm, Wm, Hs, Ws)
    assert w_slab.shape == (wrows, wwidth)
    assert b_slab.shape == (wrows, 1)
    assert aux_slab.shape == (arows, awidth)

    f32, bf16 = jnp.float32, jnp.bfloat16

    def pad_flat_host(x, p):
        # zero-pad once on the host side (p rows top / p+1 rows bottom: the
        # extra row keeps every wide-grid tap slice in bounds) and flatten.
        n, c, h, w = x.shape
        xp = jnp.pad(x, ((0, 0), (0, 0), (p, p + 1), (p, p)))
        return xp.reshape(n, c, (h + 2 * p + 1) * (w + 2 * p)).astype(bf16)

    lp = pad_flat_host(l, 2)          # (N, Cl, Lpl)
    mp = pad_flat_host(m, 1)          # (N, Cm, Lpm)
    sp = pad_flat_host(s, 1)          # (N, Cs, Lps)

    im_rows = max(5 * 5 * Cl, 3 * 3 * max(Cl, Cm, Cs))
    pad_rows = max(Cl, Cm)

    def kernel(lp_ref, mp_ref, sp_ref, w_ref, b_ref, aux_ref, out_ref,
               im_ref, pad_ref):

        def conv(get_x, name, cin, cout, H, W, p, Lp, relu=True):
            """'same' stride-1 conv as ONE im2col-in-VMEM matmul.

            get_x(f) -> (cin, Lp) bf16 zero-padded flat map of fold slot f.
            Output stays in the wide layout (cout, F*H*Wp); junk columns at
            ow in [W, Wp) of every row are dropped only at the very end.
            """
            k = 2 * p + 1
            Wp = W + 2 * p
            Lw = H * Wp
            kk = k * k
            r0, rows, cols = woffs[name]
            assert rows == cout and cols == kk * cin
            # wide-grid trick: the extra (p+1)-row bottom pad keeps every tap
            # slice in bounds (VMEM has no runtime bounds check).
            assert (k - 1) * Wp + (k - 1) + Lw <= Lp
            for f in range(F):
                x = get_x(f)
                for ki in range(k):
                    for kj in range(k):
                        tap = ki * k + kj
                        off = ki * Wp + kj
                        im_ref[tap * cin:(tap + 1) * cin,
                               f * Lw:(f + 1) * Lw] = x[:, off:off + Lw]
            w = w_ref[r0:r0 + cout, 0:kk * cin]
            b = b_ref[r0:r0 + cout, :]
            y = jnp.dot(w, im_ref[0:kk * cin, 0:F * Lw],
                        preferred_element_type=f32) + b
            if relu:
                y = jnp.maximum(y, 0.0)
            return y

        def aux(name):
            r0, rows = aoffs[name]
            return aux_ref[r0:r0 + rows, :]

        # ------------------------------ large branch ------------------------
        l1 = conv(lambda f: lp_ref[f], "lpre", Cl, Cl, Hl, Wl, 2, Lpl)
        # adaptive 2x2 max-pool + avg-pool: pair rows / columns with lane-offset
        # slices (f32), then a single 0/1 selector matmul that also emits the
        # zero-padded layout for the next conv (no reshapes / concats).
        a_, b_ = l1[:, :F * Lwl - Wpl], l1[:, Wpl:]
        rmax, rsum = jnp.maximum(a_, b_), a_ + b_
        cmax = jnp.maximum(rmax[:, :-1], rmax[:, 1:])
        csum = rsum[:, :-1] + rsum[:, 1:]
        comb = (cmax + 0.25 * csum).astype(bf16)              # max + avg
        pad_ref[0:Cl, :] = jnp.dot(comb, aux("S"),
                                   preferred_element_type=f32).astype(bf16)
        l_f = conv(lambda f: pad_ref[0:Cl, f * Lpm:(f + 1) * Lpm],
                   "lpost", Cl, Co, Hm, Wm, 1, Lpm)

        # ------------------------------ middle branch -----------------------
        m_f = conv(lambda f: mp_ref[f], "m", Cm, Co, Hm, Wm, 1, Lpm)

        # ------------------------------ small branch ------------------------
        s1 = conv(lambda f: sp_ref[f], "spre", Cs, Cm, Hs, Ws, 1, Lps)
        pad_ref[0:Cm, :] = jnp.dot(s1.astype(bf16), aux("U"),
                                   preferred_element_type=f32).astype(bf16)
        s_f = conv(lambda f: pad_ref[0:Cm, f * Lpm:(f + 1) * Lpm],
                   "spost", Cm, Co, Hm, Wm, 1, Lpm)

        # ------------------------------ attention trunk ---------------------
        r0, _, _ = woffs["t0"]
        w0 = w_ref[r0:r0 + Cm, 0:3 * Co]
        b0 = b_ref[r0:r0 + Cm, :]
        t0 = (jnp.dot(w0[:, :Co], l_f.astype(bf16), preferred_element_type=f32)
              + jnp.dot(w0[:, Co:2 * Co], m_f.astype(bf16),
                        preferred_element_type=f32)
              + jnp.dot(w0[:, 2 * Co:], s_f.astype(bf16),
                        preferred_element_type=f32)
              + b0)
        t0 = jnp.maximum(t0, 0.0)
        pad_ref[0:Cm, :] = jnp.dot(t0.astype(bf16), aux("P"),
                                   preferred_element_type=f32).astype(bf16)
        t1 = conv(lambda f: pad_ref[0:Cm, f * Lpm:(f + 1) * Lpm],
                  "t1", Cm, Cl, Hm, Wm, 1, Lpm)
        r2, _, _ = woffs["t2"]
        attn = (jnp.dot(w_ref[r2:r2 + 3, 0:Cl], t1.astype(bf16),
                        preferred_element_type=f32) + b_ref[r2:r2 + 3, :])

        # --------------- softmax over the 3 scales + fusion -----------------
        a_l, a_m, a_s = attn[0:1, :], attn[1:2, :], attn[2:3, :]
        amax = jnp.maximum(jnp.maximum(a_l, a_m), a_s)
        e_l = jnp.exp(a_l - amax)
        e_m = jnp.exp(a_m - amax)
        e_s = jnp.exp(a_s - amax)
        inv = 1.0 / (e_l + e_m + e_s)                         # exact divide
        out = (e_l * inv) * l_f + (e_m * inv) * m_f + (e_s * inv) * s_f
        # single compaction of the wide layout, at the very end
        out = out.reshape(Co, F * Hm, Wpm)[:, :, :Wm].reshape(Co, F * Hm * Wm)
        out_ref[...] = out.astype(out_ref.dtype)

    grid_spec = pltpu.PrefetchScalarGridSpec(
        num_scalar_prefetch=0,
        grid=(Ng,),
        in_specs=[
            pl.BlockSpec((F, Cl, Lpl), lambda g: (g, 0, 0)),
            pl.BlockSpec((F, Cm, Lpm), lambda g: (g, 0, 0)),
            pl.BlockSpec((F, Cs, Lps), lambda g: (g, 0, 0)),
            pl.BlockSpec((wrows, wwidth), lambda g: (0, 0)),   # weight slab
            pl.BlockSpec((wrows, 1), lambda g: (0, 0)),        # bias slab
            pl.BlockSpec((arows, awidth), lambda g: (0, 0)),   # aux slab
        ],
        out_specs=pl.BlockSpec((None, Co, F * Hm * Wm), lambda g: (g, 0, 0)),
        scratch_shapes=[
            pltpu.VMEM((im_rows, F * Lwl), bf16),    # shared im2col buffer
            pltpu.VMEM((pad_rows, F * Lpm), bf16),   # shared padded-map buffer
        ],
    )

    out = pl.pallas_call(
        kernel,
        out_shape=jax.ShapeDtypeStruct((Ng, Co, F * Hm * Wm), jnp.float32),
        grid_spec=grid_spec,
        compiler_params=pltpu.CompilerParams(
            dimension_semantics=("parallel",),
            # total residency is ~1-2 MiB; 32 MiB fits every generation
            # (v7x has 64 MiB physical VMEM).
            vmem_limit_bytes=32 * 1024 * 1024),
    )(lp, mp, sp, w_slab, b_slab, aux_slab)

    out = out.reshape(Ng, Co, F, Hm, Wm).transpose(0, 2, 1, 3, 4)
    return out.reshape(N, Co, Hm, Wm)


# ---------------------------------------------------------------------------
# Main
# ---------------------------------------------------------------------------

if __name__ == "__main__":
    key = jax.random.PRNGKey(0)
    in_dim_l, in_dim_m, in_dim_s, out_dim = 16, 8, 8, 8
    N = 2
    Hl = Wl = 16    # large scale
    Hm = Wm = 8     # middle scale (fusion target)
    Hs = Ws = 4     # small scale

    k_l, k_m, k_s, k_p = jax.random.split(key, 4)
    l = jax.random.normal(k_l, (N, in_dim_l, Hl, Wl), jnp.float32)  # NCHW
    m = jax.random.normal(k_m, (N, in_dim_m, Hm, Wm), jnp.float32)
    s = jax.random.normal(k_s, (N, in_dim_s, Hs, Ws), jnp.float32)

    params = init_siu_params(k_p, in_dim_l, in_dim_m, in_dim_s, out_dim)
    F = _pick_batch_fold(N)
    shapes = (in_dim_l, in_dim_m, in_dim_s, out_dim, Hl, Wl, Hm, Wm, Hs, Ws)
    w_slab, b_slab, aux_slab = pack_siu_constants(params, shapes, F)

    fwd = jax.jit(functools.partial(siu_forward, out_dim=out_dim, fold=F))
    lms = fwd(l, m, s, w_slab, b_slab, aux_slab)
    lms = jax.block_until_ready(lms)

    assert lms.shape == (N, out_dim, Hm, Wm), lms.shape
    assert bool(jnp.all(jnp.isfinite(lms)))
    print("KERNEL_OK")
</pallas_src>

<mosaic_0001>
module attributes {stable_mosaic.version = 11 : i64} {
  func.func @kernel(%arg0: i32, %arg1: memref<2x16x420xbf16, #tpu.memory_space<vmem>>, %arg2: memref<2x8x110xbf16, #tpu.memory_space<vmem>>, %arg3: memref<2x8x42xbf16, #tpu.memory_space<vmem>>, %arg4: memref<80x400xbf16, #tpu.memory_space<vmem>>, %arg5: memref<80x1xf32, #tpu.memory_space<vmem>>, %arg6: memref<832x220xbf16, #tpu.memory_space<vmem>>, %arg7: memref<1x8x128xf32, #tpu.memory_space<vmem>>, %arg8: memref<400x640xbf16, #tpu.memory_space<vmem>>, %arg9: memref<16x220xbf16, #tpu.memory_space<vmem>>) attributes {dimension_semantics = [#tpu.dimension_semantics<parallel>], iteration_bounds = array<i64: 1>, scalar_prefetch = 0 : i64, scratch_operands = 2 : i64, tpu.core_type = #tpu.core_type<tc>, window_params = [{transform_indices = @transform_0, window_bounds = array<i64: 2, 16, 420>}, {transform_indices = @transform_1, window_bounds = array<i64: 2, 8, 110>}, {transform_indices = @transform_2, window_bounds = array<i64: 2, 8, 42>}, {pipeline_mode = #tpu.pipeline_mode<synchronous>, transform_indices = @transform_3, window_bounds = array<i64: 80, 400>}, {pipeline_mode = #tpu.pipeline_mode<synchronous>, transform_indices = @transform_4, window_bounds = array<i64: 80, 1>}, {pipeline_mode = #tpu.pipeline_mode<synchronous>, transform_indices = @transform_5, window_bounds = array<i64: 832, 220>}, {transform_indices = @transform_6, window_bounds = array<i64: 1, 8, 128>}]} {
    %c0 = arith.constant 0 : index
    %c0_0 = arith.constant 0 : index
    %c0_1 = arith.constant 0 : index
    %0 = vector.load %arg1[%c0, %c0_0, %c0_1] : memref<2x16x420xbf16, #tpu.memory_space<vmem>>, vector<1x16x420xbf16>
    %1 = vector.shape_cast %0 : vector<1x16x420xbf16> to vector<16x420xbf16>
    %2 = vector.extract_strided_slice %1 {offsets = [0, 0], sizes = [16, 320], strides = [1, 1]} : vector<16x420xbf16> to vector<16x320xbf16>
    %c0_2 = arith.constant 0 : index
    %c0_3 = arith.constant 0 : index
    %3 = vector.load %arg8[%c0_2, %c0_3] : memref<400x640xbf16, #tpu.memory_space<vmem>>, vector<16x320xbf16>
    tpu.vector_store %arg8[%c0_2, %c0_3], %2 {strides = array<i32>} : memref<400x640xbf16, #tpu.memory_space<vmem>>, vector<16x320xbf16>,
    %4 = vector.extract_strided_slice %1 {offsets = [0, 1], sizes = [16, 320], strides = [1, 1]} : vector<16x420xbf16> to vector<16x320xbf16>
    %c16 = arith.constant 16 : index
    %c0_4 = arith.constant 0 : index
    %5 = vector.load %arg8[%c16, %c0_4] : memref<400x640xbf16, #tpu.memory_space<vmem>>, vector<16x320xbf16>
    tpu.vector_store %arg8[%c16, %c0_4], %4 {strides = array<i32>} : memref<400x640xbf16, #tpu.memory_space<vmem>>, vector<16x320xbf16>,
    %6 = vector.extract_strided_slice %1 {offsets = [0, 2], sizes = [16, 320], strides = [1, 1]} : vector<16x420xbf16> to vector<16x320xbf16>
    %c32 = arith.constant 32 : index
    %c0_5 = arith.constant 0 : index
    %7 = vector.load %arg8[%c32, %c0_5] : memref<400x640xbf16, #tpu.memory_space<vmem>>, vector<16x320xbf16>
    tpu.vector_store %arg8[%c32, %c0_5], %6 {strides = array<i32>} : memref<400x640xbf16, #tpu.memory_space<vmem>>, vector<16x320xbf16>,
    %8 = vector.extract_strided_slice %1 {offsets = [0, 3], sizes = [16, 320], strides = [1, 1]} : vector<16x420xbf16> to vector<16x320xbf16>
    %c48 = arith.constant 48 : index
    %c0_6 = arith.constant 0 : index
    %9 = vector.load %arg8[%c48, %c0_6] : memref<400x640xbf16, #tpu.memory_space<vmem>>, vector<16x320xbf16>
    tpu.vector_store %arg8[%c48, %c0_6], %8 {strides = array<i32>} : memref<400x640xbf16, #tpu.memory_space<vmem>>, vector<16x320xbf16>,
    %10 = vector.extract_strided_slice %1 {offsets = [0, 4], sizes = [16, 320], strides = [1, 1]} : vector<16x420xbf16> to vector<16x320xbf16>
    %c64 = arith.constant 64 : index
    %c0_7 = arith.constant 0 : index
    %11 = vector.load %arg8[%c64, %c0_7] : memref<400x640xbf16, #tpu.memory_space<vmem>>, vector<16x320xbf16>
    tpu.vector_store %arg8[%c64, %c0_7], %10 {strides = array<i32>} : memref<400x640xbf16, #tpu.memory_space<vmem>>, vector<16x320xbf16>,
    %12 = vector.extract_strided_slice %1 {offsets = [0, 20], sizes = [16, 320], strides = [1, 1]} : vector<16x420xbf16> to vector<16x320xbf16>
    %c80 = arith.constant 80 : index
    %c0_8 = arith.constant 0 : index
    %13 = vector.load %arg8[%c80, %c0_8] : memref<400x640xbf16, #tpu.memory_space<vmem>>, vector<16x320xbf16>
    tpu.vector_store %arg8[%c80, %c0_8], %12 {strides = array<i32>} : memref<400x640xbf16, #tpu.memory_space<vmem>>, vector<16x320xbf16>,
    %14 = vector.extract_strided_slice %1 {offsets = [0, 21], sizes = [16, 320], strides = [1, 1]} : vector<16x420xbf16> to vector<16x320xbf16>
    %c96 = arith.constant 96 : index
    %c0_9 = arith.constant 0 : index
    %15 = vector.load %arg8[%c96, %c0_9] : memref<400x640xbf16, #tpu.memory_space<vmem>>, vector<16x320xbf16>
    tpu.vector_store %arg8[%c96, %c0_9], %14 {strides = array<i32>} : memref<400x640xbf16, #tpu.memory_space<vmem>>, vector<16x320xbf16>,
    %16 = vector.extract_strided_slice %1 {offsets = [0, 22], sizes = [16, 320], strides = [1, 1]} : vector<16x420xbf16> to vector<16x320xbf16>
    %c112 = arith.constant 112 : index
    %c0_10 = arith.constant 0 : index
    %17 = vector.load %arg8[%c112, %c0_10] : memref<400x640xbf16, #tpu.memory_space<vmem>>, vector<16x320xbf16>
    tpu.vector_store %arg8[%c112, %c0_10], %16 {strides = array<i32>} : memref<400x640xbf16, #tpu.memory_space<vmem>>, vector<16x320xbf16>,
    %18 = vector.extract_strided_slice %1 {offsets = [0, 23], sizes = [16, 320], strides = [1, 1]} : vector<16x420xbf16> to vector<16x320xbf16>
    %c128 = arith.constant 128 : index
    %c0_11 = arith.constant 0 : index
    %19 = vector.load %arg8[%c128, %c0_11] : memref<400x640xbf16, #tpu.memory_space<vmem>>, vector<16x320xbf16>
    tpu.vector_store %arg8[%c128, %c0_11], %18 {strides = array<i32>} : memref<400x640xbf16, #tpu.memory_space<vmem>>, vector<16x320xbf16>,
    %20 = vector.extract_strided_slice %1 {offsets = [0, 24], sizes = [16, 320], strides = [1, 1]} : vector<16x420xbf16> to vector<16x320xbf16>
    %c144 = arith.constant 144 : index
    %c0_12 = arith.constant 0 : index
    %21 = vector.load %arg8[%c144, %c0_12] : memref<400x640xbf16, #tpu.memory_space<vmem>>, vector<16x320xbf16>
    tpu.vector_store %arg8[%c144, %c0_12], %20 {strides = array<i32>} : memref<400x640xbf16, #tpu.memory_space<vmem>>, vector<16x320xbf16>,
    %22 = vector.extract_strided_slice %1 {offsets = [0, 40], sizes = [16, 320], strides = [1, 1]} : vector<16x420xbf16> to vector<16x320xbf16>
    %c160 = arith.constant 160 : index
    %c0_13 = arith.constant 0 : index
    %23 = vector.load %arg8[%c160, %c0_13] : memref<400x640xbf16, #tpu.memory_space<vmem>>, vector<16x320xbf16>
    tpu.vector_store %arg8[%c160, %c0_13], %22 {strides = array<i32>} : memref<400x640xbf16, #tpu.memory_space<vmem>>, vector<16x320xbf16>,
    %24 = vector.extract_strided_slice %1 {offsets = [0, 41], sizes = [16, 320], strides = [1, 1]} : vector<16x420xbf16> to vector<16x320xbf16>
    %c176 = arith.constant 176 : index
    %c0_14 = arith.constant 0 : index
    %25 = vector.load %arg8[%c176, %c0_14] : memref<400x640xbf16, #tpu.memory_space<vmem>>, vector<16x320xbf16>
    tpu.vector_store %arg8[%c176, %c0_14], %24 {strides = array<i32>} : memref<400x640xbf16, #tpu.memory_space<vmem>>, vector<16x320xbf16>,
    %26 = vector.extract_strided_slice %1 {offsets = [0, 42], sizes = [16, 320], strides = [1, 1]} : vector<16x420xbf16> to vector<16x320xbf16>
    %c192 = arith.constant 192 : index
    %c0_15 = arith.constant 0 : index
    %27 = vector.load %arg8[%c192, %c0_15] : memref<400x640xbf16, #tpu.memory_space<vmem>>, vector<16x320xbf16>
    tpu.vector_store %arg8[%c192, %c0_15], %26 {strides = array<i32>} : memref<400x640xbf16, #tpu.memory_space<vmem>>, vector<16x320xbf16>,
    %28 = vector.extract_strided_slice %1 {offsets = [0, 43], sizes = [16, 320], strides = [1, 1]} : vector<16x420xbf16> to vector<16x320xbf16>
    %c208 = arith.constant 208 : index
    %c0_16 = arith.constant 0 : index
    %29 = vector.load %arg8[%c208, %c0_16] : memref<400x640xbf16, #tpu.memory_space<vmem>>, vector<16x320xbf16>
    tpu.vector_store %arg8[%c208, %c0_16], %28 {strides = array<i32>} : memref<400x640xbf16, #tpu.memory_space<vmem>>, vector<16x320xbf16>,
    %30 = vector.extract_strided_slice %1 {offsets = [0, 44], sizes = [16, 320], strides = [1, 1]} : vector<16x420xbf16> to vector<16x320xbf16>
    %c224 = arith.constant 224 : index
    %c0_17 = arith.constant 0 : index
    %31 = vector.load %arg8[%c224, %c0_17] : memref<400x640xbf16, #tpu.memory_space<vmem>>, vector<16x320xbf16>
    tpu.vector_store %arg8[%c224, %c0_17], %30 {strides = array<i32>} : memref<400x640xbf16, #tpu.memory_space<vmem>>, vector<16x320xbf16>,
    %32 = vector.extract_strided_slice %1 {offsets = [0, 60], sizes = [16, 320], strides = [1, 1]} : vector<16x420xbf16> to vector<16x320xbf16>
    %c240 = arith.constant 240 : index
    %c0_18 = arith.constant 0 : index
    %33 = vector.load %arg8[%c240, %c0_18] : memref<400x640xbf16, #tpu.memory_space<vmem>>, vector<16x320xbf16>
    tpu.vector_store %arg8[%c240, %c0_18], %32 {strides = array<i32>} : memref<400x640xbf16, #tpu.memory_space<vmem>>, vector<16x320xbf16>,
    %34 = vector.extract_strided_slice %1 {offsets = [0, 61], sizes = [16, 320], strides = [1, 1]} : vector<16x420xbf16> to vector<16x320xbf16>
    %c256 = arith.constant 256 : index
    %c0_19 = arith.constant 0 : index
    %35 = vector.load %arg8[%c256, %c0_19] : memref<400x640xbf16, #tpu.memory_space<vmem>>, vector<16x320xbf16>
    tpu.vector_store %arg8[%c256, %c0_19], %34 {strides = array<i32>} : memref<400x640xbf16, #tpu.memory_space<vmem>>, vector<16x320xbf16>,
    %36 = vector.extract_strided_slice %1 {offsets = [0, 62], sizes = [16, 320], strides = [1, 1]} : vector<16x420xbf16> to vector<16x320xbf16>
    %c272 = arith.constant 272 : index
    %c0_20 = arith.constant 0 : index
    %37 = vector.load %arg8[%c272, %c0_20] : memref<400x640xbf16, #tpu.memory_space<vmem>>, vector<16x320xbf16>
    tpu.vector_store %arg8[%c272, %c0_20], %36 {strides = array<i32>} : memref<400x640xbf16, #tpu.memory_space<vmem>>, vector<16x320xbf16>,
    %38 = vector.extract_strided_slice %1 {offsets = [0, 63], sizes = [16, 320], strides = [1, 1]} : vector<16x420xbf16> to vector<16x320xbf16>
    %c288 = arith.constant 288 : index
    %c0_21 = arith.constant 0 : index
    %39 = vector.load %arg8[%c288, %c0_21] : memref<400x640xbf16, #tpu.memory_space<vmem>>, vector<16x320xbf16>
    tpu.vector_store %arg8[%c288, %c0_21], %38 {strides = array<i32>} : memref<400x640xbf16, #tpu.memory_space<vmem>>, vector<16x320xbf16>,
    %40 = vector.extract_strided_slice %1 {offsets = [0, 64], sizes = [16, 320], strides = [1, 1]} : vector<16x420xbf16> to vector<16x320xbf16>
    %c304 = arith.constant 304 : index
    %c0_22 = arith.constant 0 : index
    %41 = vector.load %arg8[%c304, %c0_22] : memref<400x640xbf16, #tpu.memory_space<vmem>>, vector<16x320xbf16>
    tpu.vector_store %arg8[%c304, %c0_22], %40 {strides = array<i32>} : memref<400x640xbf16, #tpu.memory_space<vmem>>, vector<16x320xbf16>,
    %42 = vector.extract_strided_slice %1 {offsets = [0, 80], sizes = [16, 320], strides = [1, 1]} : vector<16x420xbf16> to vector<16x320xbf16>
    %c320 = arith.constant 320 : index
    %c0_23 = arith.constant 0 : index
    %43 = vector.load %arg8[%c320, %c0_23] : memref<400x640xbf16, #tpu.memory_space<vmem>>, vector<16x320xbf16>
    tpu.vector_store %arg8[%c320, %c0_23], %42 {strides = array<i32>} : memref<400x640xbf16, #tpu.memory_space<vmem>>, vector<16x320xbf16>,
    %44 = vector.extract_strided_slice %1 {offsets = [0, 81], sizes = [16, 320], strides = [1, 1]} : vector<16x420xbf16> to vector<16x320xbf16>
    %c336 = arith.constant 336 : index
    %c0_24 = arith.constant 0 : index
    %45 = vector.load %arg8[%c336, %c0_24] : memref<400x640xbf16, #tpu.memory_space<vmem>>, vector<16x320xbf16>
    tpu.vector_store %arg8[%c336, %c0_24], %44 {strides = array<i32>} : memref<400x640xbf16, #tpu.memory_space<vmem>>, vector<16x320xbf16>,
    %46 = vector.extract_strided_slice %1 {offsets = [0, 82], sizes = [16, 320], strides = [1, 1]} : vector<16x420xbf16> to vector<16x320xbf16>
    %c352 = arith.constant 352 : index
    %c0_25 = arith.constant 0 : index
    %47 = vector.load %arg8[%c352, %c0_25] : memref<400x640xbf16, #tpu.memory_space<vmem>>, vector<16x320xbf16>
    tpu.vector_store %arg8[%c352, %c0_25], %46 {strides = array<i32>} : memref<400x640xbf16, #tpu.memory_space<vmem>>, vector<16x320xbf16>,
    %48 = vector.extract_strided_slice %1 {offsets = [0, 83], sizes = [16, 320], strides = [1, 1]} : vector<16x420xbf16> to vector<16x320xbf16>
    %c368 = arith.constant 368 : index
    %c0_26 = arith.constant 0 : index
    %49 = vector.load %arg8[%c368, %c0_26] : memref<400x640xbf16, #tpu.memory_space<vmem>>, vector<16x320xbf16>
    tpu.vector_store %arg8[%c368, %c0_26], %48 {strides = array<i32>} : memref<400x640xbf16, #tpu.memory_space<vmem>>, vector<16x320xbf16>,
    %50 = vector.extract_strided_slice %1 {offsets = [0, 84], sizes = [16, 320], strides = [1, 1]} : vector<16x420xbf16> to vector<16x320xbf16>
    %c384 = arith.constant 384 : index
    %c0_27 = arith.constant 0 : index
    %51 = vector.load %arg8[%c384, %c0_27] : memref<400x640xbf16, #tpu.memory_space<vmem>>, vector<16x320xbf16>
    tpu.vector_store %arg8[%c384, %c0_27], %50 {strides = array<i32>} : memref<400x640xbf16, #tpu.memory_space<vmem>>, vector<16x320xbf16>,
    %c1 = arith.constant 1 : index
    %c0_28 = arith.constant 0 : index
    %c0_29 = arith.constant 0 : index
    %52 = vector.load %arg1[%c1, %c0_28, %c0_29] : memref<2x16x420xbf16, #tpu.memory_space<vmem>>, vector<1x16x420xbf16>
    %53 = vector.shape_cast %52 : vector<1x16x420xbf16> to vector<16x420xbf16>
    %54 = vector.extract_strided_slice %53 {offsets = [0, 0], sizes = [16, 320], strides = [1, 1]} : vector<16x420xbf16> to vector<16x320xbf16>
    %c0_30 = arith.constant 0 : index
    %c320_31 = arith.constant 320 : index
    %55 = vector.load %arg8[%c0_30, %c320_31] : memref<400x640xbf16, #tpu.memory_space<vmem>>, vector<16x320xbf16>
    tpu.vector_store %arg8[%c0_30, %c320_31], %54 {strides = array<i32>} : memref<400x640xbf16, #tpu.memory_space<vmem>>, vector<16x320xbf16>,
    %56 = vector.extract_strided_slice %53 {offsets = [0, 1], sizes = [16, 320], strides = [1, 1]} : vector<16x420xbf16> to vector<16x320xbf16>
    %c16_32 = arith.constant 16 : index
    %c320_33 = arith.constant 320 : index
    %57 = vector.load %arg8[%c16_32, %c320_33] : memref<400x640xbf16, #tpu.memory_space<vmem>>, vector<16x320xbf16>
    tpu.vector_store %arg8[%c16_32, %c320_33], %56 {strides = array<i32>} : memref<400x640xbf16, #tpu.memory_space<vmem>>, vector<16x320xbf16>,
    %58 = vector.extract_strided_slice %53 {offsets = [0, 2], sizes = [16, 320], strides = [1, 1]} : vector<16x420xbf16> to vector<16x320xbf16>
    %c32_34 = arith.constant 32 : index
    %c320_35 = arith.constant 320 : index
    %59 = vector.load %arg8[%c32_34, %c320_35] : memref<400x640xbf16, #tpu.memory_space<vmem>>, vector<16x320xbf16>
    tpu.vector_store %arg8[%c32_34, %c320_35], %58 {strides = array<i32>} : memref<400x640xbf16, #tpu.memory_space<vmem>>, vector<16x320xbf16>,
    %60 = vector.extract_strided_slice %53 {offsets = [0, 3], sizes = [16, 320], strides = [1, 1]} : vector<16x420xbf16> to vector<16x320xbf16>
    %c48_36 = arith.constant 48 : index
    %c320_37 = arith.constant 320 : index
    %61 = vector.load %arg8[%c48_36, %c320_37] : memref<400x640xbf16, #tpu.memory_space<vmem>>, vector<16x320xbf16>
    tpu.vector_store %arg8[%c48_36, %c320_37], %60 {strides = array<i32>} : memref<400x640xbf16, #tpu.memory_space<vmem>>, vector<16x320xbf16>,
    %62 = vector.extract_strided_slice %53 {offsets = [0, 4], sizes = [16, 320], strides = [1, 1]} : vector<16x420xbf16> to vector<16x320xbf16>
    %c64_38 = arith.constant 64 : index
    %c320_39 = arith.constant 320 : index
    %63 = vector.load %arg8[%c64_38, %c320_39] : memref<400x640xbf16, #tpu.memory_space<vmem>>, vector<16x320xbf16>
    tpu.vector_store %arg8[%c64_38, %c320_39], %62 {strides = array<i32>} : memref<400x640xbf16, #tpu.memory_space<vmem>>, vector<16x320xbf16>,
    %64 = vector.extract_strided_slice %53 {offsets = [0, 20], sizes = [16, 320], strides = [1, 1]} : vector<16x420xbf16> to vector<16x320xbf16>
    %c80_40 = arith.constant 80 : index
    %c320_41 = arith.constant 320 : index
    %65 = vector.load %arg8[%c80_40, %c320_41] : memref<400x640xbf16, #tpu.memory_space<vmem>>, vector<16x320xbf16>
    tpu.vector_store %arg8[%c80_40, %c320_41], %64 {strides = array<i32>} : memref<400x640xbf16, #tpu.memory_space<vmem>>, vector<16x320xbf16>,
    %66 = vector.extract_strided_slice %53 {offsets = [0, 21], sizes = [16, 320], strides = [1, 1]} : vector<16x420xbf16> to vector<16x320xbf16>
    %c96_42 = arith.constant 96 : index
    %c320_43 = arith.constant 320 : index
    %67 = vector.load %arg8[%c96_42, %c320_43] : memref<400x640xbf16, #tpu.memory_space<vmem>>, vector<16x320xbf16>
    tpu.vector_store %arg8[%c96_42, %c320_43], %66 {strides = array<i32>} : memref<400x640xbf16, #tpu.memory_space<vmem>>, vector<16x320xbf16>,
    %68 = vector.extract_strided_slice %53 {offsets = [0, 22], sizes = [16, 320], strides = [1, 1]} : vector<16x420xbf16> to vector<16x320xbf16>
    %c112_44 = arith.constant 112 : index
    %c320_45 = arith.constant 320 : index
    %69 = vector.load %arg8[%c112_44, %c320_45] : memref<400x640xbf16, #tpu.memory_space<vmem>>, vector<16x320xbf16>
    tpu.vector_store %arg8[%c112_44, %c320_45], %68 {strides = array<i32>} : memref<400x640xbf16, #tpu.memory_space<vmem>>, vector<16x320xbf16>,
    %70 = vector.extract_strided_slice %53 {offsets = [0, 23], sizes = [16, 320], strides = [1, 1]} : vector<16x420xbf16> to vector<16x320xbf16>
    %c128_46 = arith.constant 128 : index
    %c320_47 = arith.constant 320 : index
    %71 = vector.load %arg8[%c128_46, %c320_47] : memref<400x640xbf16, #tpu.memory_space<vmem>>, vector<16x320xbf16>
    tpu.vector_store %arg8[%c128_46, %c320_47], %70 {strides = array<i32>} : memref<400x640xbf16, #tpu.memory_space<vmem>>, vector<16x320xbf16>,
    %72 = vector.extract_strided_slice %53 {offsets = [0, 24], sizes = [16, 320], strides = [1, 1]} : vector<16x420xbf16> to vector<16x320xbf16>
    %c144_48 = arith.constant 144 : index
    %c320_49 = arith.constant 320 : index
    %73 = vector.load %arg8[%c144_48, %c320_49] : memref<400x640xbf16, #tpu.memory_space<vmem>>, vector<16x320xbf16>
    tpu.vector_store %arg8[%c144_48, %c320_49], %72 {strides = array<i32>} : memref<400x640xbf16, #tpu.memory_space<vmem>>, vector<16x320xbf16>,
    %74 = vector.extract_strided_slice %53 {offsets = [0, 40], sizes = [16, 320], strides = [1, 1]} : vector<16x420xbf16> to vector<16x320xbf16>
    %c160_50 = arith.constant 160 : index
    %c320_51 = arith.constant 320 : index
    %75 = vector.load %arg8[%c160_50, %c320_51] : memref<400x640xbf16, #tpu.memory_space<vmem>>, vector<16x320xbf16>
    tpu.vector_store %arg8[%c160_50, %c320_51], %74 {strides = array<i32>} : memref<400x640xbf16, #tpu.memory_space<vmem>>, vector<16x320xbf16>,
    %76 = vector.extract_strided_slice %53 {offsets = [0, 41], sizes = [16, 320], strides = [1, 1]} : vector<16x420xbf16> to vector<16x320xbf16>
    %c176_52 = arith.constant 176 : index
    %c320_53 = arith.constant 320 : index
    %77 = vector.load %arg8[%c176_52, %c320_53] : memref<400x640xbf16, #tpu.memory_space<vmem>>, vector<16x320xbf16>
    tpu.vector_store %arg8[%c176_52, %c320_53], %76 {strides = array<i32>} : memref<400x640xbf16, #tpu.memory_space<vmem>>, vector<16x320xbf16>,
    %78 = vector.extract_strided_slice %53 {offsets = [0, 42], sizes = [16, 320], strides = [1, 1]} : vector<16x420xbf16> to vector<16x320xbf16>
    %c192_54 = arith.constant 192 : index
    %c320_55 = arith.constant 320 : index
    %79 = vector.load %arg8[%c192_54, %c320_55] : memref<400x640xbf16, #tpu.memory_space<vmem>>, vector<16x320xbf16>
    tpu.vector_store %arg8[%c192_54, %c320_55], %78 {strides = array<i32>} : memref<400x640xbf16, #tpu.memory_space<vmem>>, vector<16x320xbf16>,
    %80 = vector.extract_strided_slice %53 {offsets = [0, 43], sizes = [16, 320], strides = [1, 1]} : vector<16x420xbf16> to vector<16x320xbf16>
    %c208_56 = arith.constant 208 : index
    %c320_57 = arith.constant 320 : index
    %81 = vector.load %arg8[%c208_56, %c320_57] : memref<400x640xbf16, #tpu.memory_space<vmem>>, vector<16x320xbf16>
    tpu.vector_store %arg8[%c208_56, %c320_57], %80 {strides = array<i32>} : memref<400x640xbf16, #tpu.memory_space<vmem>>, vector<16x320xbf16>,
    %82 = vector.extract_strided_slice %53 {offsets = [0, 44], sizes = [16, 320], strides = [1, 1]} : vector<16x420xbf16> to vector<16x320xbf16>
    %c224_58 = arith.constant 224 : index
    %c320_59 = arith.constant 320 : index
    %83 = vector.load %arg8[%c224_58, %c320_59] : memref<400x640xbf16, #tpu.memory_space<vmem>>, vector<16x320xbf16>
    tpu.vector_store %arg8[%c224_58, %c320_59], %82 {strides = array<i32>} : memref<400x640xbf16, #tpu.memory_space<vmem>>, vector<16x320xbf16>,
    %84 = vector.extract_strided_slice %53 {offsets = [0, 60], sizes = [16, 320], strides = [1, 1]} : vector<16x420xbf16> to vector<16x320xbf16>
    %c240_60 = arith.constant 240 : index
    %c320_61 = arith.constant 320 : index
    %85 = vector.load %arg8[%c240_60, %c320_61] : memref<400x640xbf16, #tpu.memory_space<vmem>>, vector<16x320xbf16>
    tpu.vector_store %arg8[%c240_60, %c320_61], %84 {strides = array<i32>} : memref<400x640xbf16, #tpu.memory_space<vmem>>, vector<16x320xbf16>,
    %86 = vector.extract_strided_slice %53 {offsets = [0, 61], sizes = [16, 320], strides = [1, 1]} : vector<16x420xbf16> to vector<16x320xbf16>
    %c256_62 = arith.constant 256 : index
    %c320_63 = arith.constant 320 : index
    %87 = vector.load %arg8[%c256_62, %c320_63] : memref<400x640xbf16, #tpu.memory_space<vmem>>, vector<16x320xbf16>
    tpu.vector_store %arg8[%c256_62, %c320_63], %86 {strides = array<i32>} : memref<400x640xbf16, #tpu.memory_space<vmem>>, vector<16x320xbf16>,
    %88 = vector.extract_strided_slice %53 {offsets = [0, 62], sizes = [16, 320], strides = [1, 1]} : vector<16x420xbf16> to vector<16x320xbf16>
    %c272_64 = arith.constant 272 : index
    %c320_65 = arith.constant 320 : index
    %89 = vector.load %arg8[%c272_64, %c320_65] : memref<400x640xbf16, #tpu.memory_space<vmem>>, vector<16x320xbf16>
    tpu.vector_store %arg8[%c272_64, %c320_65], %88 {strides = array<i32>} : memref<400x640xbf16, #tpu.memory_space<vmem>>, vector<16x320xbf16>,
    %90 = vector.extract_strided_slice %53 {offsets = [0, 63], sizes = [16, 320], strides = [1, 1]} : vector<16x420xbf16> to vector<16x320xbf16>
    %c288_66 = arith.constant 288 : index
    %c320_67 = arith.constant 320 : index
    %91 = vector.load %arg8[%c288_66, %c320_67] : memref<400x640xbf16, #tpu.memory_space<vmem>>, vector<16x320xbf16>
    tpu.vector_store %arg8[%c288_66, %c320_67], %90 {strides = array<i32>} : memref<400x640xbf16, #tpu.memory_space<vmem>>, vector<16x320xbf16>,
    %92 = vector.extract_strided_slice %53 {offsets = [0, 64], sizes = [16, 320], strides = [1, 1]} : vector<16x420xbf16> to vector<16x320xbf16>
    %c304_68 = arith.constant 304 : index
    %c320_69 = arith.constant 320 : index
    %93 = vector.load %arg8[%c304_68, %c320_69] : memref<400x640xbf16, #tpu.memory_space<vmem>>, vector<16x320xbf16>
    tpu.vector_store %arg8[%c304_68, %c320_69], %92 {strides = array<i32>} : memref<400x640xbf16, #tpu.memory_space<vmem>>, vector<16x320xbf16>,
    %94 = vector.extract_strided_slice %53 {offsets = [0, 80], sizes = [16, 320], strides = [1, 1]} : vector<16x420xbf16> to vector<16x320xbf16>
    %c320_70 = arith.constant 320 : index
    %c320_71 = arith.constant 320 : index
    %95 = vector.load %arg8[%c320_70, %c320_71] : memref<400x640xbf16, #tpu.memory_space<vmem>>, vector<16x320xbf16>
    tpu.vector_store %arg8[%c320_70, %c320_71], %94 {strides = array<i32>} : memref<400x640xbf16, #tpu.memory_space<vmem>>, vector<16x320xbf16>,
    %96 = vector.extract_strided_slice %53 {offsets = [0, 81], sizes = [16, 320], strides = [1, 1]} : vector<16x420xbf16> to vector<16x320xbf16>
    %c336_72 = arith.constant 336 : index
    %c320_73 = arith.constant 320 : index
    %97 = vector.load %arg8[%c336_72, %c320_73] : memref<400x640xbf16, #tpu.memory_space<vmem>>, vector<16x320xbf16>
    tpu.vector_store %arg8[%c336_72, %c320_73], %96 {strides = array<i32>} : memref<400x640xbf16, #tpu.memory_space<vmem>>, vector<16x320xbf16>,
    %98 = vector.extract_strided_slice %53 {offsets = [0, 82], sizes = [16, 320], strides = [1, 1]} : vector<16x420xbf16> to vector<16x320xbf16>
    %c352_74 = arith.constant 352 : index
    %c320_75 = arith.constant 320 : index
    %99 = vector.load %arg8[%c352_74, %c320_75] : memref<400x640xbf16, #tpu.memory_space<vmem>>, vector<16x320xbf16>
    tpu.vector_store %arg8[%c352_74, %c320_75], %98 {strides = array<i32>} : memref<400x640xbf16, #tpu.memory_space<vmem>>, vector<16x320xbf16>,
    %100 = vector.extract_strided_slice %53 {offsets = [0, 83], sizes = [16, 320], strides = [1, 1]} : vector<16x420xbf16> to vector<16x320xbf16>
    %c368_76 = arith.constant 368 : index
    %c320_77 = arith.constant 320 : index
    %101 = vector.load %arg8[%c368_76, %c320_77] : memref<400x640xbf16, #tpu.memory_space<vmem>>, vector<16x320xbf16>
    tpu.vector_store %arg8[%c368_76, %c320_77], %100 {strides = array<i32>} : memref<400x640xbf16, #tpu.memory_space<vmem>>, vector<16x320xbf16>,
    %102 = vector.extract_strided_slice %53 {offsets = [0, 84], sizes = [16, 320], strides = [1, 1]} : vector<16x420xbf16> to vector<16x320xbf16>
    %c384_78 = arith.constant 384 : index
    %c320_79 = arith.constant 320 : index
    %103 = vector.load %arg8[%c384_78, %c320_79] : memref<400x640xbf16, #tpu.memory_space<vmem>>, vector<16x320xbf16>
    tpu.vector_store %arg8[%c384_78, %c320_79], %102 {strides = array<i32>} : memref<400x640xbf16, #tpu.memory_space<vmem>>, vector<16x320xbf16>,
    %c0_80 = arith.constant 0 : index
    %c0_81 = arith.constant 0 : index
    %104 = vector.load %arg4[%c0_80, %c0_81] : memref<80x400xbf16, #tpu.memory_space<vmem>>, vector<16x400xbf16>
    %c0_82 = arith.constant 0 : index
    %c0_83 = arith.constant 0 : index
    %105 = vector.load %arg5[%c0_82, %c0_83] : memref<80x1xf32, #tpu.memory_space<vmem>>, vector<16x1xf32>
    %c0_84 = arith.constant 0 : index
    %c0_85 = arith.constant 0 : index
    %106 = vector.load %arg8[%c0_84, %c0_85] : memref<400x640xbf16, #tpu.memory_space<vmem>>, vector<400x640xbf16>
    %cst = arith.constant dense<0.000000e+00> : vector<16x640xf32>
    %107 = tpu.matmul %104, %106, %cst {dimension_numbers = #tpu.dot_dimension_numbers<[1], [0], [0], [1], [0, 0, 1, 1], [], []>} : vector<16x400xbf16>, vector<400x640xbf16>, vector<16x640xf32> -> vector<16x640xf32>
    %108 = vector.broadcast %105 : vector<16x1xf32> to vector<16x640xf32>
    %109 = arith.addf %107, %108 : vector<16x640xf32>
    %cst_86 = arith.constant 0.000000e+00 : f32
    %110 = vector.broadcast %cst_86 : f32 to vector<16x640xf32>
    %111 = arith.maximumf %109, %110 : vector<16x640xf32>
    %112 = vector.extract_strided_slice %111 {offsets = [0, 0], sizes = [16, 620], strides = [1, 1]} : vector<16x640xf32> to vector<16x620xf32>
    %113 = vector.extract_strided_slice %111 {offsets = [0, 20], sizes = [16, 620], strides = [1, 1]} : vector<16x640xf32> to vector<16x620xf32>
    %114 = arith.maximumf %112, %113 : vector<16x620xf32>
    %115 = arith.addf %112, %113 : vector<16x620xf32>
    %116 = vector.extract_strided_slice %114 {offsets = [0, 0], sizes = [16, 619], strides = [1, 1]} : vector<16x620xf32> to vector<16x619xf32>
    %117 = vector.extract_strided_slice %114 {offsets = [0, 1], sizes = [16, 619], strides = [1, 1]} : vector<16x620xf32> to vector<16x619xf32>
    %118 = arith.maximumf %116, %117 : vector<16x619xf32>
    %119 = vector.extract_strided_slice %115 {offsets = [0, 0], sizes = [16, 619], strides = [1, 1]} : vector<16x620xf32> to vector<16x619xf32>
    %120 = vector.extract_strided_slice %115 {offsets = [0, 1], sizes = [16, 619], strides = [1, 1]} : vector<16x620xf32> to vector<16x619xf32>
    %121 = arith.addf %119, %120 : vector<16x619xf32>
    %cst_87 = arith.constant 2.500000e-01 : f32
    %122 = vector.broadcast %cst_87 : f32 to vector<16x619xf32>
    %123 = arith.mulf %122, %121 : vector<16x619xf32>
    %124 = arith.addf %118, %123 : vector<16x619xf32>
    %125 = arith.truncf %124 : vector<16x619xf32> to vector<16x619xbf16>
    %c0_88 = arith.constant 0 : index
    %c0_89 = arith.constant 0 : index
    %126 = vector.load %arg6[%c0_88, %c0_89] : memref<832x220xbf16, #tpu.memory_space<vmem>>, vector<619x220xbf16>
    %cst_90 = arith.constant dense<0.000000e+00> : vector<16x220xf32>
    %127 = tpu.matmul %125, %126, %cst_90 {dimension_numbers = #tpu.dot_dimension_numbers<[1], [0], [0], [1], [0, 0, 1, 1], [], []>} : vector<16x619xbf16>, vector<619x220xbf16>, vector<16x220xf32> -> vector<16x220xf32>
    %128 = arith.truncf %127 : vector<16x220xf32> to vector<16x220xbf16>
    %c0_91 = arith.constant 0 : index
    %c0_92 = arith.constant 0 : index
    %129 = vector.load %arg9[%c0_91, %c0_92] : memref<16x220xbf16, #tpu.memory_space<vmem>>, vector<16x220xbf16>
    tpu.vector_store %arg9[%c0_91, %c0_92], %128 {strides = array<i32>} : memref<16x220xbf16, #tpu.memory_space<vmem>>, vector<16x220xbf16>,
    %c0_93 = arith.constant 0 : index
    %c0_94 = arith.constant 0 : index
    %130 = vector.load %arg9[%c0_93, %c0_94] : memref<16x220xbf16, #tpu.memory_space<vmem>>, vector<16x110xbf16>
    %131 = vector.extract_strided_slice %130 {offsets = [0, 0], sizes = [16, 80], strides = [1, 1]} : vector<16x110xbf16> to vector<16x80xbf16>
    %c0_95 = arith.constant 0 : index
    %c0_96 = arith.constant 0 : index
    %132 = vector.load %arg8[%c0_95, %c0_96] : memref<400x640xbf16, #tpu.memory_space<vmem>>, vector<16x80xbf16>
    tpu.vector_store %arg8[%c0_95, %c0_96], %131 {strides = array<i32>} : memref<400x640xbf16, #tpu.memory_space<vmem>>, vector<16x80xbf16>,
    %133 = vector.extract_strided_slice %130 {offsets = [0, 1], sizes = [16, 80], strides = [1, 1]} : vector<16x110xbf16> to vector<16x80xbf16>
    %c16_97 = arith.constant 16 : index
    %c0_98 = arith.constant 0 : index
    %134 = vector.load %arg8[%c16_97, %c0_98] : memref<400x640xbf16, #tpu.memory_space<vmem>>, vector<16x80xbf16>
    tpu.vector_store %arg8[%c16_97, %c0_98], %133 {strides = array<i32>} : memref<400x640xbf16, #tpu.memory_space<vmem>>, vector<16x80xbf16>,
    %135 = vector.extract_strided_slice %130 {offsets = [0, 2], sizes = [16, 80], strides = [1, 1]} : vector<16x110xbf16> to vector<16x80xbf16>
    %c32_99 = arith.constant 32 : index
    %c0_100 = arith.constant 0 : index
    %136 = vector.load %arg8[%c32_99, %c0_100] : memref<400x640xbf16, #tpu.memory_space<vmem>>, vector<16x80xbf16>
    tpu.vector_store %arg8[%c32_99, %c0_100], %135 {strides = array<i32>} : memref<400x640xbf16, #tpu.memory_space<vmem>>, vector<16x80xbf16>,
    %137 = vector.extract_strided_slice %130 {offsets = [0, 10], sizes = [16, 80], strides = [1, 1]} : vector<16x110xbf16> to vector<16x80xbf16>
    %c48_101 = arith.constant 48 : index
    %c0_102 = arith.constant 0 : index
    %138 = vector.load %arg8[%c48_101, %c0_102] : memref<400x640xbf16, #tpu.memory_space<vmem>>, vector<16x80xbf16>
    tpu.vector_store %arg8[%c48_101, %c0_102], %137 {strides = array<i32>} : memref<400x640xbf16, #tpu.memory_space<vmem>>, vector<16x80xbf16>,
    %139 = vector.extract_strided_slice %130 {offsets = [0, 11], sizes = [16, 80], strides = [1, 1]} : vector<16x110xbf16> to vector<16x80xbf16>
    %c64_103 = arith.constant 64 : index
    %c0_104 = arith.constant 0 : index
    %140 = vector.load %arg8[%c64_103, %c0_104] : memref<400x640xbf16, #tpu.memory_space<vmem>>, vector<16x80xbf16>
    tpu.vector_store %arg8[%c64_103, %c0_104], %139 {strides = array<i32>} : memref<400x640xbf16, #tpu.memory_space<vmem>>, vector<16x80xbf16>,
    %141 = vector.extract_strided_slice %130 {offsets = [0, 12], sizes = [16, 80], strides = [1, 1]} : vector<16x110xbf16> to vector<16x80xbf16>
    %c80_105 = arith.constant 80 : index
    %c0_106 = arith.constant 0 : index
    %142 = vector.load %arg8[%c80_105, %c0_106] : memref<400x640xbf16, #tpu.memory_space<vmem>>, vector<16x80xbf16>
    tpu.vector_store %arg8[%c80_105, %c0_106], %141 {strides = array<i32>} : memref<400x640xbf16, #tpu.memory_space<vmem>>, vector<16x80xbf16>,
    %143 = vector.extract_strided_slice %130 {offsets = [0, 20], sizes = [16, 80], strides = [1, 1]} : vector<16x110xbf16> to vector<16x80xbf16>
    %c96_107 = arith.constant 96 : index
    %c0_108 = arith.constant 0 : index
    %144 = vector.load %arg8[%c96_107, %c0_108] : memref<400x640xbf16, #tpu.memory_space<vmem>>, vector<16x80xbf16>
    tpu.vector_store %arg8[%c96_107, %c0_108], %143 {strides = array<i32>} : memref<400x640xbf16, #tpu.memory_space<vmem>>, vector<16x80xbf16>,
    %145 = vector.extract_strided_slice %130 {offsets = [0, 21], sizes = [16, 80], strides = [1, 1]} : vector<16x110xbf16> to vector<16x80xbf16>
    %c112_109 = arith.constant 112 : index
    %c0_110 = arith.constant 0 : index
    %146 = vector.load %arg8[%c112_109, %c0_110] : memref<400x640xbf16, #tpu.memory_space<vmem>>, vector<16x80xbf16>
    tpu.vector_store %arg8[%c112_109, %c0_110], %145 {strides = array<i32>} : memref<400x640xbf16, #tpu.memory_space<vmem>>, vector<16x80xbf16>,
    %147 = vector.extract_strided_slice %130 {offsets = [0, 22], sizes = [16, 80], strides = [1, 1]} : vector<16x110xbf16> to vector<16x80xbf16>
    %c128_111 = arith.constant 128 : index
    %c0_112 = arith.constant 0 : index
    %148 = vector.load %arg8[%c128_111, %c0_112] : memref<400x640xbf16, #tpu.memory_space<vmem>>, vector<16x80xbf16>
    tpu.vector_store %arg8[%c128_111, %c0_112], %147 {strides = array<i32>} : memref<400x640xbf16, #tpu.memory_space<vmem>>, vector<16x80xbf16>,
    %c0_113 = arith.constant 0 : index
    %c110 = arith.constant 110 : index
    %149 = vector.load %arg9[%c0_113, %c110] : memref<16x220xbf16, #tpu.memory_space<vmem>>, vector<16x110xbf16>
    %150 = vector.extract_strided_slice %149 {offsets = [0, 0], sizes = [16, 80], strides = [1, 1]} : vector<16x110xbf16> to vector<16x80xbf16>
    %c0_114 = arith.constant 0 : index
    %c80_115 = arith.constant 80 : index
    %151 = vector.load %arg8[%c0_114, %c80_115] : memref<400x640xbf16, #tpu.memory_space<vmem>>, vector<16x80xbf16>
    tpu.vector_store %arg8[%c0_114, %c80_115], %150 {strides = array<i32>} : memref<400x640xbf16, #tpu.memory_space<vmem>>, vector<16x80xbf16>,
    %152 = vector.extract_strided_slice %149 {offsets = [0, 1], sizes = [16, 80], strides = [1, 1]} : vector<16x110xbf16> to vector<16x80xbf16>
    %c16_116 = arith.constant 16 : index
    %c80_117 = arith.constant 80 : index
    %153 = vector.load %arg8[%c16_116, %c80_117] : memref<400x640xbf16, #tpu.memory_space<vmem>>, vector<16x80xbf16>
    tpu.vector_store %arg8[%c16_116, %c80_117], %152 {strides = array<i32>} : memref<400x640xbf16, #tpu.memory_space<vmem>>, vector<16x80xbf16>,
    %154 = vector.extract_strided_slice %149 {offsets = [0, 2], sizes = [16, 80], strides = [1, 1]} : vector<16x110xbf16> to vector<16x80xbf16>
    %c32_118 = arith.constant 32 : index
    %c80_119 = arith.constant 80 : index
    %155 = vector.load %arg8[%c32_118, %c80_119] : memref<400x640xbf16, #tpu.memory_space<vmem>>, vector<16x80xbf16>
    tpu.vector_store %arg8[%c32_118, %c80_119], %154 {strides = array<i32>} : memref<400x640xbf16, #tpu.memory_space<vmem>>, vector<16x80xbf16>,
    %156 = vector.extract_strided_slice %149 {offsets = [0, 10], sizes = [16, 80], strides = [1, 1]} : vector<16x110xbf16> to vector<16x80xbf16>
    %c48_120 = arith.constant 48 : index
    %c80_121 = arith.constant 80 : index
    %157 = vector.load %arg8[%c48_120, %c80_121] : memref<400x640xbf16, #tpu.memory_space<vmem>>, vector<16x80xbf16>
    tpu.vector_store %arg8[%c48_120, %c80_121], %156 {strides = array<i32>} : memref<400x640xbf16, #tpu.memory_space<vmem>>, vector<16x80xbf16>,
    %158 = vector.extract_strided_slice %149 {offsets = [0, 11], sizes = [16, 80], strides = [1, 1]} : vector<16x110xbf16> to vector<16x80xbf16>
    %c64_122 = arith.constant 64 : index
    %c80_123 = arith.constant 80 : index
    %159 = vector.load %arg8[%c64_122, %c80_123] : memref<400x640xbf16, #tpu.memory_space<vmem>>, vector<16x80xbf16>
    tpu.vector_store %arg8[%c64_122, %c80_123], %158 {strides = array<i32>} : memref<400x640xbf16, #tpu.memory_space<vmem>>, vector<16x80xbf16>,
    %160 = vector.extract_strided_slice %149 {offsets = [0, 12], sizes = [16, 80], strides = [1, 1]} : vector<16x110xbf16> to vector<16x80xbf16>
    %c80_124 = arith.constant 80 : index
    %c80_125 = arith.constant 80 : index
    %161 = vector.load %arg8[%c80_124, %c80_125] : memref<400x640xbf16, #tpu.memory_space<vmem>>, vector<16x80xbf16>
    tpu.vector_store %arg8[%c80_124, %c80_125], %160 {strides = array<i32>} : memref<400x640xbf16, #tpu.memory_space<vmem>>, vector<16x80xbf16>,
    %162 = vector.extract_strided_slice %149 {offsets = [0, 20], sizes = [16, 80], strides = [1, 1]} : vector<16x110xbf16> to vector<16x80xbf16>
    %c96_126 = arith.constant 96 : index
    %c80_127 = arith.constant 80 : index
    %163 = vector.load %arg8[%c96_126, %c80_127] : memref<400x640xbf16, #tpu.memory_space<vmem>>, vector<16x80xbf16>
    tpu.vector_store %arg8[%c96_126, %c80_127], %162 {strides = array<i32>} : memref<400x640xbf16, #tpu.memory_space<vmem>>, vector<16x80xbf16>,
    %164 = vector.extract_strided_slice %149 {offsets = [0, 21], sizes = [16, 80], strides = [1, 1]} : vector<16x110xbf16> to vector<16x80xbf16>
    %c112_128 = arith.constant 112 : index
    %c80_129 = arith.constant 80 : index
    %165 = vector.load %arg8[%c112_128, %c80_129] : memref<400x640xbf16, #tpu.memory_space<vmem>>, vector<16x80xbf16>
    tpu.vector_store %arg8[%c112_128, %c80_129], %164 {strides = array<i32>} : memref<400x640xbf16, #tpu.memory_space<vmem>>, vector<16x80xbf16>,
    %166 = vector.extract_strided_slice %149 {offsets = [0, 22], sizes = [16, 80], strides = [1, 1]} : vector<16x110xbf16> to vector<16x80xbf16>
    %c128_130 = arith.constant 128 : index
    %c80_131 = arith.constant 80 : index
    %167 = vector.load %arg8[%c128_130, %c80_131] : memref<400x640xbf16, #tpu.memory_space<vmem>>, vector<16x80xbf16>
    tpu.vector_store %arg8[%c128_130, %c80_131], %166 {strides = array<i32>} : memref<400x640xbf16, #tpu.memory_space<vmem>>, vector<16x80xbf16>,
    %c16_132 = arith.constant 16 : index
    %c0_133 = arith.constant 0 : index
    %168 = vector.load %arg4[%c16_132, %c0_133] : memref<80x400xbf16, #tpu.memory_space<vmem>>, vector<8x144xbf16>
    %c16_134 = arith.constant 16 : index
    %c0_135 = arith.constant 0 : index
    %169 = vector.load %arg5[%c16_134, %c0_135] : memref<80x1xf32, #tpu.memory_space<vmem>>, vector<8x1xf32>
    %c0_136 = arith.constant 0 : index
    %c0_137 = arith.constant 0 : index
    %170 = vector.load %arg8[%c0_136, %c0_137] : memref<400x640xbf16, #tpu.memory_space<vmem>>, vector<144x160xbf16>
    %cst_138 = arith.constant dense<0.000000e+00> : vector<8x160xf32>
    %171 = tpu.matmul %168, %170, %cst_138 {dimension_numbers = #tpu.dot_dimension_numbers<[1], [0], [0], [1], [0, 0, 1, 1], [], []>} : vector<8x144xbf16>, vector<144x160xbf16>, vector<8x160xf32> -> vector<8x160xf32>
    %172 = vector.broadcast %169 : vector<8x1xf32> to vector<8x160xf32>
    %173 = arith.addf %171, %172 : vector<8x160xf32>
    %cst_139 = arith.constant 0.000000e+00 : f32
    %174 = vector.broadcast %cst_139 : f32 to vector<8x160xf32>
    %175 = arith.maximumf %173, %174 : vector<8x160xf32>
    %c0_140 = arith.constant 0 : index
    %c0_141 = arith.constant 0 : index
    %c0_142 = arith.constant 0 : index
    %176 = vector.load %arg2[%c0_140, %c0_141, %c0_142] : memref<2x8x110xbf16, #tpu.memory_space<vmem>>, vector<1x8x110xbf16>
    %177 = vector.shape_cast %176 : vector<1x8x110xbf16> to vector<8x110xbf16>
    %178 = vector.extract_strided_slice %177 {offsets = [0, 0], sizes = [8, 80], strides = [1, 1]} : vector<8x110xbf16> to vector<8x80xbf16>
    %c0_143 = arith.constant 0 : index
    %c0_144 = arith.constant 0 : index
    %179 = vector.load %arg8[%c0_143, %c0_144] : memref<400x640xbf16, #tpu.memory_space<vmem>>, vector<8x80xbf16>
    tpu.vector_store %arg8[%c0_143, %c0_144], %178 {strides = array<i32>} : memref<400x640xbf16, #tpu.memory_space<vmem>>, vector<8x80xbf16>,
    %180 = vector.extract_strided_slice %177 {offsets = [0, 1], sizes = [8, 80], strides = [1, 1]} : vector<8x110xbf16> to vector<8x80xbf16>
    %c8 = arith.constant 8 : index
    %c0_145 = arith.constant 0 : index
    %181 = vector.load %arg8[%c8, %c0_145] : memref<400x640xbf16, #tpu.memory_space<vmem>>, vector<8x80xbf16>
    tpu.vector_store %arg8[%c8, %c0_145], %180 {strides = array<i32>} : memref<400x640xbf16, #tpu.memory_space<vmem>>, vector<8x80xbf16>,
    %182 = vector.extract_strided_slice %177 {offsets = [0, 2], sizes = [8, 80], strides = [1, 1]} : vector<8x110xbf16> to vector<8x80xbf16>
    %c16_146 = arith.constant 16 : index
    %c0_147 = arith.constant 0 : index
    %183 = vector.load %arg8[%c16_146, %c0_147] : memref<400x640xbf16, #tpu.memory_space<vmem>>, vector<8x80xbf16>
    tpu.vector_store %arg8[%c16_146, %c0_147], %182 {strides = array<i32>} : memref<400x640xbf16, #tpu.memory_space<vmem>>, vector<8x80xbf16>,
    %184 = vector.extract_strided_slice %177 {offsets = [0, 10], sizes = [8, 80], strides = [1, 1]} : vector<8x110xbf16> to vector<8x80xbf16>
    %c24 = arith.constant 24 : index
    %c0_148 = arith.constant 0 : index
    %185 = vector.load %arg8[%c24, %c0_148] : memref<400x640xbf16, #tpu.memory_space<vmem>>, vector<8x80xbf16>
    tpu.vector_store %arg8[%c24, %c0_148], %184 {strides = array<i32>} : memref<400x640xbf16, #tpu.memory_space<vmem>>, vector<8x80xbf16>,
    %186 = vector.extract_strided_slice %177 {offsets = [0, 11], sizes = [8, 80], strides = [1, 1]} : vector<8x110xbf16> to vector<8x80xbf16>
    %c32_149 = arith.constant 32 : index
    %c0_150 = arith.constant 0 : index
    %187 = vector.load %arg8[%c32_149, %c0_150] : memref<400x640xbf16, #tpu.memory_space<vmem>>, vector<8x80xbf16>
    tpu.vector_store %arg8[%c32_149, %c0_150], %186 {strides = array<i32>} : memref<400x640xbf16, #tpu.memory_space<vmem>>, vector<8x80xbf16>,
    %188 = vector.extract_strided_slice %177 {offsets = [0, 12], sizes = [8, 80], strides = [1, 1]} : vector<8x110xbf16> to vector<8x80xbf16>
    %c40 = arith.constant 40 : index
    %c0_151 = arith.constant 0 : index
    %189 = vector.load %arg8[%c40, %c0_151] : memref<400x640xbf16, #tpu.memory_space<vmem>>, vector<8x80xbf16>
    tpu.vector_store %arg8[%c40, %c0_151], %188 {strides = array<i32>} : memref<400x640xbf16, #tpu.memory_space<vmem>>, vector<8x80xbf16>,
    %190 = vector.extract_strided_slice %177 {offsets = [0, 20], sizes = [8, 80], strides = [1, 1]} : vector<8x110xbf16> to vector<8x80xbf16>
    %c48_152 = arith.constant 48 : index
    %c0_153 = arith.constant 0 : index
    %191 = vector.load %arg8[%c48_152, %c0_153] : memref<400x640xbf16, #tpu.memory_space<vmem>>, vector<8x80xbf16>
    tpu.vector_store %arg8[%c48_152, %c0_153], %190 {strides = array<i32>} : memref<400x640xbf16, #tpu.memory_space<vmem>>, vector<8x80xbf16>,
    %192 = vector.extract_strided_slice %177 {offsets = [0, 21], sizes = [8, 80], strides = [1, 1]} : vector<8x110xbf16> to vector<8x80xbf16>
    %c56 = arith.constant 56 : index
    %c0_154 = arith.constant 0 : index
    %193 = vector.load %arg8[%c56, %c0_154] : memref<400x640xbf16, #tpu.memory_space<vmem>>, vector<8x80xbf16>
    tpu.vector_store %arg8[%c56, %c0_154], %192 {strides = array<i32>} : memref<400x640xbf16, #tpu.memory_space<vmem>>, vector<8x80xbf16>,
    %194 = vector.extract_strided_slice %177 {offsets = [0, 22], sizes = [8, 80], strides = [1, 1]} : vector<8x110xbf16> to vector<8x80xbf16>
    %c64_155 = arith.constant 64 : index
    %c0_156 = arith.constant 0 : index
    %195 = vector.load %arg8[%c64_155, %c0_156] : memref<400x640xbf16, #tpu.memory_space<vmem>>, vector<8x80xbf16>
    tpu.vector_store %arg8[%c64_155, %c0_156], %194 {strides = array<i32>} : memref<400x640xbf16, #tpu.memory_space<vmem>>, vector<8x80xbf16>,
    %c1_157 = arith.constant 1 : index
    %c0_158 = arith.constant 0 : index
    %c0_159 = arith.constant 0 : index
    %196 = vector.load %arg2[%c1_157, %c0_158, %c0_159] : memref<2x8x110xbf16, #tpu.memory_space<vmem>>, vector<1x8x110xbf16>
    %197 = vector.shape_cast %196 : vector<1x8x110xbf16> to vector<8x110xbf16>
    %198 = vector.extract_strided_slice %197 {offsets = [0, 0], sizes = [8, 80], strides = [1, 1]} : vector<8x110xbf16> to vector<8x80xbf16>
    %c0_160 = arith.constant 0 : index
    %c80_161 = arith.constant 80 : index
    %199 = vector.load %arg8[%c0_160, %c80_161] : memref<400x640xbf16, #tpu.memory_space<vmem>>, vector<8x80xbf16>
    tpu.vector_store %arg8[%c0_160, %c80_161], %198 {strides = array<i32>} : memref<400x640xbf16, #tpu.memory_space<vmem>>, vector<8x80xbf16>,
    %200 = vector.extract_strided_slice %197 {offsets = [0, 1], sizes = [8, 80], strides = [1, 1]} : vector<8x110xbf16> to vector<8x80xbf16>
    %c8_162 = arith.constant 8 : index
    %c80_163 = arith.constant 80 : index
    %201 = vector.load %arg8[%c8_162, %c80_163] : memref<400x640xbf16, #tpu.memory_space<vmem>>, vector<8x80xbf16>
    tpu.vector_store %arg8[%c8_162, %c80_163], %200 {strides = array<i32>} : memref<400x640xbf16, #tpu.memory_space<vmem>>, vector<8x80xbf16>,
    %202 = vector.extract_strided_slice %197 {offsets = [0, 2], sizes = [8, 80], strides = [1, 1]} : vector<8x110xbf16> to vector<8x80xbf16>
    %c16_164 = arith.constant 16 : index
    %c80_165 = arith.constant 80 : index
    %203 = vector.load %arg8[%c16_164, %c80_165] : memref<400x640xbf16, #tpu.memory_space<vmem>>, vector<8x80xbf16>
    tpu.vector_store %arg8[%c16_164, %c80_165], %202 {strides = array<i32>} : memref<400x640xbf16, #tpu.memory_space<vmem>>, vector<8x80xbf16>,
    %204 = vector.extract_strided_slice %197 {offsets = [0, 10], sizes = [8, 80], strides = [1, 1]} : vector<8x110xbf16> to vector<8x80xbf16>
    %c24_166 = arith.constant 24 : index
    %c80_167 = arith.constant 80 : index
    %205 = vector.load %arg8[%c24_166, %c80_167] : memref<400x640xbf16, #tpu.memory_space<vmem>>, vector<8x80xbf16>
    tpu.vector_store %arg8[%c24_166, %c80_167], %204 {strides = array<i32>} : memref<400x640xbf16, #tpu.memory_space<vmem>>, vector<8x80xbf16>,
    %206 = vector.extract_strided_slice %197 {offsets = [0, 11], sizes = [8, 80], strides = [1, 1]} : vector<8x110xbf16> to vector<8x80xbf16>
    %c32_168 = arith.constant 32 : index
    %c80_169 = arith.constant 80 : index
    %207 = vector.load %arg8[%c32_168, %c80_169] : memref<400x640xbf16, #tpu.memory_space<vmem>>, vector<8x80xbf16>
    tpu.vector_store %arg8[%c32_168, %c80_169], %206 {strides = array<i32>} : memref<400x640xbf16, #tpu.memory_space<vmem>>, vector<8x80xbf16>,
    %208 = vector.extract_strided_slice %197 {offsets = [0, 12], sizes = [8, 80], strides = [1, 1]} : vector<8x110xbf16> to vector<8x80xbf16>
    %c40_170 = arith.constant 40 : index
    %c80_171 = arith.constant 80 : index
    %209 = vector.load %arg8[%c40_170, %c80_171] : memref<400x640xbf16, #tpu.memory_space<vmem>>, vector<8x80xbf16>
    tpu.vector_store %arg8[%c40_170, %c80_171], %208 {strides = array<i32>} : memref<400x640xbf16, #tpu.memory_space<vmem>>, vector<8x80xbf16>,
    %210 = vector.extract_strided_slice %197 {offsets = [0, 20], sizes = [8, 80], strides = [1, 1]} : vector<8x110xbf16> to vector<8x80xbf16>
    %c48_172 = arith.constant 48 : index
    %c80_173 = arith.constant 80 : index
    %211 = vector.load %arg8[%c48_172, %c80_173] : memref<400x640xbf16, #tpu.memory_space<vmem>>, vector<8x80xbf16>
    tpu.vector_store %arg8[%c48_172, %c80_173], %210 {strides = array<i32>} : memref<400x640xbf16, #tpu.memory_space<vmem>>, vector<8x80xbf16>,
    %212 = vector.extract_strided_slice %197 {offsets = [0, 21], sizes = [8, 80], strides = [1, 1]} : vector<8x110xbf16> to vector<8x80xbf16>
    %c56_174 = arith.constant 56 : index
    %c80_175 = arith.constant 80 : index
    %213 = vector.load %arg8[%c56_174, %c80_175] : memref<400x640xbf16, #tpu.memory_space<vmem>>, vector<8x80xbf16>
    tpu.vector_store %arg8[%c56_174, %c80_175], %212 {strides = array<i32>} : memref<400x640xbf16, #tpu.memory_space<vmem>>, vector<8x80xbf16>,
    %214 = vector.extract_strided_slice %197 {offsets = [0, 22], sizes = [8, 80], strides = [1, 1]} : vector<8x110xbf16> to vector<8x80xbf16>
    %c64_176 = arith.constant 64 : index
    %c80_177 = arith.constant 80 : index
    %215 = vector.load %arg8[%c64_176, %c80_177] : memref<400x640xbf16, #tpu.memory_space<vmem>>, vector<8x80xbf16>
    tpu.vector_store %arg8[%c64_176, %c80_177], %214 {strides = array<i32>} : memref<400x640xbf16, #tpu.memory_space<vmem>>, vector<8x80xbf16>,
    %c24_178 = arith.constant 24 : index
    %c0_179 = arith.constant 0 : index
    %216 = vector.load %arg4[%c24_178, %c0_179] : memref<80x400xbf16, #tpu.memory_space<vmem>>, vector<8x72xbf16>
    %c24_180 = arith.constant 24 : index
    %c0_181 = arith.constant 0 : index
    %217 = vector.load %arg5[%c24_180, %c0_181] : memref<80x1xf32, #tpu.memory_space<vmem>>, vector<8x1xf32>
    %c0_182 = arith.constant 0 : index
    %c0_183 = arith.constant 0 : index
    %218 = vector.load %arg8[%c0_182, %c0_183] : memref<400x640xbf16, #tpu.memory_space<vmem>>, vector<72x160xbf16>
    %cst_184 = arith.constant dense<0.000000e+00> : vector<8x160xf32>
    %219 = tpu.matmul %216, %218, %cst_184 {dimension_numbers = #tpu.dot_dimension_numbers<[1], [0], [0], [1], [0, 0, 1, 1], [], []>} : vector<8x72xbf16>, vector<72x160xbf16>, vector<8x160xf32> -> vector<8x160xf32>
    %220 = vector.broadcast %217 : vector<8x1xf32> to vector<8x160xf32>
    %221 = arith.addf %219, %220 : vector<8x160xf32>
    %cst_185 = arith.constant 0.000000e+00 : f32
    %222 = vector.broadcast %cst_185 : f32 to vector<8x160xf32>
    %223 = arith.maximumf %221, %222 : vector<8x160xf32>
    %c0_186 = arith.constant 0 : index
    %c0_187 = arith.constant 0 : index
    %c0_188 = arith.constant 0 : index
    %224 = vector.load %arg3[%c0_186, %c0_187, %c0_188] : memref<2x8x42xbf16, #tpu.memory_space<vmem>>, vector<1x8x42xbf16>
    %225 = vector.shape_cast %224 : vector<1x8x42xbf16> to vector<8x42xbf16>
    %226 = vector.extract_strided_slice %225 {offsets = [0, 0], sizes = [8, 24], strides = [1, 1]} : vector<8x42xbf16> to vector<8x24xbf16>
    %c0_189 = arith.constant 0 : index
    %c0_190 = arith.constant 0 : index
    %227 = vector.load %arg8[%c0_189, %c0_190] : memref<400x640xbf16, #tpu.memory_space<vmem>>, vector<8x24xbf16>
    tpu.vector_store %arg8[%c0_189, %c0_190], %226 {strides = array<i32>} : memref<400x640xbf16, #tpu.memory_space<vmem>>, vector<8x24xbf16>,
    %228 = vector.extract_strided_slice %225 {offsets = [0, 1], sizes = [8, 24], strides = [1, 1]} : vector<8x42xbf16> to vector<8x24xbf16>
    %c8_191 = arith.constant 8 : index
    %c0_192 = arith.constant 0 : index
    %229 = vector.load %arg8[%c8_191, %c0_192] : memref<400x640xbf16, #tpu.memory_space<vmem>>, vector<8x24xbf16>
    tpu.vector_store %arg8[%c8_191, %c0_192], %228 {strides = array<i32>} : memref<400x640xbf16, #tpu.memory_space<vmem>>, vector<8x24xbf16>,
    %230 = vector.extract_strided_slice %225 {offsets = [0, 2], sizes = [8, 24], strides = [1, 1]} : vector<8x42xbf16> to vector<8x24xbf16>
    %c16_193 = arith.constant 16 : index
    %c0_194 = arith.constant 0 : index
    %231 = vector.load %arg8[%c16_193, %c0_194] : memref<400x640xbf16, #tpu.memory_space<vmem>>, vector<8x24xbf16>
    tpu.vector_store %arg8[%c16_193, %c0_194], %230 {strides = array<i32>} : memref<400x640xbf16, #tpu.memory_space<vmem>>, vector<8x24xbf16>,
    %232 = vector.extract_strided_slice %225 {offsets = [0, 6], sizes = [8, 24], strides = [1, 1]} : vector<8x42xbf16> to vector<8x24xbf16>
    %c24_195 = arith.constant 24 : index
    %c0_196 = arith.constant 0 : index
    %233 = vector.load %arg8[%c24_195, %c0_196] : memref<400x640xbf16, #tpu.memory_space<vmem>>, vector<8x24xbf16>
    tpu.vector_store %arg8[%c24_195, %c0_196], %232 {strides = array<i32>} : memref<400x640xbf16, #tpu.memory_space<vmem>>, vector<8x24xbf16>,
    %234 = vector.extract_strided_slice %225 {offsets = [0, 7], sizes = [8, 24], strides = [1, 1]} : vector<8x42xbf16> to vector<8x24xbf16>
    %c32_197 = arith.constant 32 : index
    %c0_198 = arith.constant 0 : index
    %235 = vector.load %arg8[%c32_197, %c0_198] : memref<400x640xbf16, #tpu.memory_space<vmem>>, vector<8x24xbf16>
    tpu.vector_store %arg8[%c32_197, %c0_198], %234 {strides = array<i32>} : memref<400x640xbf16, #tpu.memory_space<vmem>>, vector<8x24xbf16>,
    %236 = vector.extract_strided_slice %225 {offsets = [0, 8], sizes = [8, 24], strides = [1, 1]} : vector<8x42xbf16> to vector<8x24xbf16>
    %c40_199 = arith.constant 40 : index
    %c0_200 = arith.constant 0 : index
    %237 = vector.load %arg8[%c40_199, %c0_200] : memref<400x640xbf16, #tpu.memory_space<vmem>>, vector<8x24xbf16>
    tpu.vector_store %arg8[%c40_199, %c0_200], %236 {strides = array<i32>} : memref<400x640xbf16, #tpu.memory_space<vmem>>, vector<8x24xbf16>,
    %238 = vector.extract_strided_slice %225 {offsets = [0, 12], sizes = [8, 24], strides = [1, 1]} : vector<8x42xbf16> to vector<8x24xbf16>
    %c48_201 = arith.constant 48 : index
    %c0_202 = arith.constant 0 : index
    %239 = vector.load %arg8[%c48_201, %c0_202] : memref<400x640xbf16, #tpu.memory_space<vmem>>, vector<8x24xbf16>
    tpu.vector_store %arg8[%c48_201, %c0_202], %238 {strides = array<i32>} : memref<400x640xbf16, #tpu.memory_space<vmem>>, vector<8x24xbf16>,
    %240 = vector.extract_strided_slice %225 {offsets = [0, 13], sizes = [8, 24], strides = [1, 1]} : vector<8x42xbf16> to vector<8x24xbf16>
    %c56_203 = arith.constant 56 : index
    %c0_204 = arith.constant 0 : index
    %241 = vector.load %arg8[%c56_203, %c0_204] : memref<400x640xbf16, #tpu.memory_space<vmem>>, vector<8x24xbf16>
    tpu.vector_store %arg8[%c56_203, %c0_204], %240 {strides = array<i32>} : memref<400x640xbf16, #tpu.memory_space<vmem>>, vector<8x24xbf16>,
    %242 = vector.extract_strided_slice %225 {offsets = [0, 14], sizes = [8, 24], strides = [1, 1]} : vector<8x42xbf16> to vector<8x24xbf16>
    %c64_205 = arith.constant 64 : index
    %c0_206 = arith.constant 0 : index
    %243 = vector.load %arg8[%c64_205, %c0_206] : memref<400x640xbf16, #tpu.memory_space<vmem>>, vector<8x24xbf16>
    tpu.vector_store %arg8[%c64_205, %c0_206], %242 {strides = array<i32>} : memref<400x640xbf16, #tpu.memory_space<vmem>>, vector<8x24xbf16>,
    %c1_207 = arith.constant 1 : index
    %c0_208 = arith.constant 0 : index
    %c0_209 = arith.constant 0 : index
    %244 = vector.load %arg3[%c1_207, %c0_208, %c0_209] : memref<2x8x42xbf16, #tpu.memory_space<vmem>>, vector<1x8x42xbf16>
    %245 = vector.shape_cast %244 : vector<1x8x42xbf16> to vector<8x42xbf16>
    %246 = vector.extract_strided_slice %245 {offsets = [0, 0], sizes = [8, 24], strides = [1, 1]} : vector<8x42xbf16> to vector<8x24xbf16>
    %c0_210 = arith.constant 0 : index
    %c24_211 = arith.constant 24 : index
    %247 = vector.load %arg8[%c0_210, %c24_211] : memref<400x640xbf16, #tpu.memory_space<vmem>>, vector<8x24xbf16>
    tpu.vector_store %arg8[%c0_210, %c24_211], %246 {strides = array<i32>} : memref<400x640xbf16, #tpu.memory_space<vmem>>, vector<8x24xbf16>,
    %248 = vector.extract_strided_slice %245 {offsets = [0, 1], sizes = [8, 24], strides = [1, 1]} : vector<8x42xbf16> to vector<8x24xbf16>
    %c8_212 = arith.constant 8 : index
    %c24_213 = arith.constant 24 : index
    %249 = vector.load %arg8[%c8_212, %c24_213] : memref<400x640xbf16, #tpu.memory_space<vmem>>, vector<8x24xbf16>
    tpu.vector_store %arg8[%c8_212, %c24_213], %248 {strides = array<i32>} : memref<400x640xbf16, #tpu.memory_space<vmem>>, vector<8x24xbf16>,
    %250 = vector.extract_strided_slice %245 {offsets = [0, 2], sizes = [8, 24], strides = [1, 1]} : vector<8x42xbf16> to vector<8x24xbf16>
    %c16_214 = arith.constant 16 : index
    %c24_215 = arith.constant 24 : index
    %251 = vector.load %arg8[%c16_214, %c24_215] : memref<400x640xbf16, #tpu.memory_space<vmem>>, vector<8x24xbf16>
    tpu.vector_store %arg8[%c16_214, %c24_215], %250 {strides = array<i32>} : memref<400x640xbf16, #tpu.memory_space<vmem>>, vector<8x24xbf16>,
    %252 = vector.extract_strided_slice %245 {offsets = [0, 6], sizes = [8, 24], strides = [1, 1]} : vector<8x42xbf16> to vector<8x24xbf16>
    %c24_216 = arith.constant 24 : index
    %c24_217 = arith.constant 24 : index
    %253 = vector.load %arg8[%c24_216, %c24_217] : memref<400x640xbf16, #tpu.memory_space<vmem>>, vector<8x24xbf16>
    tpu.vector_store %arg8[%c24_216, %c24_217], %252 {strides = array<i32>} : memref<400x640xbf16, #tpu.memory_space<vmem>>, vector<8x24xbf16>,
    %254 = vector.extract_strided_slice %245 {offsets = [0, 7], sizes = [8, 24], strides = [1, 1]} : vector<8x42xbf16> to vector<8x24xbf16>
    %c32_218 = arith.constant 32 : index
    %c24_219 = arith.constant 24 : index
    %255 = vector.load %arg8[%c32_218, %c24_219] : memref<400x640xbf16, #tpu.memory_space<vmem>>, vector<8x24xbf16>
    tpu.vector_store %arg8[%c32_218, %c24_219], %254 {strides = array<i32>} : memref<400x640xbf16, #tpu.memory_space<vmem>>, vector<8x24xbf16>,
    %256 = vector.extract_strided_slice %245 {offsets = [0, 8], sizes = [8, 24], strides = [1, 1]} : vector<8x42xbf16> to vector<8x24xbf16>
    %c40_220 = arith.constant 40 : index
    %c24_221 = arith.constant 24 : index
    %257 = vector.load %arg8[%c40_220, %c24_221] : memref<400x640xbf16, #tpu.memory_space<vmem>>, vector<8x24xbf16>
    tpu.vector_store %arg8[%c40_220, %c24_221], %256 {strides = array<i32>} : memref<400x640xbf16, #tpu.memory_space<vmem>>, vector<8x24xbf16>,
    %258 = vector.extract_strided_slice %245 {offsets = [0, 12], sizes = [8, 24], strides = [1, 1]} : vector<8x42xbf16> to vector<8x24xbf16>
    %c48_222 = arith.constant 48 : index
    %c24_223 = arith.constant 24 : index
    %259 = vector.load %arg8[%c48_222, %c24_223] : memref<400x640xbf16, #tpu.memory_space<vmem>>, vector<8x24xbf16>
    tpu.vector_store %arg8[%c48_222, %c24_223], %258 {strides = array<i32>} : memref<400x640xbf16, #tpu.memory_space<vmem>>, vector<8x24xbf16>,
    %260 = vector.extract_strided_slice %245 {offsets = [0, 13], sizes = [8, 24], strides = [1, 1]} : vector<8x42xbf16> to vector<8x24xbf16>
    %c56_224 = arith.constant 56 : index
    %c24_225 = arith.constant 24 : index
    %261 = vector.load %arg8[%c56_224, %c24_225] : memref<400x640xbf16, #tpu.memory_space<vmem>>, vector<8x24xbf16>
    tpu.vector_store %arg8[%c56_224, %c24_225], %260 {strides = array<i32>} : memref<400x640xbf16, #tpu.memory_space<vmem>>, vector<8x24xbf16>,
    %262 = vector.extract_strided_slice %245 {offsets = [0, 14], sizes = [8, 24], strides = [1, 1]} : vector<8x42xbf16> to vector<8x24xbf16>
    %c64_226 = arith.constant 64 : index
    %c24_227 = arith.constant 24 : index
    %263 = vector.load %arg8[%c64_226, %c24_227] : memref<400x640xbf16, #tpu.memory_space<vmem>>, vector<8x24xbf16>
    tpu.vector_store %arg8[%c64_226, %c24_227], %262 {strides = array<i32>} : memref<400x640xbf16, #tpu.memory_space<vmem>>, vector<8x24xbf16>,
    %c32_228 = arith.constant 32 : index
    %c0_229 = arith.constant 0 : index
    %264 = vector.load %arg4[%c32_228, %c0_229] : memref<80x400xbf16, #tpu.memory_space<vmem>>, vector<8x72xbf16>
    %c32_230 = arith.constant 32 : index
    %c0_231 = arith.constant 0 : index
    %265 = vector.load %arg5[%c32_230, %c0_231] : memref<80x1xf32, #tpu.memory_space<vmem>>, vector<8x1xf32>
    %c0_232 = arith.constant 0 : index
    %c0_233 = arith.constant 0 : index
    %266 = vector.load %arg8[%c0_232, %c0_233] : memref<400x640xbf16, #tpu.memory_space<vmem>>, vector<72x48xbf16>
    %cst_234 = arith.constant dense<0.000000e+00> : vector<8x48xf32>
    %267 = tpu.matmul %264, %266, %cst_234 {dimension_numbers = #tpu.dot_dimension_numbers<[1], [0], [0], [1], [0, 0, 1, 1], [], []>} : vector<8x72xbf16>, vector<72x48xbf16>, vector<8x48xf32> -> vector<8x48xf32>
    %268 = vector.broadcast %265 : vector<8x1xf32> to vector<8x48xf32>
    %269 = arith.addf %267, %268 : vector<8x48xf32>
    %cst_235 = arith.constant 0.000000e+00 : f32
    %270 = vector.broadcast %cst_235 : f32 to vector<8x48xf32>
    %271 = arith.maximumf %269, %270 : vector<8x48xf32>
    %272 = arith.truncf %271 : vector<8x48xf32> to vector<8x48xbf16>
    %c624 = arith.constant 624 : index
    %c0_236 = arith.constant 0 : index
    %273 = vector.load %arg6[%c624, %c0_236] : memref<832x220xbf16, #tpu.memory_space<vmem>>, vector<48x220xbf16>
    %cst_237 = arith.constant dense<0.000000e+00> : vector<8x220xf32>
    %274 = tpu.matmul %272, %273, %cst_237 {dimension_numbers = #tpu.dot_dimension_numbers<[1], [0], [0], [1], [0, 0, 1, 1], [], []>} : vector<8x48xbf16>, vector<48x220xbf16>, vector<8x220xf32> -> vector<8x220xf32>
    %275 = arith.truncf %274 : vector<8x220xf32> to vector<8x220xbf16>
    %c0_238 = arith.constant 0 : index
    %c0_239 = arith.constant 0 : index
    %276 = vector.load %arg9[%c0_238, %c0_239] : memref<16x220xbf16, #tpu.memory_space<vmem>>, vector<8x220xbf16>
    tpu.vector_store %arg9[%c0_238, %c0_239], %275 {strides = array<i32>} : memref<16x220xbf16, #tpu.memory_space<vmem>>, vector<8x220xbf16>,
    %c0_240 = arith.constant 0 : index
    %c0_241 = arith.constant 0 : index
    %277 = vector.load %arg9[%c0_240, %c0_241] : memref<16x220xbf16, #tpu.memory_space<vmem>>, vector<8x110xbf16>
    %278 = vector.extract_strided_slice %277 {offsets = [0, 0], sizes = [8, 80], strides = [1, 1]} : vector<8x110xbf16> to vector<8x80xbf16>
    %c0_242 = arith.constant 0 : index
    %c0_243 = arith.constant 0 : index
    %279 = vector.load %arg8[%c0_242, %c0_243] : memref<400x640xbf16, #tpu.memory_space<vmem>>, vector<8x80xbf16>
    tpu.vector_store %arg8[%c0_242, %c0_243], %278 {strides = array<i32>} : memref<400x640xbf16, #tpu.memory_space<vmem>>, vector<8x80xbf16>,
    %280 = vector.extract_strided_slice %277 {offsets = [0, 1], sizes = [8, 80], strides = [1, 1]} : vector<8x110xbf16> to vector<8x80xbf16>
    %c8_244 = arith.constant 8 : index
    %c0_245 = arith.constant 0 : index
    %281 = vector.load %arg8[%c8_244, %c0_245] : memref<400x640xbf16, #tpu.memory_space<vmem>>, vector<8x80xbf16>
    tpu.vector_store %arg8[%c8_244, %c0_245], %280 {strides = array<i32>} : memref<400x640xbf16, #tpu.memory_space<vmem>>, vector<8x80xbf16>,
    %282 = vector.extract_strided_slice %277 {offsets = [0, 2], sizes = [8, 80], strides = [1, 1]} : vector<8x110xbf16> to vector<8x80xbf16>
    %c16_246 = arith.constant 16 : index
    %c0_247 = arith.constant 0 : index
    %283 = vector.load %arg8[%c16_246, %c0_247] : memref<400x640xbf16, #tpu.memory_space<vmem>>, vector<8x80xbf16>
    tpu.vector_store %arg8[%c16_246, %c0_247], %282 {strides = array<i32>} : memref<400x640xbf16, #tpu.memory_space<vmem>>, vector<8x80xbf16>,
    %284 = vector.extract_strided_slice %277 {offsets = [0, 10], sizes = [8, 80], strides = [1, 1]} : vector<8x110xbf16> to vector<8x80xbf16>
    %c24_248 = arith.constant 24 : index
    %c0_249 = arith.constant 0 : index
    %285 = vector.load %arg8[%c24_248, %c0_249] : memref<400x640xbf16, #tpu.memory_space<vmem>>, vector<8x80xbf16>
    tpu.vector_store %arg8[%c24_248, %c0_249], %284 {strides = array<i32>} : memref<400x640xbf16, #tpu.memory_space<vmem>>, vector<8x80xbf16>,
    %286 = vector.extract_strided_slice %277 {offsets = [0, 11], sizes = [8, 80], strides = [1, 1]} : vector<8x110xbf16> to vector<8x80xbf16>
    %c32_250 = arith.constant 32 : index
    %c0_251 = arith.constant 0 : index
    %287 = vector.load %arg8[%c32_250, %c0_251] : memref<400x640xbf16, #tpu.memory_space<vmem>>, vector<8x80xbf16>
    tpu.vector_store %arg8[%c32_250, %c0_251], %286 {strides = array<i32>} : memref<400x640xbf16, #tpu.memory_space<vmem>>, vector<8x80xbf16>,
    %288 = vector.extract_strided_slice %277 {offsets = [0, 12], sizes = [8, 80], strides = [1, 1]} : vector<8x110xbf16> to vector<8x80xbf16>
    %c40_252 = arith.constant 40 : index
    %c0_253 = arith.constant 0 : index
    %289 = vector.load %arg8[%c40_252, %c0_253] : memref<400x640xbf16, #tpu.memory_space<vmem>>, vector<8x80xbf16>
    tpu.vector_store %arg8[%c40_252, %c0_253], %288 {strides = array<i32>} : memref<400x640xbf16, #tpu.memory_space<vmem>>, vector<8x80xbf16>,
    %290 = vector.extract_strided_slice %277 {offsets = [0, 20], sizes = [8, 80], strides = [1, 1]} : vector<8x110xbf16> to vector<8x80xbf16>
    %c48_254 = arith.constant 48 : index
    %c0_255 = arith.constant 0 : index
    %291 = vector.load %arg8[%c48_254, %c0_255] : memref<400x640xbf16, #tpu.memory_space<vmem>>, vector<8x80xbf16>
    tpu.vector_store %arg8[%c48_254, %c0_255], %290 {strides = array<i32>} : memref<400x640xbf16, #tpu.memory_space<vmem>>, vector<8x80xbf16>,
    %292 = vector.extract_strided_slice %277 {offsets = [0, 21], sizes = [8, 80], strides = [1, 1]} : vector<8x110xbf16> to vector<8x80xbf16>
    %c56_256 = arith.constant 56 : index
    %c0_257 = arith.constant 0 : index
    %293 = vector.load %arg8[%c56_256, %c0_257] : memref<400x640xbf16, #tpu.memory_space<vmem>>, vector<8x80xbf16>
    tpu.vector_store %arg8[%c56_256, %c0_257], %292 {strides = array<i32>} : memref<400x640xbf16, #tpu.memory_space<vmem>>, vector<8x80xbf16>,
    %294 = vector.extract_strided_slice %277 {offsets = [0, 22], sizes = [8, 80], strides = [1, 1]} : vector<8x110xbf16> to vector<8x80xbf16>
    %c64_258 = arith.constant 64 : index
    %c0_259 = arith.constant 0 : index
    %295 = vector.load %arg8[%c64_258, %c0_259] : memref<400x640xbf16, #tpu.memory_space<vmem>>, vector<8x80xbf16>
    tpu.vector_store %arg8[%c64_258, %c0_259], %294 {strides = array<i32>} : memref<400x640xbf16, #tpu.memory_space<vmem>>, vector<8x80xbf16>,
    %c0_260 = arith.constant 0 : index
    %c110_261 = arith.constant 110 : index
    %296 = vector.load %arg9[%c0_260, %c110_261] : memref<16x220xbf16, #tpu.memory_space<vmem>>, vector<8x110xbf16>
    %297 = vector.extract_strided_slice %296 {offsets = [0, 0], sizes = [8, 80], strides = [1, 1]} : vector<8x110xbf16> to vector<8x80xbf16>
    %c0_262 = arith.constant 0 : index
    %c80_263 = arith.constant 80 : index
    %298 = vector.load %arg8[%c0_262, %c80_263] : memref<400x640xbf16, #tpu.memory_space<vmem>>, vector<8x80xbf16>
    tpu.vector_store %arg8[%c0_262, %c80_263], %297 {strides = array<i32>} : memref<400x640xbf16, #tpu.memory_space<vmem>>, vector<8x80xbf16>,
    %299 = vector.extract_strided_slice %296 {offsets = [0, 1], sizes = [8, 80], strides = [1, 1]} : vector<8x110xbf16> to vector<8x80xbf16>
    %c8_264 = arith.constant 8 : index
    %c80_265 = arith.constant 80 : index
    %300 = vector.load %arg8[%c8_264, %c80_265] : memref<400x640xbf16, #tpu.memory_space<vmem>>, vector<8x80xbf16>
    tpu.vector_store %arg8[%c8_264, %c80_265], %299 {strides = array<i32>} : memref<400x640xbf16, #tpu.memory_space<vmem>>, vector<8x80xbf16>,
    %301 = vector.extract_strided_slice %296 {offsets = [0, 2], sizes = [8, 80], strides = [1, 1]} : vector<8x110xbf16> to vector<8x80xbf16>
    %c16_266 = arith.constant 16 : index
    %c80_267 = arith.constant 80 : index
    %302 = vector.load %arg8[%c16_266, %c80_267] : memref<400x640xbf16, #tpu.memory_space<vmem>>, vector<8x80xbf16>
    tpu.vector_store %arg8[%c16_266, %c80_267], %301 {strides = array<i32>} : memref<400x640xbf16, #tpu.memory_space<vmem>>, vector<8x80xbf16>,
    %303 = vector.extract_strided_slice %296 {offsets = [0, 10], sizes = [8, 80], strides = [1, 1]} : vector<8x110xbf16> to vector<8x80xbf16>
    %c24_268 = arith.constant 24 : index
    %c80_269 = arith.constant 80 : index
    %304 = vector.load %arg8[%c24_268, %c80_269] : memref<400x640xbf16, #tpu.memory_space<vmem>>, vector<8x80xbf16>
    tpu.vector_store %arg8[%c24_268, %c80_269], %303 {strides = array<i32>} : memref<400x640xbf16, #tpu.memory_space<vmem>>, vector<8x80xbf16>,
    %305 = vector.extract_strided_slice %296 {offsets = [0, 11], sizes = [8, 80], strides = [1, 1]} : vector<8x110xbf16> to vector<8x80xbf16>
    %c32_270 = arith.constant 32 : index
    %c80_271 = arith.constant 80 : index
    %306 = vector.load %arg8[%c32_270, %c80_271] : memref<400x640xbf16, #tpu.memory_space<vmem>>, vector<8x80xbf16>
    tpu.vector_store %arg8[%c32_270, %c80_271], %305 {strides = array<i32>} : memref<400x640xbf16, #tpu.memory_space<vmem>>, vector<8x80xbf16>,
    %307 = vector.extract_strided_slice %296 {offsets = [0, 12], sizes = [8, 80], strides = [1, 1]} : vector<8x110xbf16> to vector<8x80xbf16>
    %c40_272 = arith.constant 40 : index
    %c80_273 = arith.constant 80 : index
    %308 = vector.load %arg8[%c40_272, %c80_273] : memref<400x640xbf16, #tpu.memory_space<vmem>>, vector<8x80xbf16>
    tpu.vector_store %arg8[%c40_272, %c80_273], %307 {strides = array<i32>} : memref<400x640xbf16, #tpu.memory_space<vmem>>, vector<8x80xbf16>,
    %309 = vector.extract_strided_slice %296 {offsets = [0, 20], sizes = [8, 80], strides = [1, 1]} : vector<8x110xbf16> to vector<8x80xbf16>
    %c48_274 = arith.constant 48 : index
    %c80_275 = arith.constant 80 : index
    %310 = vector.load %arg8[%c48_274, %c80_275] : memref<400x640xbf16, #tpu.memory_space<vmem>>, vector<8x80xbf16>
    tpu.vector_store %arg8[%c48_274, %c80_275], %309 {strides = array<i32>} : memref<400x640xbf16, #tpu.memory_space<vmem>>, vector<8x80xbf16>,
    %311 = vector.extract_strided_slice %296 {offsets = [0, 21], sizes = [8, 80], strides = [1, 1]} : vector<8x110xbf16> to vector<8x80xbf16>
    %c56_276 = arith.constant 56 : index
    %c80_277 = arith.constant 80 : index
    %312 = vector.load %arg8[%c56_276, %c80_277] : memref<400x640xbf16, #tpu.memory_space<vmem>>, vector<8x80xbf16>
    tpu.vector_store %arg8[%c56_276, %c80_277], %311 {strides = array<i32>} : memref<400x640xbf16, #tpu.memory_space<vmem>>, vector<8x80xbf16>,
    %313 = vector.extract_strided_slice %296 {offsets = [0, 22], sizes = [8, 80], strides = [1, 1]} : vector<8x110xbf16> to vector<8x80xbf16>
    %c64_278 = arith.constant 64 : index
    %c80_279 = arith.constant 80 : index
    %314 = vector.load %arg8[%c64_278, %c80_279] : memref<400x640xbf16, #tpu.memory_space<vmem>>, vector<8x80xbf16>
    tpu.vector_store %arg8[%c64_278, %c80_279], %313 {strides = array<i32>} : memref<400x640xbf16, #tpu.memory_space<vmem>>, vector<8x80xbf16>,
    %c40_280 = arith.constant 40 : index
    %c0_281 = arith.constant 0 : index
    %315 = vector.load %arg4[%c40_280, %c0_281] : memref<80x400xbf16, #tpu.memory_space<vmem>>, vector<8x72xbf16>
    %c40_282 = arith.constant 40 : index
    %c0_283 = arith.constant 0 : index
    %316 = vector.load %arg5[%c40_282, %c0_283] : memref<80x1xf32, #tpu.memory_space<vmem>>, vector<8x1xf32>
    %c0_284 = arith.constant 0 : index
    %c0_285 = arith.constant 0 : index
    %317 = vector.load %arg8[%c0_284, %c0_285] : memref<400x640xbf16, #tpu.memory_space<vmem>>, vector<72x160xbf16>
    %cst_286 = arith.constant dense<0.000000e+00> : vector<8x160xf32>
    %318 = tpu.matmul %315, %317, %cst_286 {dimension_numbers = #tpu.dot_dimension_numbers<[1], [0], [0], [1], [0, 0, 1, 1], [], []>} : vector<8x72xbf16>, vector<72x160xbf16>, vector<8x160xf32> -> vector<8x160xf32>
    %319 = vector.broadcast %316 : vector<8x1xf32> to vector<8x160xf32>
    %320 = arith.addf %318, %319 : vector<8x160xf32>
    %cst_287 = arith.constant 0.000000e+00 : f32
    %321 = vector.broadcast %cst_287 : f32 to vector<8x160xf32>
    %322 = arith.maximumf %320, %321 : vector<8x160xf32>
    %c48_288 = arith.constant 48 : index
    %c0_289 = arith.constant 0 : index
    %323 = vector.load %arg4[%c48_288, %c0_289] : memref<80x400xbf16, #tpu.memory_space<vmem>>, vector<8x24xbf16>
    %c48_290 = arith.constant 48 : index
    %c0_291 = arith.constant 0 : index
    %324 = vector.load %arg5[%c48_290, %c0_291] : memref<80x1xf32, #tpu.memory_space<vmem>>, vector<8x1xf32>
    %325 = vector.extract_strided_slice %323 {offsets = [0, 0], sizes = [8, 8], strides = [1, 1]} : vector<8x24xbf16> to vector<8x8xbf16>
    %326 = arith.truncf %175 : vector<8x160xf32> to vector<8x160xbf16>
    %cst_292 = arith.constant dense<0.000000e+00> : vector<8x160xf32>
    %327 = tpu.matmul %325, %326, %cst_292 {dimension_numbers = #tpu.dot_dimension_numbers<[1], [0], [0], [1], [0, 0, 1, 1], [], []>} : vector<8x8xbf16>, vector<8x160xbf16>, vector<8x160xf32> -> vector<8x160xf32>
    %328 = vector.extract_strided_slice %323 {offsets = [0, 8], sizes = [8, 8], strides = [1, 1]} : vector<8x24xbf16> to vector<8x8xbf16>
    %329 = arith.truncf %223 : vector<8x160xf32> to vector<8x160xbf16>
    %cst_293 = arith.constant dense<0.000000e+00> : vector<8x160xf32>
    %330 = tpu.matmul %328, %329, %cst_293 {dimension_numbers = #tpu.dot_dimension_numbers<[1], [0], [0], [1], [0, 0, 1, 1], [], []>} : vector<8x8xbf16>, vector<8x160xbf16>, vector<8x160xf32> -> vector<8x160xf32>
    %331 = arith.addf %327, %330 : vector<8x160xf32>
    %332 = vector.extract_strided_slice %323 {offsets = [0, 16], sizes = [8, 8], strides = [1, 1]} : vector<8x24xbf16> to vector<8x8xbf16>
    %333 = arith.truncf %322 : vector<8x160xf32> to vector<8x160xbf16>
    %cst_294 = arith.constant dense<0.000000e+00> : vector<8x160xf32>
    %334 = tpu.matmul %332, %333, %cst_294 {dimension_numbers = #tpu.dot_dimension_numbers<[1], [0], [0], [1], [0, 0, 1, 1], [], []>} : vector<8x8xbf16>, vector<8x160xbf16>, vector<8x160xf32> -> vector<8x160xf32>
    %335 = arith.addf %331, %334 : vector<8x160xf32>
    %336 = vector.broadcast %324 : vector<8x1xf32> to vector<8x160xf32>
    %337 = arith.addf %335, %336 : vector<8x160xf32>
    %cst_295 = arith.constant 0.000000e+00 : f32
    %338 = vector.broadcast %cst_295 : f32 to vector<8x160xf32>
    %339 = arith.maximumf %337, %338 : vector<8x160xf32>
    %340 = arith.truncf %339 : vector<8x160xf32> to vector<8x160xbf16>
    %c672 = arith.constant 672 : index
    %c0_296 = arith.constant 0 : index
    %341 = vector.load %arg6[%c672, %c0_296] : memref<832x220xbf16, #tpu.memory_space<vmem>>, vector<160x220xbf16>
    %cst_297 = arith.constant dense<0.000000e+00> : vector<8x220xf32>
    %342 = tpu.matmul %340, %341, %cst_297 {dimension_numbers = #tpu.dot_dimension_numbers<[1], [0], [0], [1], [0, 0, 1, 1], [], []>} : vector<8x160xbf16>, vector<160x220xbf16>, vector<8x220xf32> -> vector<8x220xf32>
    %343 = arith.truncf %342 : vector<8x220xf32> to vector<8x220xbf16>
    %c0_298 = arith.constant 0 : index
    %c0_299 = arith.constant 0 : index
    %344 = vector.load %arg9[%c0_298, %c0_299] : memref<16x220xbf16, #tpu.memory_space<vmem>>, vector<8x220xbf16>
    tpu.vector_store %arg9[%c0_298, %c0_299], %343 {strides = array<i32>} : memref<16x220xbf16, #tpu.memory_space<vmem>>, vector<8x220xbf16>,
    %c0_300 = arith.constant 0 : index
    %c0_301 = arith.constant 0 : index
    %345 = vector.load %arg9[%c0_300, %c0_301] : memref<16x220xbf16, #tpu.memory_space<vmem>>, vector<8x110xbf16>
    %346 = vector.extract_strided_slice %345 {offsets = [0, 0], sizes = [8, 80], strides = [1, 1]} : vector<8x110xbf16> to vector<8x80xbf16>
    %c0_302 = arith.constant 0 : index
    %c0_303 = arith.constant 0 : index
    %347 = vector.load %arg8[%c0_302, %c0_303] : memref<400x640xbf16, #tpu.memory_space<vmem>>, vector<8x80xbf16>
    tpu.vector_store %arg8[%c0_302, %c0_303], %346 {strides = array<i32>} : memref<400x640xbf16, #tpu.memory_space<vmem>>, vector<8x80xbf16>,
    %348 = vector.extract_strided_slice %345 {offsets = [0, 1], sizes = [8, 80], strides = [1, 1]} : vector<8x110xbf16> to vector<8x80xbf16>
    %c8_304 = arith.constant 8 : index
    %c0_305 = arith.constant 0 : index
    %349 = vector.load %arg8[%c8_304, %c0_305] : memref<400x640xbf16, #tpu.memory_space<vmem>>, vector<8x80xbf16>
    tpu.vector_store %arg8[%c8_304, %c0_305], %348 {strides = array<i32>} : memref<400x640xbf16, #tpu.memory_space<vmem>>, vector<8x80xbf16>,
    %350 = vector.extract_strided_slice %345 {offsets = [0, 2], sizes = [8, 80], strides = [1, 1]} : vector<8x110xbf16> to vector<8x80xbf16>
    %c16_306 = arith.constant 16 : index
    %c0_307 = arith.constant 0 : index
    %351 = vector.load %arg8[%c16_306, %c0_307] : memref<400x640xbf16, #tpu.memory_space<vmem>>, vector<8x80xbf16>
    tpu.vector_store %arg8[%c16_306, %c0_307], %350 {strides = array<i32>} : memref<400x640xbf16, #tpu.memory_space<vmem>>, vector<8x80xbf16>,
    %352 = vector.extract_strided_slice %345 {offsets = [0, 10], sizes = [8, 80], strides = [1, 1]} : vector<8x110xbf16> to vector<8x80xbf16>
    %c24_308 = arith.constant 24 : index
    %c0_309 = arith.constant 0 : index
    %353 = vector.load %arg8[%c24_308, %c0_309] : memref<400x640xbf16, #tpu.memory_space<vmem>>, vector<8x80xbf16>
    tpu.vector_store %arg8[%c24_308, %c0_309], %352 {strides = array<i32>} : memref<400x640xbf16, #tpu.memory_space<vmem>>, vector<8x80xbf16>,
    %354 = vector.extract_strided_slice %345 {offsets = [0, 11], sizes = [8, 80], strides = [1, 1]} : vector<8x110xbf16> to vector<8x80xbf16>
    %c32_310 = arith.constant 32 : index
    %c0_311 = arith.constant 0 : index
    %355 = vector.load %arg8[%c32_310, %c0_311] : memref<400x640xbf16, #tpu.memory_space<vmem>>, vector<8x80xbf16>
    tpu.vector_store %arg8[%c32_310, %c0_311], %354 {strides = array<i32>} : memref<400x640xbf16, #tpu.memory_space<vmem>>, vector<8x80xbf16>,
    %356 = vector.extract_strided_slice %345 {offsets = [0, 12], sizes = [8, 80], strides = [1, 1]} : vector<8x110xbf16> to vector<8x80xbf16>
    %c40_312 = arith.constant 40 : index
    %c0_313 = arith.constant 0 : index
    %357 = vector.load %arg8[%c40_312, %c0_313] : memref<400x640xbf16, #tpu.memory_space<vmem>>, vector<8x80xbf16>
    tpu.vector_store %arg8[%c40_312, %c0_313], %356 {strides = array<i32>} : memref<400x640xbf16, #tpu.memory_space<vmem>>, vector<8x80xbf16>,
    %358 = vector.extract_strided_slice %345 {offsets = [0, 20], sizes = [8, 80], strides = [1, 1]} : vector<8x110xbf16> to vector<8x80xbf16>
    %c48_314 = arith.constant 48 : index
    %c0_315 = arith.constant 0 : index
    %359 = vector.load %arg8[%c48_314, %c0_315] : memref<400x640xbf16, #tpu.memory_space<vmem>>, vector<8x80xbf16>
    tpu.vector_store %arg8[%c48_314, %c0_315], %358 {strides = array<i32>} : memref<400x640xbf16, #tpu.memory_space<vmem>>, vector<8x80xbf16>,
    %360 = vector.extract_strided_slice %345 {offsets = [0, 21], sizes = [8, 80], strides = [1, 1]} : vector<8x110xbf16> to vector<8x80xbf16>
    %c56_316 = arith.constant 56 : index
    %c0_317 = arith.constant 0 : index
    %361 = vector.load %arg8[%c56_316, %c0_317] : memref<400x640xbf16, #tpu.memory_space<vmem>>, vector<8x80xbf16>
    tpu.vector_store %arg8[%c56_316, %c0_317], %360 {strides = array<i32>} : memref<400x640xbf16, #tpu.memory_space<vmem>>, vector<8x80xbf16>,
    %362 = vector.extract_strided_slice %345 {offsets = [0, 22], sizes = [8, 80], strides = [1, 1]} : vector<8x110xbf16> to vector<8x80xbf16>
    %c64_318 = arith.constant 64 : index
    %c0_319 = arith.constant 0 : index
    %363 = vector.load %arg8[%c64_318, %c0_319] : memref<400x640xbf16, #tpu.memory_space<vmem>>, vector<8x80xbf16>
    tpu.vector_store %arg8[%c64_318, %c0_319], %362 {strides = array<i32>} : memref<400x640xbf16, #tpu.memory_space<vmem>>, vector<8x80xbf16>,
    %c0_320 = arith.constant 0 : index
    %c110_321 = arith.constant 110 : index
    %364 = vector.load %arg9[%c0_320, %c110_321] : memref<16x220xbf16, #tpu.memory_space<vmem>>, vector<8x110xbf16>
    %365 = vector.extract_strided_slice %364 {offsets = [0, 0], sizes = [8, 80], strides = [1, 1]} : vector<8x110xbf16> to vector<8x80xbf16>
    %c0_322 = arith.constant 0 : index
    %c80_323 = arith.constant 80 : index
    %366 = vector.load %arg8[%c0_322, %c80_323] : memref<400x640xbf16, #tpu.memory_space<vmem>>, vector<8x80xbf16>
    tpu.vector_store %arg8[%c0_322, %c80_323], %365 {strides = array<i32>} : memref<400x640xbf16, #tpu.memory_space<vmem>>, vector<8x80xbf16>,
    %367 = vector.extract_strided_slice %364 {offsets = [0, 1], sizes = [8, 80], strides = [1, 1]} : vector<8x110xbf16> to vector<8x80xbf16>
    %c8_324 = arith.constant 8 : index
    %c80_325 = arith.constant 80 : index
    %368 = vector.load %arg8[%c8_324, %c80_325] : memref<400x640xbf16, #tpu.memory_space<vmem>>, vector<8x80xbf16>
    tpu.vector_store %arg8[%c8_324, %c80_325], %367 {strides = array<i32>} : memref<400x640xbf16, #tpu.memory_space<vmem>>, vector<8x80xbf16>,
    %369 = vector.extract_strided_slice %364 {offsets = [0, 2], sizes = [8, 80], strides = [1, 1]} : vector<8x110xbf16> to vector<8x80xbf16>
    %c16_326 = arith.constant 16 : index
    %c80_327 = arith.constant 80 : index
    %370 = vector.load %arg8[%c16_326, %c80_327] : memref<400x640xbf16, #tpu.memory_space<vmem>>, vector<8x80xbf16>
    tpu.vector_store %arg8[%c16_326, %c80_327], %369 {strides = array<i32>} : memref<400x640xbf16, #tpu.memory_space<vmem>>, vector<8x80xbf16>,
    %371 = vector.extract_strided_slice %364 {offsets = [0, 10], sizes = [8, 80], strides = [1, 1]} : vector<8x110xbf16> to vector<8x80xbf16>
    %c24_328 = arith.constant 24 : index
    %c80_329 = arith.constant 80 : index
    %372 = vector.load %arg8[%c24_328, %c80_329] : memref<400x640xbf16, #tpu.memory_space<vmem>>, vector<8x80xbf16>
    tpu.vector_store %arg8[%c24_328, %c80_329], %371 {strides = array<i32>} : memref<400x640xbf16, #tpu.memory_space<vmem>>, vector<8x80xbf16>,
    %373 = vector.extract_strided_slice %364 {offsets = [0, 11], sizes = [8, 80], strides = [1, 1]} : vector<8x110xbf16> to vector<8x80xbf16>
    %c32_330 = arith.constant 32 : index
    %c80_331 = arith.constant 80 : index
    %374 = vector.load %arg8[%c32_330, %c80_331] : memref<400x640xbf16, #tpu.memory_space<vmem>>, vector<8x80xbf16>
    tpu.vector_store %arg8[%c32_330, %c80_331], %373 {strides = array<i32>} : memref<400x640xbf16, #tpu.memory_space<vmem>>, vector<8x80xbf16>,
    %375 = vector.extract_strided_slice %364 {offsets = [0, 12], sizes = [8, 80], strides = [1, 1]} : vector<8x110xbf16> to vector<8x80xbf16>
    %c40_332 = arith.constant 40 : index
    %c80_333 = arith.constant 80 : index
    %376 = vector.load %arg8[%c40_332, %c80_333] : memref<400x640xbf16, #tpu.memory_space<vmem>>, vector<8x80xbf16>
    tpu.vector_store %arg8[%c40_332, %c80_333], %375 {strides = array<i32>} : memref<400x640xbf16, #tpu.memory_space<vmem>>, vector<8x80xbf16>,
    %377 = vector.extract_strided_slice %364 {offsets = [0, 20], sizes = [8, 80], strides = [1, 1]} : vector<8x110xbf16> to vector<8x80xbf16>
    %c48_334 = arith.constant 48 : index
    %c80_335 = arith.constant 80 : index
    %378 = vector.load %arg8[%c48_334, %c80_335] : memref<400x640xbf16, #tpu.memory_space<vmem>>, vector<8x80xbf16>
    tpu.vector_store %arg8[%c48_334, %c80_335], %377 {strides = array<i32>} : memref<400x640xbf16, #tpu.memory_space<vmem>>, vector<8x80xbf16>,
    %379 = vector.extract_strided_slice %364 {offsets = [0, 21], sizes = [8, 80], strides = [1, 1]} : vector<8x110xbf16> to vector<8x80xbf16>
    %c56_336 = arith.constant 56 : index
    %c80_337 = arith.constant 80 : index
    %380 = vector.load %arg8[%c56_336, %c80_337] : memref<400x640xbf16, #tpu.memory_space<vmem>>, vector<8x80xbf16>
    tpu.vector_store %arg8[%c56_336, %c80_337], %379 {strides = array<i32>} : memref<400x640xbf16, #tpu.memory_space<vmem>>, vector<8x80xbf16>,
    %381 = vector.extract_strided_slice %364 {offsets = [0, 22], sizes = [8, 80], strides = [1, 1]} : vector<8x110xbf16> to vector<8x80xbf16>
    %c64_338 = arith.constant 64 : index
    %c80_339 = arith.constant 80 : index
    %382 = vector.load %arg8[%c64_338, %c80_339] : memref<400x640xbf16, #tpu.memory_space<vmem>>, vector<8x80xbf16>
    tpu.vector_store %arg8[%c64_338, %c80_339], %381 {strides = array<i32>} : memref<400x640xbf16, #tpu.memory_space<vmem>>, vector<8x80xbf16>,
    %c56_340 = arith.constant 56 : index
    %c0_341 = arith.constant 0 : index
    %383 = vector.load %arg4[%c56_340, %c0_341] : memref<80x400xbf16, #tpu.memory_space<vmem>>, vector<16x72xbf16>
    %c56_342 = arith.constant 56 : index
    %c0_343 = arith.constant 0 : index
    %384 = vector.load %arg5[%c56_342, %c0_343] : memref<80x1xf32, #tpu.memory_space<vmem>>, vector<16x1xf32>
    %c0_344 = arith.constant 0 : index
    %c0_345 = arith.constant 0 : index
    %385 = vector.load %arg8[%c0_344, %c0_345] : memref<400x640xbf16, #tpu.memory_space<vmem>>, vector<72x160xbf16>
    %cst_346 = arith.constant dense<0.000000e+00> : vector<16x160xf32>
    %386 = tpu.matmul %383, %385, %cst_346 {dimension_numbers = #tpu.dot_dimension_numbers<[1], [0], [0], [1], [0, 0, 1, 1], [], []>} : vector<16x72xbf16>, vector<72x160xbf16>, vector<16x160xf32> -> vector<16x160xf32>
    %387 = vector.broadcast %384 : vector<16x1xf32> to vector<16x160xf32>
    %388 = arith.addf %386, %387 : vector<16x160xf32>
    %cst_347 = arith.constant 0.000000e+00 : f32
    %389 = vector.broadcast %cst_347 : f32 to vector<16x160xf32>
    %390 = arith.maximumf %388, %389 : vector<16x160xf32>
    %c72 = arith.constant 72 : index
    %c0_348 = arith.constant 0 : index
    %391 = vector.load %arg4[%c72, %c0_348] : memref<80x400xbf16, #tpu.memory_space<vmem>>, vector<3x16xbf16>
    %392 = arith.truncf %390 : vector<16x160xf32> to vector<16x160xbf16>
    %cst_349 = arith.constant dense<0.000000e+00> : vector<3x160xf32>
    %393 = tpu.matmul %391, %392, %cst_349 {dimension_numbers = #tpu.dot_dimension_numbers<[1], [0], [0], [1], [0, 0, 1, 1], [], []>} : vector<3x16xbf16>, vector<16x160xbf16>, vector<3x160xf32> -> vector<3x160xf32>
    %c72_350 = arith.constant 72 : index
    %c0_351 = arith.constant 0 : index
    %394 = vector.load %arg5[%c72_350, %c0_351] : memref<80x1xf32, #tpu.memory_space<vmem>>, vector<3x1xf32>
    %395 = vector.broadcast %394 : vector<3x1xf32> to vector<3x160xf32>
    %396 = arith.addf %393, %395 : vector<3x160xf32>
    %397 = vector.extract_strided_slice %396 {offsets = [0, 0], sizes = [1, 160], strides = [1, 1]} : vector<3x160xf32> to vector<1x160xf32>
    %398 = vector.extract_strided_slice %396 {offsets = [1, 0], sizes = [1, 160], strides = [1, 1]} : vector<3x160xf32> to vector<1x160xf32>
    %399 = vector.extract_strided_slice %396 {offsets = [2, 0], sizes = [1, 160], strides = [1, 1]} : vector<3x160xf32> to vector<1x160xf32>
    %400 = arith.maximumf %397, %398 : vector<1x160xf32>
    %401 = arith.maximumf %400, %399 : vector<1x160xf32>
    %402 = arith.subf %397, %401 : vector<1x160xf32>
    %403 = math.exp %402 : vector<1x160xf32>
    %404 = arith.subf %398, %401 : vector<1x160xf32>
    %405 = math.exp %404 : vector<1x160xf32>
    %406 = arith.subf %399, %401 : vector<1x160xf32>
    %407 = math.exp %406 : vector<1x160xf32>
    %408 = arith.addf %403, %405 : vector<1x160xf32>
    %409 = arith.addf %408, %407 : vector<1x160xf32>
    %cst_352 = arith.constant 1.000000e+00 : f32
    %410 = vector.broadcast %cst_352 : f32 to vector<1x160xf32>
    %411 = arith.divf %410, %409 : vector<1x160xf32>
    %412 = arith.mulf %403, %411 : vector<1x160xf32>
    %413 = vector.broadcast %412 : vector<1x160xf32> to vector<8x160xf32>
    %414 = arith.mulf %413, %175 : vector<8x160xf32>
    %415 = arith.mulf %405, %411 : vector<1x160xf32>
    %416 = vector.broadcast %415 : vector<1x160xf32> to vector<8x160xf32>
    %417 = arith.mulf %416, %223 : vector<8x160xf32>
    %418 = arith.addf %414, %417 : vector<8x160xf32>
    %419 = arith.mulf %407, %411 : vector<1x160xf32>
    %420 = vector.broadcast %419 : vector<1x160xf32> to vector<8x160xf32>
    %421 = arith.mulf %420, %322 : vector<8x160xf32>
    %422 = arith.addf %418, %421 : vector<8x160xf32>
    %423 = vector.shape_cast %422 : vector<8x160xf32> to vector<8x16x10xf32>
    %424 = vector.extract_strided_slice %423 {offsets = [0, 0, 0], sizes = [8, 16, 8], strides = [1, 1, 1]} : vector<8x16x10xf32> to vector<8x16x8xf32>
    %425 = vector.shape_cast %424 : vector<8x16x8xf32> to vector<8x128xf32>
    %c0_353 = arith.constant 0 : index
    %c0_354 = arith.constant 0 : index
    %c0_355 = arith.constant 0 : index
    %426 = vector.load %arg7[%c0_353, %c0_354, %c0_355] : memref<1x8x128xf32, #tpu.memory_space<vmem>>, vector<1x8x128xf32>
    %427 = vector.shape_cast %426 : vector<1x8x128xf32> to vector<8x128xf32>
    %428 = vector.shape_cast %425 : vector<8x128xf32> to vector<1x8x128xf32>
    tpu.vector_store %arg7[%c0_353, %c0_354, %c0_355], %428 {strides = array<i32>} : memref<1x8x128xf32, #tpu.memory_space<vmem>>, vector<1x8x128xf32>,
    return
  }
  func.func @transform_0(%arg0: i32) -> (i32, i32, i32) {
    %c0_i32 = arith.constant 0 : i32
    %c0_i32_0 = arith.constant 0 : i32
    %c0_i32_1 = arith.constant 0 : i32
    return %arg0, %c0_i32, %c0_i32_0 : i32, i32, i32
  }
  func.func @transform_1(%arg0: i32) -> (i32, i32, i32) {
    %c0_i32 = arith.constant 0 : i32
    %c0_i32_0 = arith.constant 0 : i32
    %c0_i32_1 = arith.constant 0 : i32
    return %arg0, %c0_i32, %c0_i32_0 : i32, i32, i32
  }
  func.func @transform_2(%arg0: i32) -> (i32, i32, i32) {
    %c0_i32 = arith.constant 0 : i32
    %c0_i32_0 = arith.constant 0 : i32
    %c0_i32_1 = arith.constant 0 : i32
    return %arg0, %c0_i32, %c0_i32_0 : i32, i32, i32
  }
  func.func @transform_3(%arg0: i32) -> (i32, i32) {
    %c0_i32 = arith.constant 0 : i32
    %c0_i32_0 = arith.constant 0 : i32
    %c0_i32_1 = arith.constant 0 : i32
    return %c0_i32, %c0_i32_0 : i32, i32
  }
  func.func @transform_4(%arg0: i32) -> (i32, i32) {
    %c0_i32 = arith.constant 0 : i32
    %c0_i32_0 = arith.constant 0 : i32
    %c0_i32_1 = arith.constant 0 : i32
    return %c0_i32, %c0_i32_0 : i32, i32
  }
  func.func @transform_5(%arg0: i32) -> (i32, i32) {
    %c0_i32 = arith.constant 0 : i32
    %c0_i32_0 = arith.constant 0 : i32
    %c0_i32_1 = arith.constant 0 : i32
    return %c0_i32, %c0_i32_0 : i32, i32
  }
  func.func @transform_6(%arg0: i32) -> (i32, i32, i32) {
    %c0_i32 = arith.constant 0 : i32
    %c0_i32_0 = arith.constant 0 : i32
    %c0_i32_1 = arith.constant 0 : i32
    return %arg0, %c0_i32, %c0_i32_0 : i32, i32, i32
  }
}

</mosaic_0001>

<llo_original>
// kernel: siu_forward.1
$region0: #{siu_forward.1}
  #allocation0 [shape = 'u32[]', space=smem, size = 0x4, offset = 0x4, fixed_abs, tag = 'smem constant byte address 0x4 - core index']
  #allocation1 [shape = 'u32[144,128]{1,0:T(1,128)}', space=vmem, size = 0x12000, scoped, tag = 'internal scratch']
  #allocation2 [shape = 'bf16[400,640]{1,0:T(16,128)(2,1)}', space=vmem, size = 0x7d000, scoped, tag = 'scratch operand']
  #allocation3 [shape = 'bf16[16,220]{1,0:T(16,128)(2,1)}', space=vmem, size = 0x2000, scoped, tag = 'scratch operand']
  %s0 = inlined_call_operand.vmem [shape: bf16[2,16,420], index: 0, kind: input, shape index: {}]
  %s1 = inlined_call_operand.vmem [shape: bf16[2,8,110], index: 1, kind: input, shape index: {}]
  %s2 = inlined_call_operand.vmem [shape: bf16[2,8,42], index: 2, kind: input, shape index: {}]
  %s3 = inlined_call_operand.vmem [shape: bf16[80,400], index: 3, kind: input, shape index: {}]
  %s4 = inlined_call_operand.vmem [shape: f32[80,1], index: 4, kind: input, shape index: {}]
  %s5 = inlined_call_operand.vmem [shape: bf16[832,220], index: 5, kind: input, shape index: {}]
  %s6 = inlined_call_operand.vmem [shape: f32[1,8,128], index: 6, kind: output, shape index: {}]
  %s7 = sld [smem:[#allocation0]]
  $region34: #{siu_forward.1} parent=0
    _
  %s9 = ssub.s32 1, %s7
  %s10 = scalar_select 0, %s9, %s7
  // Predicated region
  $region2: #{siu_forward.1} parent=0 // pred_check
    _
  $region3: #{siu_forward.1} parent=0 // pred_check_branch
    %12 = sbr.rel (0) target = $region5
  $region4: #{siu_forward.1} parent=0 // pred_region
    _
  $region5: #{siu_forward.1} parent=0 // pred_fallthru
    _
  // Predicated region
  $region6: #{siu_forward.1} parent=0 // pred_check
    _
  $region7: #{siu_forward.1} parent=0 // pred_check_branch
    %14 = sbr.rel (0) target = $region9
  $region8: #{siu_forward.1} parent=0 // pred_region
    _
  $region9: #{siu_forward.1} parent=0 // pred_fallthru
    _
  // Predicated region
  $region10: #{siu_forward.1} parent=0 // pred_check
    _
  $region11: #{siu_forward.1} parent=0 // pred_check_branch
    %16 = sbr.rel (0) target = $region13
  $region12: #{siu_forward.1} parent=0 // pred_region
    _
  $region13: #{siu_forward.1} parent=0 // pred_fallthru
    _
  // Predicated region
  $region14: #{siu_forward.1} parent=0 // pred_check
    _
  $region15: #{siu_forward.1} parent=0 // pred_check_branch
    %18 = sbr.rel (0) target = $region17
  $region16: #{siu_forward.1} parent=0 // pred_region
    _
  $region17: #{siu_forward.1} parent=0 // pred_fallthru
    _
  // Predicated region
  $region18: #{siu_forward.1} parent=0 // pred_check
    _
  $region19: #{siu_forward.1} parent=0 // pred_check_branch
    %20 = sbr.rel (0) target = $region21
  $region20: #{siu_forward.1} parent=0 // pred_region
    _
  $region21: #{siu_forward.1} parent=0 // pred_fallthru
    _
  // Predicated region
  $region22: #{siu_forward.1} parent=0 // pred_check
    _
  $region23: #{siu_forward.1} parent=0 // pred_check_branch
    %22 = sbr.rel (0) target = $region25
  $region24: #{siu_forward.1} parent=0 // pred_region
    _
  $region25: #{siu_forward.1} parent=0 // pred_fallthru
    _
  %v24 = vld [vmem:[%s0] sm:$0xff]
  %v25 = vld [vmem:[%s0 + $0x8] sm:$0xff]
  %v26 = vld [vmem:[%s0 + $0x10] sm:$0xff]
  %v27 = vld [vmem:[%s0 + $0x18] sm:$0xff]
  %v32 = vunpack.c.l.b16 %v24
  %v33 = vunpack.c.h.b16 %v24
  %v34 = vunpack.c.l.b16 %v25
  %v35 = vunpack.c.l.b16 %v26
  %v36 = vunpack.c.h.b16 %v26
  %v37 = vunpack.c.l.b16 %v27
  %v38 = vpack.c.b16 %v35, %v32
  %v39 = vpack.c.b16 %v36, %v33
  %v40 = vpack.c.b16 %v37, %v34
  %44 = vst [vmem:[#allocation2] sm:$0xff] %v38
  %45 = vst [vmem:[#allocation2 + $0x8] sm:$0xff] %v39
  %vm46 = vcmask 523264
  %47 = vst.msk [vmem:[#allocation2 + $0x10] sm:$0xff] %vm46, %v40
  %48 = vrot.lane.b32.xlu0 %v38, 127
  %v49 = vpop.permute.xlu0 %48
  %50 = vrot.lane.b32.xlu0 %v39, 127
  %v51 = vpop.permute.xlu0 %50
  %52 = vrot.lane.b32.xlu0 %v40, 127
  %v53 = vpop.permute.xlu0 %52
  %vm54 = vcmask 1039360
  %v55 = vsel %vm54, %v49, %v51
  %v56 = vsel %vm54, %v51, %v53
  %60 = vst [vmem:[#allocation2 + $0x28] sm:$0xff] %v55
  %61 = vst [vmem:[#allocation2 + $0x30] sm:$0xff] %v56
  %62 = vst.msk [vmem:[#allocation2 + $0x38] sm:$0xff] %vm46, %v53
  %63 = vrot.lane.b32.xlu0 %v38, 126
  %v64 = vpop.permute.xlu0 %63
  %65 = vrot.lane.b32.xlu0 %v39, 126
  %v66 = vpop.permute.xlu0 %65
  %67 = vrot.lane.b32.xlu0 %v40, 126
  %v68 = vpop.permute.xlu0 %67
  %vm69 = vcmask 1031168
  %v70 = vsel %vm69, %v64, %v66
  %v71 = vsel %vm69, %v66, %v68
  %75 = vst [vmem:[#allocation2 + $0x50] sm:$0xff] %v70
  %76 = vst [vmem:[#allocation2 + $0x58] sm:$0xff] %v71
  %77 = vst.msk [vmem:[#allocation2 + $0x60] sm:$0xff] %vm46, %v68
  %78 = vrot.lane.b32.xlu0 %v38, 125
  %v79 = vpop.permute.xlu0 %78
  %80 = vrot.lane.b32.xlu0 %v39, 125
  %v81 = vpop.permute.xlu0 %80
  %82 = vrot.lane.b32.xlu0 %v40, 125
  %v83 = vpop.permute.xlu0 %82
  %vm84 = vcmask 1022976
  %v85 = vsel %vm84, %v79, %v81
  %v86 = vsel %vm84, %v81, %v83
  %90 = vst [vmem:[#allocation2 + $0x78] sm:$0xff] %v85
  %91 = vst [vmem:[#allocation2 + $0x80] sm:$0xff] %v86
  %92 = vst.msk [vmem:[#allocation2 + $0x88] sm:$0xff] %vm46, %v83
  %93 = vrot.lane.b32.xlu0 %v38, 124
  %v94 = vpop.permute.xlu0 %93
  %95 = vrot.lane.b32.xlu0 %v39, 124
  %v96 = vpop.permute.xlu0 %95
  %97 = vrot.lane.b32.xlu0 %v40, 124
  %v98 = vpop.permute.xlu0 %97
  %vm99 = vcmask 1014784
  %v100 = vsel %vm99, %v94, %v96
  %v101 = vsel %vm99, %v96, %v98
  %105 = vst [vmem:[#allocation2 + $0xa0] sm:$0xff] %v100
  %106 = vst [vmem:[#allocation2 + $0xa8] sm:$0xff] %v101
  %107 = vst.msk [vmem:[#allocation2 + $0xb0] sm:$0xff] %vm46, %v98
  %108 = vrot.lane.b32.xlu0 %v38, 108
  %v109 = vpop.permute.xlu0 %108
  %110 = vrot.lane.b32.xlu0 %v39, 108
  %v111 = vpop.permute.xlu0 %110
  %112 = vrot.lane.b32.xlu0 %v40, 108
  %v113 = vpop.permute.xlu0 %112
  %vm114 = vcmask 883712
  %v115 = vsel %vm114, %v109, %v111
  %v116 = vsel %vm114, %v111, %v113
  %120 = vst [vmem:[#allocation2 + $0xc8] sm:$0xff] %v115
  %121 = vst [vmem:[#allocation2 + $0xd0] sm:$0xff] %v116
  %122 = vst.msk [vmem:[#allocation2 + $0xd8] sm:$0xff] %vm46, %v113
  %123 = vrot.lane.b32.xlu0 %v38, 107
  %v124 = vpop.permute.xlu0 %123
  %125 = vrot.lane.b32.xlu0 %v39, 107
  %v126 = vpop.permute.xlu0 %125
  %127 = vrot.lane.b32.xlu0 %v40, 107
  %v128 = vpop.permute.xlu0 %127
  %vm129 = vcmask 875520
  %v130 = vsel %vm129, %v124, %v126
  %v131 = vsel %vm129, %v126, %v128
  %135 = vst [vmem:[#allocation2 + $0xf0] sm:$0xff] %v130
  %136 = vst [vmem:[#allocation2 + $0xf8] sm:$0xff] %v131
  %137 = vst.msk [vmem:[#allocation2 + $0x100] sm:$0xff] %vm46, %v128
  %138 = vrot.lane.b32.xlu0 %v38, 106
  %v139 = vpop.permute.xlu0 %138
  %140 = vrot.lane.b32.xlu0 %v39, 106
  %v141 = vpop.permute.xlu0 %140
  %142 = vrot.lane.b32.xlu0 %v40, 106
  %v143 = vpop.permute.xlu0 %142
  %vm144 = vcmask 867328
  %v145 = vsel %vm144, %v139, %v141
  %v146 = vsel %vm144, %v141, %v143
  %150 = vst [vmem:[#allocation2 + $0x118] sm:$0xff] %v145
  %151 = vst [vmem:[#allocation2 + $0x120] sm:$0xff] %v146
  %152 = vst.msk [vmem:[#allocation2 + $0x128] sm:$0xff] %vm46, %v143
  %153 = vrot.lane.b32.xlu0 %v38, 105
  %v154 = vpop.permute.xlu0 %153
  %155 = vrot.lane.b32.xlu0 %v39, 105
  %v156 = vpop.permute.xlu0 %155
  %157 = vrot.lane.b32.xlu0 %v40, 105
  %v158 = vpop.permute.xlu0 %157
  %vm159 = vcmask 859136
  %v160 = vsel %vm159, %v154, %v156
  %v161 = vsel %vm159, %v156, %v158
  %165 = vst [vmem:[#allocation2 + $0x140] sm:$0xff] %v160
  %166 = vst [vmem:[#allocation2 + $0x148] sm:$0xff] %v161
  %167 = vst.msk [vmem:[#allocation2 + $0x150] sm:$0xff] %vm46, %v158
  %168 = vrot.lane.b32.xlu0 %v38, 104
  %v169 = vpop.permute.xlu0 %168
  %170 = vrot.lane.b32.xlu0 %v39, 104
  %v171 = vpop.permute.xlu0 %170
  %172 = vrot.lane.b32.xlu0 %v40, 104
  %v173 = vpop.permute.xlu0 %172
  %vm174 = vcmask 850944
  %v175 = vsel %vm174, %v169, %v171
  %v176 = vsel %vm174, %v171, %v173
  %180 = vst [vmem:[#allocation2 + $0x168] sm:$0xff] %v175
  %181 = vst [vmem:[#allocation2 + $0x170] sm:$0xff] %v176
  %182 = vst.msk [vmem:[#allocation2 + $0x178] sm:$0xff] %vm46, %v173
  %183 = vrot.lane.b32.xlu0 %v38, 88
  %v184 = vpop.permute.xlu0 %183
  %185 = vrot.lane.b32.xlu0 %v39, 88
  %v186 = vpop.permute.xlu0 %185
  %187 = vrot.lane.b32.xlu0 %v40, 88
  %v188 = vpop.permute.xlu0 %187
  %vm189 = vcmask 719872
  %v190 = vsel %vm189, %v184, %v186
  %v191 = vsel %vm189, %v186, %v188
  %195 = vst [vmem:[#allocation2 + $0x190] sm:$0xff] %v190
  %196 = vst [vmem:[#allocation2 + $0x198] sm:$0xff] %v191
  %197 = vst.msk [vmem:[#allocation2 + $0x1a0] sm:$0xff] %vm46, %v188
  %198 = vrot.lane.b32.xlu0 %v38, 87
  %v199 = vpop.permute.xlu0 %198
  %200 = vrot.lane.b32.xlu0 %v39, 87
  %v201 = vpop.permute.xlu0 %200
  %202 = vrot.lane.b32.xlu0 %v40, 87
  %v203 = vpop.permute.xlu0 %202
  %vm204 = vcmask 711680
  %v205 = vsel %vm204, %v199, %v201
  %v206 = vsel %vm204, %v201, %v203
  %210 = vst [vmem:[#allocation2 + $0x1b8] sm:$0xff] %v205
  %211 = vst [vmem:[#allocation2 + $0x1c0] sm:$0xff] %v206
  %212 = vst.msk [vmem:[#allocation2 + $0x1c8] sm:$0xff] %vm46, %v203
  %213 = vrot.lane.b32.xlu0 %v38, 86
  %v214 = vpop.permute.xlu0 %213
  %215 = vrot.lane.b32.xlu0 %v39, 86
  %v216 = vpop.permute.xlu0 %215
  %217 = vrot.lane.b32.xlu0 %v40, 86
  %v218 = vpop.permute.xlu0 %217
  %vm219 = vcmask 703488
  %v220 = vsel %vm219, %v214, %v216
  %v221 = vsel %vm219, %v216, %v218
  %225 = vst [vmem:[#allocation2 + $0x1e0] sm:$0xff] %v220
  %226 = vst [vmem:[#allocation2 + $0x1e8] sm:$0xff] %v221
  %227 = vst.msk [vmem:[#allocation2 + $0x1f0] sm:$0xff] %vm46, %v218
  %228 = vrot.lane.b32.xlu0 %v38, 85
  %v229 = vpop.permute.xlu0 %228
  %230 = vrot.lane.b32.xlu0 %v39, 85
  %v231 = vpop.permute.xlu0 %230
  %232 = vrot.lane.b32.xlu0 %v40, 85
  %v233 = vpop.permute.xlu0 %232
  %vm234 = vcmask 695296
  %v235 = vsel %vm234, %v229, %v231
  %v236 = vsel %vm234, %v231, %v233
  %240 = vst [vmem:[#allocation2 + $0x208] sm:$0xff] %v235
  %241 = vst [vmem:[#allocation2 + $0x210] sm:$0xff] %v236
  %242 = vst.msk [vmem:[#allocation2 + $0x218] sm:$0xff] %vm46, %v233
  %243 = vrot.lane.b32.xlu0 %v38, 84
  %v244 = vpop.permute.xlu0 %243
  %245 = vrot.lane.b32.xlu0 %v39, 84
  %v246 = vpop.permute.xlu0 %245
  %247 = vrot.lane.b32.xlu0 %v40, 84
  %v248 = vpop.permute.xlu0 %247
  %vm249 = vcmask 687104
  %v250 = vsel %vm249, %v244, %v246
  %v251 = vsel %vm249, %v246, %v248
  %255 = vst [vmem:[#allocation2 + $0x230] sm:$0xff] %v250
  %256 = vst [vmem:[#allocation2 + $0x238] sm:$0xff] %v251
  %257 = vst.msk [vmem:[#allocation2 + $0x240] sm:$0xff] %vm46, %v248
  %258 = vrot.lane.b32.xlu0 %v38, 68
  %v259 = vpop.permute.xlu0 %258
  %260 = vrot.lane.b32.xlu0 %v39, 68
  %v261 = vpop.permute.xlu0 %260
  %262 = vrot.lane.b32.xlu0 %v40, 68
  %v263 = vpop.permute.xlu0 %262
  %vm264 = vcmask 556032
  %v265 = vsel %vm264, %v259, %v261
  %v266 = vsel %vm264, %v261, %v263
  %270 = vst [vmem:[#allocation2 + $0x258] sm:$0xff] %v265
  %271 = vst [vmem:[#allocation2 + $0x260] sm:$0xff] %v266
  %272 = vst.msk [vmem:[#allocation2 + $0x268] sm:$0xff] %vm46, %v263
  %273 = vrot.lane.b32.xlu0 %v38, 67
  %v274 = vpop.permute.xlu0 %273
  %275 = vrot.lane.b32.xlu0 %v39, 67
  %v276 = vpop.permute.xlu0 %275
  %277 = vrot.lane.b32.xlu0 %v40, 67
  %v278 = vpop.permute.xlu0 %277
  %vm279 = vcmask 547840
  %v280 = vsel %vm279, %v274, %v276
  %v281 = vsel %vm279, %v276, %v278
  %285 = vst [vmem:[#allocation2 + $0x280] sm:$0xff] %v280
  %286 = vst [vmem:[#allocation2 + $0x288] sm:$0xff] %v281
  %287 = vst.msk [vmem:[#allocation2 + $0x290] sm:$0xff] %vm46, %v278
  %288 = vrot.lane.b32.xlu0 %v38, 66
  %v289 = vpop.permute.xlu0 %288
  %290 = vrot.lane.b32.xlu0 %v39, 66
  %v291 = vpop.permute.xlu0 %290
  %292 = vrot.lane.b32.xlu0 %v40, 66
  %v293 = vpop.permute.xlu0 %292
  %vm294 = vcmask 539648
  %v295 = vsel %vm294, %v289, %v291
  %v296 = vsel %vm294, %v291, %v293
  %300 = vst [vmem:[#allocation2 + $0x2a8] sm:$0xff] %v295
  %301 = vst [vmem:[#allocation2 + $0x2b0] sm:$0xff] %v296
  %302 = vst.msk [vmem:[#allocation2 + $0x2b8] sm:$0xff] %vm46, %v293
  %303 = vrot.lane.b32.xlu0 %v38, 65
  %v304 = vpop.permute.xlu0 %303
  %305 = vrot.lane.b32.xlu0 %v39, 65
  %v306 = vpop.permute.xlu0 %305
  %307 = vrot.lane.b32.xlu0 %v40, 65
  %v308 = vpop.permute.xlu0 %307
  %vm309 = vcmask 531456
  %v310 = vsel %vm309, %v304, %v306
  %v311 = vsel %vm309, %v306, %v308
  %315 = vst [vmem:[#allocation2 + $0x2d0] sm:$0xff] %v310
  %316 = vst [vmem:[#allocation2 + $0x2d8] sm:$0xff] %v311
  %317 = vst.msk [vmem:[#allocation2 + $0x2e0] sm:$0xff] %vm46, %v308
  %318 = vrot.lane.b32.xlu0 %v38, 64
  %v319 = vpop.permute.xlu0 %318
  %320 = vrot.lane.b32.xlu0 %v39, 64
  %v321 = vpop.permute.xlu0 %320
  %322 = vrot.lane.b32.xlu0 %v40, 64
  %v323 = vpop.permute.xlu0 %322
  %vm324 = vcmask 523264
  %v325 = vsel %vm324, %v319, %v321
  %v326 = vsel %vm324, %v321, %v323
  %330 = vst [vmem:[#allocation2 + $0x2f8] sm:$0xff] %v325
  %331 = vst [vmem:[#allocation2 + $0x300] sm:$0xff] %v326
  %332 = vst.msk [vmem:[#allocation2 + $0x308] sm:$0xff] %vm46, %v323
  %v333 = vunpack.c.h.b16 %v25
  %v334 = vunpack.c.h.b16 %v27
  %v335 = vpack.c.b16 %v334, %v333
  %336 = vrot.lane.b32.xlu0 %v38, 48
  %v337 = vpop.permute.xlu0 %336
  %338 = vrot.lane.b32.xlu0 %v39, 48
  %v339 = vpop.permute.xlu0 %338
  %340 = vrot.lane.b32.xlu0 %v40, 48
  %v341 = vpop.permute.xlu0 %340
  %342 = vrot.lane.b32.xlu0 %v335, 48
  %v343 = vpop.permute.xlu0 %342
  %vm344 = vcmask 392192
  %v345 = vsel %vm344, %v337, %v339
  %v346 = vsel %vm344, %v339, %v341
  %v347 = vsel %vm344, %v341, %v343
  %351 = vst [vmem:[#allocation2 + $0x320] sm:$0xff] %v345
  %352 = vst [vmem:[#allocation2 + $0x328] sm:$0xff] %v346
  %353 = vst.msk [vmem:[#allocation2 + $0x330] sm:$0xff] %vm46, %v347
  %354 = vrot.lane.b32.xlu0 %v38, 47
  %v355 = vpop.permute.xlu0 %354
  %356 = vrot.lane.b32.xlu0 %v39, 47
  %v357 = vpop.permute.xlu0 %356
  %358 = vrot.lane.b32.xlu0 %v40, 47
  %v359 = vpop.permute.xlu0 %358
  %360 = vrot.lane.b32.xlu0 %v335, 47
  %v361 = vpop.permute.xlu0 %360
  %vm362 = vcmask 384000
  %v363 = vsel %vm362, %v355, %v357
  %v364 = vsel %vm362, %v357, %v359
  %v365 = vsel %vm362, %v359, %v361
  %369 = vst [vmem:[#allocation2 + $0x348] sm:$0xff] %v363
  %370 = vst [vmem:[#allocation2 + $0x350] sm:$0xff] %v364
  %371 = vst.msk [vmem:[#allocation2 + $0x358] sm:$0xff] %vm46, %v365
  %372 = vrot.lane.b32.xlu0 %v38, 46
  %v373 = vpop.permute.xlu0 %372
  %374 = vrot.lane.b32.xlu0 %v39, 46
  %v375 = vpop.permute.xlu0 %374
  %376 = vrot.lane.b32.xlu0 %v40, 46
  %v377 = vpop.permute.xlu0 %376
  %378 = vrot.lane.b32.xlu0 %v335, 46
  %v379 = vpop.permute.xlu0 %378
  %vm380 = vcmask 375808
  %v381 = vsel %vm380, %v373, %v375
  %v382 = vsel %vm380, %v375, %v377
  %v383 = vsel %vm380, %v377, %v379
  %387 = vst [vmem:[#allocation2 + $0x370] sm:$0xff] %v381
  %388 = vst [vmem:[#allocation2 + $0x378] sm:$0xff] %v382
  %389 = vst.msk [vmem:[#allocation2 + $0x380] sm:$0xff] %vm46, %v383
  %390 = vrot.lane.b32.xlu0 %v38, 45
  %v391 = vpop.permute.xlu0 %390
  %392 = vrot.lane.b32.xlu0 %v39, 45
  %v393 = vpop.permute.xlu0 %392
  %394 = vrot.lane.b32.xlu0 %v40, 45
  %v395 = vpop.permute.xlu0 %394
  %396 = vrot.lane.b32.xlu0 %v335, 45
  %v397 = vpop.permute.xlu0 %396
  %vm398 = vcmask 367616
  %v399 = vsel %vm398, %v391, %v393
  %v400 = vsel %vm398, %v393, %v395
  %v401 = vsel %vm398, %v395, %v397
  %405 = vst [vmem:[#allocation2 + $0x398] sm:$0xff] %v399
  %406 = vst [vmem:[#allocation2 + $0x3a0] sm:$0xff] %v400
  %407 = vst.msk [vmem:[#allocation2 + $0x3a8] sm:$0xff] %vm46, %v401
  %408 = vrot.lane.b32.xlu0 %v38, 44
  %v409 = vpop.permute.xlu0 %408
  %410 = vrot.lane.b32.xlu0 %v39, 44
  %v411 = vpop.permute.xlu0 %410
  %412 = vrot.lane.b32.xlu0 %v40, 44
  %v413 = vpop.permute.xlu0 %412
  %414 = vrot.lane.b32.xlu0 %v335, 44
  %v415 = vpop.permute.xlu0 %414
  %vm416 = vcmask 359424
  %v417 = vsel %vm416, %v409, %v411
  %v418 = vsel %vm416, %v411, %v413
  %v419 = vsel %vm416, %v413, %v415
  %423 = vst [vmem:[#allocation2 + $0x3c0] sm:$0xff] %v417
  %424 = vst [vmem:[#allocation2 + $0x3c8] sm:$0xff] %v418
  %425 = vst.msk [vmem:[#allocation2 + $0x3d0] sm:$0xff] %vm46, %v419
  %s426 = scalar_lea.vmem %s0, 32
  %v427 = vld [vmem:[%s426] sm:$0xff]
  %v428 = vld [vmem:[%s426 + $0x8] sm:$0xff]
  %v429 = vld [vmem:[%s426 + $0x10] sm:$0xff]
  %v430 = vld [vmem:[%s426 + $0x18] sm:$0xff]
  %v435 = vunpack.c.l.b16 %v427
  %v436 = vunpack.c.h.b16 %v427
  %v437 = vunpack.c.l.b16 %v428
  %v438 = vunpack.c.l.b16 %v429
  %v439 = vunpack.c.h.b16 %v429
  %v440 = vunpack.c.l.b16 %v430
  %v441 = vpack.c.b16 %v438, %v435
  %v442 = vpack.c.b16 %v439, %v436
  %v443 = vpack.c.b16 %v440, %v437
  %444 = vrot.lane.b32.xlu0 %v441, 64
  %v445 = vpop.permute.xlu0 %444
  %446 = vrot.lane.b32.xlu0 %v442, 64
  %v447 = vpop.permute.xlu0 %446
  %448 = vrot.lane.b32.xlu0 %v443, 64
  %v449 = vpop.permute.xlu0 %448
  %v450 = vsel %vm324, %v445, %v447
  %v451 = vsel %vm324, %v447, %v449
  %vm455 = vcmask 1048064
  %456 = vst.msk [vmem:[#allocation2 + $0x10] sm:$0xff] %vm455, %v445
  %457 = vst [vmem:[#allocation2 + $0x18] sm:$0xff] %v450
  %458 = vst [vmem:[#allocation2 + $0x20] sm:$0xff] %v451
  %459 = vrot.lane.b32.xlu0 %v441, 63
  %v460 = vpop.permute.xlu0 %459
  %461 = vrot.lane.b32.xlu0 %v442, 63
  %v462 = vpop.permute.xlu0 %461
  %463 = vrot.lane.b32.xlu0 %v443, 63
  %v464 = vpop.permute.xlu0 %463
  %vm465 = vcmask 515072
  %v466 = vsel %vm465, %v460, %v462
  %v467 = vsel %vm465, %v462, %v464
  %471 = vst.msk [vmem:[#allocation2 + $0x38] sm:$0xff] %vm455, %v460
  %472 = vst [vmem:[#allocation2 + $0x40] sm:$0xff] %v466
  %473 = vst [vmem:[#allocation2 + $0x48] sm:$0xff] %v467
  %474 = vrot.lane.b32.xlu0 %v441, 62
  %v475 = vpop.permute.xlu0 %474
  %476 = vrot.lane.b32.xlu0 %v442, 62
  %v477 = vpop.permute.xlu0 %476
  %478 = vrot.lane.b32.xlu0 %v443, 62
  %v479 = vpop.permute.xlu0 %478
  %vm480 = vcmask 506880
  %v481 = vsel %vm480, %v475, %v477
  %v482 = vsel %vm480, %v477, %v479
  %486 = vst.msk [vmem:[#allocation2 + $0x60] sm:$0xff] %vm455, %v475
  %487 = vst [vmem:[#allocation2 + $0x68] sm:$0xff] %v481
  %488 = vst [vmem:[#allocation2 + $0x70] sm:$0xff] %v482
  %489 = vrot.lane.b32.xlu0 %v441, 61
  %v490 = vpop.permute.xlu0 %489
  %491 = vrot.lane.b32.xlu0 %v442, 61
  %v492 = vpop.permute.xlu0 %491
  %493 = vrot.lane.b32.xlu0 %v443, 61
  %v494 = vpop.permute.xlu0 %493
  %vm495 = vcmask 498688
  %v496 = vsel %vm495, %v490, %v492
  %v497 = vsel %vm495, %v492, %v494
  %501 = vst.msk [vmem:[#allocation2 + $0x88] sm:$0xff] %vm455, %v490
  %502 = vst [vmem:[#allocation2 + $0x90] sm:$0xff] %v496
  %503 = vst [vmem:[#allocation2 + $0x98] sm:$0xff] %v497
  %504 = vrot.lane.b32.xlu0 %v441, 60
  %v505 = vpop.permute.xlu0 %504
  %506 = vrot.lane.b32.xlu0 %v442, 60
  %v507 = vpop.permute.xlu0 %506
  %508 = vrot.lane.b32.xlu0 %v443, 60
  %v509 = vpop.permute.xlu0 %508
  %vm510 = vcmask 490496
  %v511 = vsel %vm510, %v505, %v507
  %v512 = vsel %vm510, %v507, %v509
  %516 = vst.msk [vmem:[#allocation2 + $0xb0] sm:$0xff] %vm455, %v505
  %517 = vst [vmem:[#allocation2 + $0xb8] sm:$0xff] %v511
  %518 = vst [vmem:[#allocation2 + $0xc0] sm:$0xff] %v512
  %519 = vrot.lane.b32.xlu0 %v441, 44
  %v520 = vpop.permute.xlu0 %519
  %521 = vrot.lane.b32.xlu0 %v442, 44
  %v522 = vpop.permute.xlu0 %521
  %523 = vrot.lane.b32.xlu0 %v443, 44
  %v524 = vpop.permute.xlu0 %523
  %v525 = vsel %vm416, %v520, %v522
  %v526 = vsel %vm416, %v522, %v524
  %530 = vst.msk [vmem:[#allocation2 + $0xd8] sm:$0xff] %vm455, %v520
  %531 = vst [vmem:[#allocation2 + $0xe0] sm:$0xff] %v525
  %532 = vst [vmem:[#allocation2 + $0xe8] sm:$0xff] %v526
  %533 = vrot.lane.b32.xlu0 %v441, 43
  %v534 = vpop.permute.xlu0 %533
  %535 = vrot.lane.b32.xlu0 %v442, 43
  %v536 = vpop.permute.xlu0 %535
  %537 = vrot.lane.b32.xlu0 %v443, 43
  %v538 = vpop.permute.xlu0 %537
  %vm539 = vcmask 351232
  %v540 = vsel %vm539, %v534, %v536
  %v541 = vsel %vm539, %v536, %v538
  %545 = vst.msk [vmem:[#allocation2 + $0x100] sm:$0xff] %vm455, %v534
  %546 = vst [vmem:[#allocation2 + $0x108] sm:$0xff] %v540
  %547 = vst [vmem:[#allocation2 + $0x110] sm:$0xff] %v541
  %548 = vrot.lane.b32.xlu0 %v441, 42
  %v549 = vpop.permute.xlu0 %548
  %550 = vrot.lane.b32.xlu0 %v442, 42
  %v551 = vpop.permute.xlu0 %550
  %552 = vrot.lane.b32.xlu0 %v443, 42
  %v553 = vpop.permute.xlu0 %552
  %vm554 = vcmask 343040
  %v555 = vsel %vm554, %v549, %v551
  %v556 = vsel %vm554, %v551, %v553
  %560 = vst.msk [vmem:[#allocation2 + $0x128] sm:$0xff] %vm455, %v549
  %561 = vst [vmem:[#allocation2 + $0x130] sm:$0xff] %v555
  %562 = vst [vmem:[#allocation2 + $0x138] sm:$0xff] %v556
  %563 = vrot.lane.b32.xlu0 %v441, 41
  %v564 = vpop.permute.xlu0 %563
  %565 = vrot.lane.b32.xlu0 %v442, 41
  %v566 = vpop.permute.xlu0 %565
  %567 = vrot.lane.b32.xlu0 %v443, 41
  %v568 = vpop.permute.xlu0 %567
  %vm569 = vcmask 334848
  %v570 = vsel %vm569, %v564, %v566
  %v571 = vsel %vm569, %v566, %v568
  %575 = vst.msk [vmem:[#allocation2 + $0x150] sm:$0xff] %vm455, %v564
  %576 = vst [vmem:[#allocation2 + $0x158] sm:$0xff] %v570
  %577 = vst [vmem:[#allocation2 + $0x160] sm:$0xff] %v571
  %578 = vrot.lane.b32.xlu0 %v441, 40
  %v579 = vpop.permute.xlu0 %578
  %580 = vrot.lane.b32.xlu0 %v442, 40
  %v581 = vpop.permute.xlu0 %580
  %582 = vrot.lane.b32.xlu0 %v443, 40
  %v583 = vpop.permute.xlu0 %582
  %vm584 = vcmask 326656
  %v585 = vsel %vm584, %v579, %v581
  %v586 = vsel %vm584, %v581, %v583
  %590 = vst.msk [vmem:[#allocation2 + $0x178] sm:$0xff] %vm455, %v579
  %591 = vst [vmem:[#allocation2 + $0x180] sm:$0xff] %v585
  %592 = vst [vmem:[#allocation2 + $0x188] sm:$0xff] %v586
  %593 = vrot.lane.b32.xlu0 %v441, 24
  %v594 = vpop.permute.xlu0 %593
  %595 = vrot.lane.b32.xlu0 %v442, 24
  %v596 = vpop.permute.xlu0 %595
  %597 = vrot.lane.b32.xlu0 %v443, 24
  %v598 = vpop.permute.xlu0 %597
  %vm599 = vcmask 195584
  %v600 = vsel %vm599, %v594, %v596
  %v601 = vsel %vm599, %v596, %v598
  %605 = vst.msk [vmem:[#allocation2 + $0x1a0] sm:$0xff] %vm455, %v594
  %606 = vst [vmem:[#allocation2 + $0x1a8] sm:$0xff] %v600
  %607 = vst [vmem:[#allocation2 + $0x1b0] sm:$0xff] %v601
  %608 = vrot.lane.b32.xlu0 %v441, 23
  %v609 = vpop.permute.xlu0 %608
  %610 = vrot.lane.b32.xlu0 %v442, 23
  %v611 = vpop.permute.xlu0 %610
  %612 = vrot.lane.b32.xlu0 %v443, 23
  %v613 = vpop.permute.xlu0 %612
  %vm614 = vcmask 187392
  %v615 = vsel %vm614, %v609, %v611
  %v616 = vsel %vm614, %v611, %v613
  %620 = vst.msk [vmem:[#allocation2 + $0x1c8] sm:$0xff] %vm455, %v609
  %621 = vst [vmem:[#allocation2 + $0x1d0] sm:$0xff] %v615
  %622 = vst [vmem:[#allocation2 + $0x1d8] sm:$0xff] %v616
  %623 = vrot.lane.b32.xlu0 %v441, 22
  %v624 = vpop.permute.xlu0 %623
  %625 = vrot.lane.b32.xlu0 %v442, 22
  %v626 = vpop.permute.xlu0 %625
  %627 = vrot.lane.b32.xlu0 %v443, 22
  %v628 = vpop.permute.xlu0 %627
  %vm629 = vcmask 179200
  %v630 = vsel %vm629, %v624, %v626
  %v631 = vsel %vm629, %v626, %v628
  %635 = vst.msk [vmem:[#allocation2 + $0x1f0] sm:$0xff] %vm455, %v624
  %636 = vst [vmem:[#allocation2 + $0x1f8] sm:$0xff] %v630
  %637 = vst [vmem:[#allocation2 + $0x200] sm:$0xff] %v631
  %638 = vrot.lane.b32.xlu0 %v441, 21
  %v639 = vpop.permute.xlu0 %638
  %640 = vrot.lane.b32.xlu0 %v442, 21
  %v641 = vpop.permute.xlu0 %640
  %642 = vrot.lane.b32.xlu0 %v443, 21
  %v643 = vpop.permute.xlu0 %642
  %vm644 = vcmask 171008
  %v645 = vsel %vm644, %v639, %v641
  %v646 = vsel %vm644, %v641, %v643
  %650 = vst.msk [vmem:[#allocation2 + $0x218] sm:$0xff] %vm455, %v639
  %651 = vst [vmem:[#allocation2 + $0x220] sm:$0xff] %v645
  %652 = vst [vmem:[#allocation2 + $0x228] sm:$0xff] %v646
  %653 = vrot.lane.b32.xlu0 %v441, 20
  %v654 = vpop.permute.xlu0 %653
  %655 = vrot.lane.b32.xlu0 %v442, 20
  %v656 = vpop.permute.xlu0 %655
  %657 = vrot.lane.b32.xlu0 %v443, 20
  %v658 = vpop.permute.xlu0 %657
  %vm659 = vcmask 162816
  %v660 = vsel %vm659, %v654, %v656
  %v661 = vsel %vm659, %v656, %v658
  %665 = vst.msk [vmem:[#allocation2 + $0x240] sm:$0xff] %vm455, %v654
  %666 = vst [vmem:[#allocation2 + $0x248] sm:$0xff] %v660
  %667 = vst [vmem:[#allocation2 + $0x250] sm:$0xff] %v661
  %668 = vrot.lane.b32.xlu0 %v441, 4
  %v669 = vpop.permute.xlu0 %668
  %670 = vrot.lane.b32.xlu0 %v442, 4
  %v671 = vpop.permute.xlu0 %670
  %672 = vrot.lane.b32.xlu0 %v443, 4
  %v673 = vpop.permute.xlu0 %672
  %vm674 = vcmask 31744
  %v675 = vsel %vm674, %v669, %v671
  %v676 = vsel %vm674, %v671, %v673
  %680 = vst.msk [vmem:[#allocation2 + $0x268] sm:$0xff] %vm455, %v669
  %681 = vst [vmem:[#allocation2 + $0x270] sm:$0xff] %v675
  %682 = vst [vmem:[#allocation2 + $0x278] sm:$0xff] %v676
  %683 = vrot.lane.b32.xlu0 %v441, 3
  %v684 = vpop.permute.xlu0 %683
  %685 = vrot.lane.b32.xlu0 %v442, 3
  %v686 = vpop.permute.xlu0 %685
  %687 = vrot.lane.b32.xlu0 %v443, 3
  %v688 = vpop.permute.xlu0 %687
  %vm689 = vcmask 23552
  %v690 = vsel %vm689, %v684, %v686
  %v691 = vsel %vm689, %v686, %v688
  %695 = vst.msk [vmem:[#allocation2 + $0x290] sm:$0xff] %vm455, %v684
  %696 = vst [vmem:[#allocation2 + $0x298] sm:$0xff] %v690
  %697 = vst [vmem:[#allocation2 + $0x2a0] sm:$0xff] %v691
  %698 = vrot.lane.b32.xlu0 %v441, 2
  %v699 = vpop.permute.xlu0 %698
  %700 = vrot.lane.b32.xlu0 %v442, 2
  %v701 = vpop.permute.xlu0 %700
  %702 = vrot.lane.b32.xlu0 %v443, 2
  %v703 = vpop.permute.xlu0 %702
  %vm704 = vcmask 15360
  %v705 = vsel %vm704, %v699, %v701
  %v706 = vsel %vm704, %v701, %v703
  %710 = vst.msk [vmem:[#allocation2 + $0x2b8] sm:$0xff] %vm455, %v699
  %711 = vst [vmem:[#allocation2 + $0x2c0] sm:$0xff] %v705
  %712 = vst [vmem:[#allocation2 + $0x2c8] sm:$0xff] %v706
  %713 = vrot.lane.b32.xlu0 %v441, 1
  %v714 = vpop.permute.xlu0 %713
  %715 = vrot.lane.b32.xlu0 %v442, 1
  %v716 = vpop.permute.xlu0 %715
  %717 = vrot.lane.b32.xlu0 %v443, 1
  %v718 = vpop.permute.xlu0 %717
  %vm719 = vcmask 7168
  %v720 = vsel %vm719, %v714, %v716
  %v721 = vsel %vm719, %v716, %v718
  %725 = vst.msk [vmem:[#allocation2 + $0x2e0] sm:$0xff] %vm455, %v714
  %726 = vst [vmem:[#allocation2 + $0x2e8] sm:$0xff] %v720
  %727 = vst [vmem:[#allocation2 + $0x2f0] sm:$0xff] %v721
  %731 = vst.msk [vmem:[#allocation2 + $0x308] sm:$0xff] %vm455, %v441
  %732 = vst [vmem:[#allocation2 + $0x310] sm:$0xff] %v442
  %733 = vst [vmem:[#allocation2 + $0x318] sm:$0xff] %v443
  %v734 = vunpack.c.h.b16 %v428
  %v735 = vunpack.c.h.b16 %v430
  %v736 = vpack.c.b16 %v735, %v734
  %737 = vrot.lane.b32.xlu0 %v441, 112
  %v738 = vpop.permute.xlu0 %737
  %739 = vrot.lane.b32.xlu0 %v442, 112
  %v740 = vpop.permute.xlu0 %739
  %741 = vrot.lane.b32.xlu0 %v443, 112
  %v742 = vpop.permute.xlu0 %741
  %743 = vrot.lane.b32.xlu0 %v736, 112
  %v744 = vpop.permute.xlu0 %743
  %vm745 = vcmask 916480
  %v746 = vsel %vm745, %v738, %v740
  %v747 = vsel %vm745, %v740, %v742
  %v748 = vsel %vm745, %v742, %v744
  %752 = vst.msk [vmem:[#allocation2 + $0x330] sm:$0xff] %vm455, %v746
  %753 = vst [vmem:[#allocation2 + $0x338] sm:$0xff] %v747
  %754 = vst [vmem:[#allocation2 + $0x340] sm:$0xff] %v748
  %755 = vrot.lane.b32.xlu0 %v441, 111
  %v756 = vpop.permute.xlu0 %755
  %757 = vrot.lane.b32.xlu0 %v442, 111
  %v758 = vpop.permute.xlu0 %757
  %759 = vrot.lane.b32.xlu0 %v443, 111
  %v760 = vpop.permute.xlu0 %759
  %761 = vrot.lane.b32.xlu0 %v736, 111
  %v762 = vpop.permute.xlu0 %761
  %vm763 = vcmask 908288
  %v764 = vsel %vm763, %v756, %v758
  %v765 = vsel %vm763, %v758, %v760
  %v766 = vsel %vm763, %v760, %v762
  %770 = vst.msk [vmem:[#allocation2 + $0x358] sm:$0xff] %vm455, %v764
  %771 = vst [vmem:[#allocation2 + $0x360] sm:$0xff] %v765
  %772 = vst [vmem:[#allocation2 + $0x368] sm:$0xff] %v766
  %773 = vrot.lane.b32.xlu0 %v441, 110
  %v774 = vpop.permute.xlu0 %773
  %775 = vrot.lane.b32.xlu0 %v442, 110
  %v776 = vpop.permute.xlu0 %775
  %777 = vrot.lane.b32.xlu0 %v443, 110
  %v778 = vpop.permute.xlu0 %777
  %779 = vrot.lane.b32.xlu0 %v736, 110
  %v780 = vpop.permute.xlu0 %779
  %vm781 = vcmask 900096
  %v782 = vsel %vm781, %v774, %v776
  %v783 = vsel %vm781, %v776, %v778
  %v784 = vsel %vm781, %v778, %v780
  %788 = vst.msk [vmem:[#allocation2 + $0x380] sm:$0xff] %vm455, %v782
  %789 = vst [vmem:[#allocation2 + $0x388] sm:$0xff] %v783
  %790 = vst [vmem:[#allocation2 + $0x390] sm:$0xff] %v784
  %791 = vrot.lane.b32.xlu0 %v441, 109
  %v792 = vpop.permute.xlu0 %791
  %793 = vrot.lane.b32.xlu0 %v442, 109
  %v794 = vpop.permute.xlu0 %793
  %795 = vrot.lane.b32.xlu0 %v443, 109
  %v796 = vpop.permute.xlu0 %795
  %797 = vrot.lane.b32.xlu0 %v736, 109
  %v798 = vpop.permute.xlu0 %797
  %vm799 = vcmask 891904
  %v800 = vsel %vm799, %v792, %v794
  %v801 = vsel %vm799, %v794, %v796
  %v802 = vsel %vm799, %v796, %v798
  %806 = vst.msk [vmem:[#allocation2 + $0x3a8] sm:$0xff] %vm455, %v800
  %807 = vst [vmem:[#allocation2 + $0x3b0] sm:$0xff] %v801
  %808 = vst [vmem:[#allocation2 + $0x3b8] sm:$0xff] %v802
  %809 = vrot.lane.b32.xlu0 %v441, 108
  %v810 = vpop.permute.xlu0 %809
  %811 = vrot.lane.b32.xlu0 %v442, 108
  %v812 = vpop.permute.xlu0 %811
  %813 = vrot.lane.b32.xlu0 %v443, 108
  %v814 = vpop.permute.xlu0 %813
  %815 = vrot.lane.b32.xlu0 %v736, 108
  %v816 = vpop.permute.xlu0 %815
  %v817 = vsel %vm114, %v810, %v812
  %v818 = vsel %vm114, %v812, %v814
  %v819 = vsel %vm114, %v814, %v816
  %823 = vst.msk [vmem:[#allocation2 + $0x3d0] sm:$0xff] %vm455, %v817
  %824 = vst [vmem:[#allocation2 + $0x3d8] sm:$0xff] %v818
  %825 = vst [vmem:[#allocation2 + $0x3e0] sm:$0xff] %v819
  %v826 = vld [vmem:[%s3] sm:$0xff]
  %v827 = vld [vmem:[%s3 + $0x8] sm:$0xff]
  %v828 = vld [vmem:[%s3 + $0x10] sm:$0xff]
  %v829 = vld [vmem:[%s3 + $0x18] sm:$0xff]
  %v830 = vld [vmem:[%s4] sm:$0xff]
  %v831 = vld [vmem:[%s4 + $0x8] sm:$0xff]
  %v832 = vld [vmem:[#allocation2] sm:$0xff]
  %v833 = vld [vmem:[#allocation2 + $0x8] sm:$0xff]
  %v834 = vld [vmem:[#allocation2 + $0x10] sm:$0xff]
  %v835 = vld [vmem:[#allocation2 + $0x18] sm:$0xff]
  %v836 = vld [vmem:[#allocation2 + $0x20] sm:$0xff]
  %v837 = vld [vmem:[#allocation2 + $0x28] sm:$0xff]
  %v838 = vld [vmem:[#allocation2 + $0x30] sm:$0xff]
  %v839 = vld [vmem:[#allocation2 + $0x38] sm:$0xff]
  %v840 = vld [vmem:[#allocation2 + $0x40] sm:$0xff]
  %v841 = vld [vmem:[#allocation2 + $0x48] sm:$0xff]
  %v842 = vld [vmem:[#allocation2 + $0x50] sm:$0xff]
  %v843 = vld [vmem:[#allocation2 + $0x58] sm:$0xff]
  %v844 = vld [vmem:[#allocation2 + $0x60] sm:$0xff]
  %v845 = vld [vmem:[#allocation2 + $0x68] sm:$0xff]
  %v846 = vld [vmem:[#allocation2 + $0x70] sm:$0xff]
  %v847 = vld [vmem:[#allocation2 + $0x78] sm:$0xff]
  %v848 = vld [vmem:[#allocation2 + $0x80] sm:$0xff]
  %v849 = vld [vmem:[#allocation2 + $0x88] sm:$0xff]
  %v850 = vld [vmem:[#allocation2 + $0x90] sm:$0xff]
  %v851 = vld [vmem:[#allocation2 + $0x98] sm:$0xff]
  %v852 = vld [vmem:[#allocation2 + $0xa0] sm:$0xff]
  %v853 = vld [vmem:[#allocation2 + $0xa8] sm:$0xff]
  %v854 = vld [vmem:[#allocation2 + $0xb0] sm:$0xff]
  %v855 = vld [vmem:[#allocation2 + $0xb8] sm:$0xff]
  %v856 = vld [vmem:[#allocation2 + $0xc0] sm:$0xff]
  %v857 = vld [vmem:[#allocation2 + $0xc8] sm:$0xff]
  %v858 = vld [vmem:[#allocation2 + $0xd0] sm:$0xff]
  %v859 = vld [vmem:[#allocation2 + $0xd8] sm:$0xff]
  %v860 = vld [vmem:[#allocation2 + $0xe0] sm:$0xff]
  %v861 = vld [vmem:[#allocation2 + $0xe8] sm:$0xff]
  %v862 = vld [vmem:[#allocation2 + $0xf0] sm:$0xff]
  %v863 = vld [vmem:[#allocation2 + $0xf8] sm:$0xff]
  %v864 = vld [vmem:[#allocation2 + $0x100] sm:$0xff]
  %v865 = vld [vmem:[#allocation2 + $0x108] sm:$0xff]
  %v866 = vld [vmem:[#allocation2 + $0x110] sm:$0xff]
  %v867 = vld [vmem:[#allocation2 + $0x118] sm:$0xff]
  %v868 = vld [vmem:[#allocation2 + $0x120] sm:$0xff]
  %v869 = vld [vmem:[#allocation2 + $0x128] sm:$0xff]
  %v870 = vld [vmem:[#allocation2 + $0x130] sm:$0xff]
  %v871 = vld [vmem:[#allocation2 + $0x138] sm:$0xff]
  %v872 = vld [vmem:[#allocation2 + $0x140] sm:$0xff]
  %v873 = vld [vmem:[#allocation2 + $0x148] sm:$0xff]
  %v874 = vld [vmem:[#allocation2 + $0x150] sm:$0xff]
  %v875 = vld [vmem:[#allocation2 + $0x158] sm:$0xff]
  %v876 = vld [vmem:[#allocation2 + $0x160] sm:$0xff]
  %v877 = vld [vmem:[#allocation2 + $0x168] sm:$0xff]
  %v878 = vld [vmem:[#allocation2 + $0x170] sm:$0xff]
  %v879 = vld [vmem:[#allocation2 + $0x178] sm:$0xff]
  %v880 = vld [vmem:[#allocation2 + $0x180] sm:$0xff]
  %v881 = vld [vmem:[#allocation2 + $0x188] sm:$0xff]
  %v882 = vld [vmem:[#allocation2 + $0x190] sm:$0xff]
  %v883 = vld [vmem:[#allocation2 + $0x198] sm:$0xff]
  %v884 = vld [vmem:[#allocation2 + $0x1a0] sm:$0xff]
  %v885 = vld [vmem:[#allocation2 + $0x1a8] sm:$0xff]
  %v886 = vld [vmem:[#allocation2 + $0x1b0] sm:$0xff]
  %v887 = vld [vmem:[#allocation2 + $0x1b8] sm:$0xff]
  %v888 = vld [vmem:[#allocation2 + $0x1c0] sm:$0xff]
  %v889 = vld [vmem:[#allocation2 + $0x1c8] sm:$0xff]
  %v890 = vld [vmem:[#allocation2 + $0x1d0] sm:$0xff]
  %v891 = vld [vmem:[#allocation2 + $0x1d8] sm:$0xff]
  %v892 = vld [vmem:[#allocation2 + $0x1e0] sm:$0xff]
  %v893 = vld [vmem:[#allocation2 + $0x1e8] sm:$0xff]
  %v894 = vld [vmem:[#allocation2 + $0x1f0] sm:$0xff]
  %v895 = vld [vmem:[#allocation2 + $0x1f8] sm:$0xff]
  %v896 = vld [vmem:[#allocation2 + $0x200] sm:$0xff]
  %v897 = vld [vmem:[#allocation2 + $0x208] sm:$0xff]
  %v898 = vld [vmem:[#allocation2 + $0x210] sm:$0xff]
  %v899 = vld [vmem:[#allocation2 + $0x218] sm:$0xff]
  %v900 = vld [vmem:[#allocation2 + $0x220] sm:$0xff]
  %v901 = vld [vmem:[#allocation2 + $0x228] sm:$0xff]
  %v902 = vld [vmem:[#allocation2 + $0x230] sm:$0xff]
  %v903 = vld [vmem:[#allocation2 + $0x238] sm:$0xff]
  %v904 = vld [vmem:[#allocation2 + $0x240] sm:$0xff]
  %v905 = vld [vmem:[#allocation2 + $0x248] sm:$0xff]
  %v906 = vld [vmem:[#allocation2 + $0x250] sm:$0xff]
  %v907 = vld [vmem:[#allocation2 + $0x258] sm:$0xff]
  %v908 = vld [vmem:[#allocation2 + $0x260] sm:$0xff]
  %v909 = vld [vmem:[#allocation2 + $0x268] sm:$0xff]
  %v910 = vld [vmem:[#allocation2 + $0x270] sm:$0xff]
  %v911 = vld [vmem:[#allocation2 + $0x278] sm:$0xff]
  %v912 = vld [vmem:[#allocation2 + $0x280] sm:$0xff]
  %v913 = vld [vmem:[#allocation2 + $0x288] sm:$0xff]
  %v914 = vld [vmem:[#allocation2 + $0x290] sm:$0xff]
  %v915 = vld [vmem:[#allocation2 + $0x298] sm:$0xff]
  %v916 = vld [vmem:[#allocation2 + $0x2a0] sm:$0xff]
  %v917 = vld [vmem:[#allocation2 + $0x2a8] sm:$0xff]
  %v918 = vld [vmem:[#allocation2 + $0x2b0] sm:$0xff]
  %v919 = vld [vmem:[#allocation2 + $0x2b8] sm:$0xff]
  %v920 = vld [vmem:[#allocation2 + $0x2c0] sm:$0xff]
  %v921 = vld [vmem:[#allocation2 + $0x2c8] sm:$0xff]
  %v922 = vld [vmem:[#allocation2 + $0x2d0] sm:$0xff]
  %v923 = vld [vmem:[#allocation2 + $0x2d8] sm:$0xff]
  %v924 = vld [vmem:[#allocation2 + $0x2e0] sm:$0xff]
  %v925 = vld [vmem:[#allocation2 + $0x2e8] sm:$0xff]
  %v926 = vld [vmem:[#allocation2 + $0x2f0] sm:$0xff]
  %v927 = vld [vmem:[#allocation2 + $0x2f8] sm:$0xff]
  %v928 = vld [vmem:[#allocation2 + $0x300] sm:$0xff]
  %v929 = vld [vmem:[#allocation2 + $0x308] sm:$0xff]
  %v930 = vld [vmem:[#allocation2 + $0x310] sm:$0xff]
  %v931 = vld [vmem:[#allocation2 + $0x318] sm:$0xff]
  %v932 = vld [vmem:[#allocation2 + $0x320] sm:$0xff]
  %v933 = vld [vmem:[#allocation2 + $0x328] sm:$0xff]
  %v934 = vld [vmem:[#allocation2 + $0x330] sm:$0xff]
  %v935 = vld [vmem:[#allocation2 + $0x338] sm:$0xff]
  %v936 = vld [vmem:[#allocation2 + $0x340] sm:$0xff]
  %v937 = vld [vmem:[#allocation2 + $0x348] sm:$0xff]
  %v938 = vld [vmem:[#allocation2 + $0x350] sm:$0xff]
  %v939 = vld [vmem:[#allocation2 + $0x358] sm:$0xff]
  %v940 = vld [vmem:[#allocation2 + $0x360] sm:$0xff]
  %v941 = vld [vmem:[#allocation2 + $0x368] sm:$0xff]
  %v942 = vld [vmem:[#allocation2 + $0x370] sm:$0xff]
  %v943 = vld [vmem:[#allocation2 + $0x378] sm:$0xff]
  %v944 = vld [vmem:[#allocation2 + $0x380] sm:$0xff]
  %v945 = vld [vmem:[#allocation2 + $0x388] sm:$0xff]
  %v946 = vld [vmem:[#allocation2 + $0x390] sm:$0xff]
  %v947 = vld [vmem:[#allocation2 + $0x398] sm:$0xff]
  %v948 = vld [vmem:[#allocation2 + $0x3a0] sm:$0xff]
  %v949 = vld [vmem:[#allocation2 + $0x3a8] sm:$0xff]
  %v950 = vld [vmem:[#allocation2 + $0x3b0] sm:$0xff]
  %v951 = vld [vmem:[#allocation2 + $0x3b8] sm:$0xff]
  %v952 = vld [vmem:[#allocation2 + $0x3c0] sm:$0xff]
  %v953 = vld [vmem:[#allocation2 + $0x3c8] sm:$0xff]
  %v954 = vld [vmem:[#allocation2 + $0x3d0] sm:$0xff]
  %v955 = vld [vmem:[#allocation2 + $0x3d8] sm:$0xff]
  %v956 = vld [vmem:[#allocation2 + $0x3e0] sm:$0xff]
  %958 = vset.pattern.permute.xlu0 0
  %959 = vperm.xlu0 %958, %v830
  %v960 = vpop.permute.xlu0 %959
  %963 = vset.pattern.permute.xlu0 0
  %964 = vperm.xlu0 %963, %v831
  %v965 = vpop.permute.xlu0 %964
  %v971 = vunpack.c.l.b16 %v826
  %v972 = vunpack.c.h.b16 %v826
  %v973 = vunpack.c.l.b16 %v827
  %v974 = vunpack.c.h.b16 %v827
  %v975 = vunpack.c.l.b16 %v828
  %v976 = vunpack.c.h.b16 %v828
  %v977 = vunpack.c.l.b16 %v829
  %v978 = vunpack.c.h.b16 %v829
  %v979 = vpack.c.b16 %v975, %v971
  %v980 = vpack.c.b16 %v976, %v972
  %v981 = vpack.c.b16 %v977, %v973
  %v982 = vpack.c.b16 %v978, %v974
  %vm986 = vcmask 130048
  %v988 = vsel %vm986, %v982, 0
  %990 = vmatprep.subr.bf16.mxu0 %v833
  %991 = vmatpush1.bf16.msra.mxu0 %v832
  %992 = vmatprep.subr.bf16.mxu0 %v838
  %993 = vmatpush1.bf16.msra.mxu0 %v837
  %994 = vmatprep.subr.bf16.mxu0 %v843
  %995 = vmatpush1.bf16.msra.mxu0 %v842
  %996 = vmatprep.subr.bf16.mxu0 %v848
  %997 = vmatpush1.bf16.msra.mxu0 %v847
  %998 = vmatprep.subr.bf16.mxu0 %v853
  %999 = vmatpush1.bf16.msra.mxu0 %v852
  %1000 = vmatprep.subr.bf16.mxu0 %v858
  %1001 = vmatpush1.bf16.msra.mxu0 %v857
  %1002 = vmatprep.subr.bf16.mxu0 %v863
  %1003 = vmatpush1.bf16.msra.mxu0 %v862
  %1004 = vmatprep.subr.bf16.mxu0 %v868
  %1005 = vmatpush1.bf16.msra.mxu0 %v867
  %1006 = vmatprep.subr.bf16.mxu0 %v873
  %1007 = vmatpush1.bf16.msra.mxu0 %v872
  %1008 = vmatprep.subr.bf16.mxu0 %v878
  %1009 = vmatpush1.bf16.msra.mxu0 %v877
  %1010 = vmatprep.subr.bf16.mxu0 %v883
  %1011 = vmatpush1.bf16.msra.mxu0 %v882
  %1012 = vmatprep.subr.bf16.mxu0 %v888
  %1013 = vmatpush1.bf16.msra.mxu0 %v887
  %1014 = vmatprep.subr.bf16.mxu0 %v893
  %1015 = vmatpush1.bf16.msra.mxu0 %v892
  %1016 = vmatprep.subr.bf16.mxu0 %v898
  %1017 = vmatpush1.bf16.msra.mxu0 %v897
  %1018 = vmatprep.subr.bf16.mxu0 %v903
  %1019 = vmatpush1.bf16.msra.mxu0 %v902
  %1020 = vmatprep.subr.bf16.mxu0 %v908
  %1021 = vmatpush1.bf16.msra.mxu0 %v907
  %1022 = vmatprep.mubr.bf16.mxu0 %v980
  %1023 = vmatmul.mubr.bf16.gmra.mrb[0].mxu0 %v979
  %v1024 = vpop.f32.mrb[0].mxu0
  %v1025 = vadd.f32 %v960, %v1024
  %v1026 = vpop.f32.mrb[0].mxu0
  %v1027 = vadd.f32 %v960, %v1026
  %v1028 = vpop.f32.mrb[0].mxu0
  %v1029 = vadd.f32 %v965, %v1028
  %v1030 = vpop.f32.mrb[0].mxu0
  %v1031 = vadd.f32 %v965, %v1030
  %1032 = vdwg.mxu0
  %1033 = vmatprep.subr.bf16.mxu0 %v913
  %1034 = vmatpush1.bf16.msra.mxu0 %v912
  %1035 = vmatprep.subr.bf16.mxu0 %v918
  %1036 = vmatpush1.bf16.msra.mxu0 %v917
  %1037 = vmatprep.subr.bf16.mxu0 %v923
  %1038 = vmatpush1.bf16.msra.mxu0 %v922
  %1039 = vmatprep.subr.bf16.mxu0 %v928
  %1040 = vmatpush1.bf16.msra.mxu0 %v927
  %1041 = vmatprep.subr.bf16.mxu0 %v933
  %1042 = vmatpush1.bf16.msra.mxu0 %v932
  %1043 = vmatprep.subr.bf16.mxu0 %v938
  %1044 = vmatpush1.bf16.msra.mxu0 %v937
  %1045 = vmatprep.subr.bf16.mxu0 %v943
  %1046 = vmatpush1.bf16.msra.mxu0 %v942
  %1047 = vmatprep.subr.bf16.mxu0 %v948
  %1048 = vmatpush1.bf16.msra.mxu0 %v947
  %1049 = vmatprep.subr.bf16.mxu0 %v953
  %1050 = vmatpush1.bf16.msra.mxu0 %v952
  %1051 = vmatprep.subr.bf16.mxu0 0
  %1052 = vmatpush1.bf16.msra.mxu0 0
  %1053 = vmatprep.subr.bf16.mxu0 0
  %1054 = vmatpush1.bf16.msra.mxu0 0
  %1055 = vmatprep.subr.bf16.mxu0 0
  %1056 = vmatpush1.bf16.msra.mxu0 0
  %1057 = vmatprep.subr.bf16.mxu0 0
  %1058 = vmatpush1.bf16.msra.mxu0 0
  %1059 = vmatprep.subr.bf16.mxu0 0
  %1060 = vmatpush1.bf16.msra.mxu0 0
  %1061 = vmatprep.subr.bf16.mxu0 0
  %1062 = vmatpush1.bf16.msra.mxu0 0
  %1063 = vmatprep.subr.bf16.mxu0 0
  %1064 = vmatpush1.bf16.msra.mxu0 0
  %1065 = vmatprep.mubr.bf16.mxu0 %v988
  %1066 = vmatmul.mubr.bf16.gmra.mrb[0].mxu0 %v981
  %v1067 = vpop.f32.mrb[0].mxu0
  %v1068 = vadd.f32 %v1025, %v1067
  %v1069 = vpop.f32.mrb[0].mxu0
  %v1070 = vadd.f32 %v1027, %v1069
  %v1071 = vpop.f32.mrb[0].mxu0
  %v1072 = vadd.f32 %v1029, %v1071
  %v1073 = vpop.f32.mrb[0].mxu0
  %v1074 = vadd.f32 %v1031, %v1073
  %1075 = vdwg.mxu0
  %1076 = vmatprep.subr.bf16.mxu0 %v835
  %1077 = vmatpush1.bf16.msra.mxu0 %v834
  %1078 = vmatprep.subr.bf16.mxu0 %v840
  %1079 = vmatpush1.bf16.msra.mxu0 %v839
  %1080 = vmatprep.subr.bf16.mxu0 %v845
  %1081 = vmatpush1.bf16.msra.mxu0 %v844
  %1082 = vmatprep.subr.bf16.mxu0 %v850
  %1083 = vmatpush1.bf16.msra.mxu0 %v849
  %1084 = vmatprep.subr.bf16.mxu0 %v855
  %1085 = vmatpush1.bf16.msra.mxu0 %v854
  %1086 = vmatprep.subr.bf16.mxu0 %v860
  %1087 = vmatpush1.bf16.msra.mxu0 %v859
  %1088 = vmatprep.subr.bf16.mxu0 %v865
  %1089 = vmatpush1.bf16.msra.mxu0 %v864
  %1090 = vmatprep.subr.bf16.mxu0 %v870
  %1091 = vmatpush1.bf16.msra.mxu0 %v869
  %1092 = vmatprep.subr.bf16.mxu0 %v875
  %1093 = vmatpush1.bf16.msra.mxu0 %v874
  %1094 = vmatprep.subr.bf16.mxu0 %v880
  %1095 = vmatpush1.bf16.msra.mxu0 %v879
  %1096 = vmatprep.subr.bf16.mxu0 %v885
  %1097 = vmatpush1.bf16.msra.mxu0 %v884
  %1098 = vmatprep.subr.bf16.mxu0 %v890
  %1099 = vmatpush1.bf16.msra.mxu0 %v889
  %1100 = vmatprep.subr.bf16.mxu0 %v895
  %1101 = vmatpush1.bf16.msra.mxu0 %v894
  %1102 = vmatprep.subr.bf16.mxu0 %v900
  %1103 = vmatpush1.bf16.msra.mxu0 %v899
  %1104 = vmatprep.subr.bf16.mxu0 %v905
  %1105 = vmatpush1.bf16.msra.mxu0 %v904
  %1106 = vmatprep.subr.bf16.mxu0 %v910
  %1107 = vmatpush1.bf16.msra.mxu0 %v909
  %1108 = vmatprep.mubr.bf16.mxu0 %v980
  %1109 = vmatmul.mubr.bf16.gmra.mrb[0].mxu0 %v979
  %v1110 = vpop.f32.mrb[0].mxu0
  %v1111 = vadd.f32 %v960, %v1110
  %v1112 = vpop.f32.mrb[0].mxu0
  %v1113 = vadd.f32 %v960, %v1112
  %v1114 = vpop.f32.mrb[0].mxu0
  %v1115 = vadd.f32 %v965, %v1114
  %v1116 = vpop.f32.mrb[0].mxu0
  %v1117 = vadd.f32 %v965, %v1116
  %1118 = vdwg.mxu0
  %1119 = vmatprep.subr.bf16.mxu0 %v915
  %1120 = vmatpush1.bf16.msra.mxu0 %v914
  %1121 = vmatprep.subr.bf16.mxu0 %v920
  %1122 = vmatpush1.bf16.msra.mxu0 %v919
  %1123 = vmatprep.subr.bf16.mxu0 %v925
  %1124 = vmatpush1.bf16.msra.mxu0 %v924
  %1125 = vmatprep.subr.bf16.mxu0 %v930
  %1126 = vmatpush1.bf16.msra.mxu0 %v929
  %1127 = vmatprep.subr.bf16.mxu0 %v935
  %1128 = vmatpush1.bf16.msra.mxu0 %v934
  %1129 = vmatprep.subr.bf16.mxu0 %v940
  %1130 = vmatpush1.bf16.msra.mxu0 %v939
  %1131 = vmatprep.subr.bf16.mxu0 %v945
  %1132 = vmatpush1.bf16.msra.mxu0 %v944
  %1133 = vmatprep.subr.bf16.mxu0 %v950
  %1134 = vmatpush1.bf16.msra.mxu0 %v949
  %1135 = vmatprep.subr.bf16.mxu0 %v955
  %1136 = vmatpush1.bf16.msra.mxu0 %v954
  %1137 = vmatprep.subr.bf16.mxu0 0
  %1138 = vmatpush1.bf16.msra.mxu0 0
  %1139 = vmatprep.subr.bf16.mxu0 0
  %1140 = vmatpush1.bf16.msra.mxu0 0
  %1141 = vmatprep.subr.bf16.mxu0 0
  %1142 = vmatpush1.bf16.msra.mxu0 0
  %1143 = vmatprep.subr.bf16.mxu0 0
  %1144 = vmatpush1.bf16.msra.mxu0 0
  %1145 = vmatprep.subr.bf16.mxu0 0
  %1146 = vmatpush1.bf16.msra.mxu0 0
  %1147 = vmatprep.subr.bf16.mxu0 0
  %1148 = vmatpush1.bf16.msra.mxu0 0
  %1149 = vmatprep.subr.bf16.mxu0 0
  %1150 = vmatpush1.bf16.msra.mxu0 0
  %1151 = vmatprep.mubr.bf16.mxu0 %v988
  %1152 = vmatmul.mubr.bf16.gmra.mrb[0].mxu0 %v981
  %v1153 = vpop.f32.mrb[0].mxu0
  %v1154 = vadd.f32 %v1111, %v1153
  %v1155 = vpop.f32.mrb[0].mxu0
  %v1156 = vadd.f32 %v1113, %v1155
  %v1157 = vpop.f32.mrb[0].mxu0
  %v1158 = vadd.f32 %v1115, %v1157
  %v1159 = vpop.f32.mrb[0].mxu0
  %v1160 = vadd.f32 %v1117, %v1159
  %1161 = vdwg.mxu0
  %1162 = vmatprep.subr.bf16.mxu0 0
  %1163 = vmatpush1.bf16.msra.mxu0 %v836
  %1164 = vmatprep.subr.bf16.mxu0 0
  %1165 = vmatpush1.bf16.msra.mxu0 %v841
  %1166 = vmatprep.subr.bf16.mxu0 0
  %1167 = vmatpush1.bf16.msra.mxu0 %v846
  %1168 = vmatprep.subr.bf16.mxu0 0
  %1169 = vmatpush1.bf16.msra.mxu0 %v851
  %1170 = vmatprep.subr.bf16.mxu0 0
  %1171 = vmatpush1.bf16.msra.mxu0 %v856
  %1172 = vmatprep.subr.bf16.mxu0 0
  %1173 = vmatpush1.bf16.msra.mxu0 %v861
  %1174 = vmatprep.subr.bf16.mxu0 0
  %1175 = vmatpush1.bf16.msra.mxu0 %v866
  %1176 = vmatprep.subr.bf16.mxu0 0
  %1177 = vmatpush1.bf16.msra.mxu0 %v871
  %1178 = vmatprep.subr.bf16.mxu0 0
  %1179 = vmatpush1.bf16.msra.mxu0 %v876
  %1180 = vmatprep.subr.bf16.mxu0 0
  %1181 = vmatpush1.bf16.msra.mxu0 %v881
  %1182 = vmatprep.subr.bf16.mxu0 0
  %1183 = vmatpush1.bf16.msra.mxu0 %v886
  %1184 = vmatprep.subr.bf16.mxu0 0
  %1185 = vmatpush1.bf16.msra.mxu0 %v891
  %1186 = vmatprep.subr.bf16.mxu0 0
  %1187 = vmatpush1.bf16.msra.mxu0 %v896
  %1188 = vmatprep.subr.bf16.mxu0 0
  %1189 = vmatpush1.bf16.msra.mxu0 %v901
  %1190 = vmatprep.subr.bf16.mxu0 0
  %1191 = vmatpush1.bf16.msra.mxu0 %v906
  %1192 = vmatprep.subr.bf16.mxu0 0
  %1193 = vmatpush1.bf16.msra.mxu0 %v911
  %1194 = vmatprep.mubr.bf16.mxu0 %v980
  %1195 = vmatmul.mubr.bf16.gmra.mrb[0].mxu0 %v979
  %v1196 = vpop.f32.mrb[0].mxu0
  %v1197 = vadd.f32 %v960, %v1196
  %v1198 = vpop.f32.mrb[0].mxu0
  %v1199 = vpop.f32.mrb[0].mxu0
  %v1200 = vadd.f32 %v965, %v1199
  %v1201 = vpop.f32.mrb[0].mxu0
  %1202 = vdwg.mxu0
  %1203 = vmatprep.subr.bf16.mxu0 0
  %1204 = vmatpush1.bf16.msra.mxu0 %v916
  %1205 = vmatprep.subr.bf16.mxu0 0
  %1206 = vmatpush1.bf16.msra.mxu0 %v921
  %1207 = vmatprep.subr.bf16.mxu0 0
  %1208 = vmatpush1.bf16.msra.mxu0 %v926
  %1209 = vmatprep.subr.bf16.mxu0 0
  %1210 = vmatpush1.bf16.msra.mxu0 %v931
  %1211 = vmatprep.subr.bf16.mxu0 0
  %1212 = vmatpush1.bf16.msra.mxu0 %v936
  %1213 = vmatprep.subr.bf16.mxu0 0
  %1214 = vmatpush1.bf16.msra.mxu0 %v941
  %1215 = vmatprep.subr.bf16.mxu0 0
  %1216 = vmatpush1.bf16.msra.mxu0 %v946
  %1217 = vmatprep.subr.bf16.mxu0 0
  %1218 = vmatpush1.bf16.msra.mxu0 %v951
  %1219 = vmatprep.subr.bf16.mxu0 0
  %1220 = vmatpush1.bf16.msra.mxu0 %v956
  %1221 = vmatprep.subr.bf16.mxu0 0
  %1222 = vmatpush1.bf16.msra.mxu0 0
  %1223 = vmatprep.subr.bf16.mxu0 0
  %1224 = vmatpush1.bf16.msra.mxu0 0
  %1225 = vmatprep.subr.bf16.mxu0 0
  %1226 = vmatpush1.bf16.msra.mxu0 0
  %1227 = vmatprep.subr.bf16.mxu0 0
  %1228 = vmatpush1.bf16.msra.mxu0 0
  %1229 = vmatprep.subr.bf16.mxu0 0
  %1230 = vmatpush1.bf16.msra.mxu0 0
  %1231 = vmatprep.subr.bf16.mxu0 0
  %1232 = vmatpush1.bf16.msra.mxu0 0
  %1233 = vmatprep.subr.bf16.mxu0 0
  %1234 = vmatpush1.bf16.msra.mxu0 0
  %1235 = vmatprep.mubr.bf16.mxu0 %v988
  %1236 = vmatmul.mubr.bf16.gmra.mrb[0].mxu0 %v981
  %v1237 = vpop.f32.mrb[0].mxu0
  %v1238 = vadd.f32 %v1197, %v1237
  %v1239 = vpop.f32.mrb[0].mxu0
  %v1240 = vpop.f32.mrb[0].mxu0
  %v1241 = vadd.f32 %v1200, %v1240
  %v1242 = vpop.f32.mrb[0].mxu0
  %1243 = vdwg.mxu0
  %v1244 = vmax.f32 %v1068, 0.0
  %v1245 = vmax.f32 %v1070, 0.0
  %v1246 = vmax.f32 %v1154, 0.0
  %v1247 = vmax.f32 %v1156, 0.0
  %v1248 = vmax.f32 %v1238, 0.0
  %v1249 = vmax.f32 %v1072, 0.0
  %v1250 = vmax.f32 %v1074, 0.0
  %v1251 = vmax.f32 %v1158, 0.0
  %v1252 = vmax.f32 %v1160, 0.0
  %v1253 = vmax.f32 %v1241, 0.0
  %1264 = vrot.lane.b32.xlu0 %v1244, 108
  %v1265 = vpop.permute.xlu0 %1264
  %1266 = vrot.lane.b32.xlu0 %v1245, 108
  %v1267 = vpop.permute.xlu0 %1266
  %1268 = vrot.lane.b32.xlu0 %v1246, 108
  %v1269 = vpop.permute.xlu0 %1268
  %1270 = vrot.lane.b32.xlu0 %v1247, 108
  %v1271 = vpop.permute.xlu0 %1270
  %1272 = vrot.lane.b32.xlu0 %v1248, 108
  %v1273 = vpop.permute.xlu0 %1272
  %1274 = vrot.lane.b32.xlu0 %v1249, 108
  %v1275 = vpop.permute.xlu0 %1274
  %1276 = vrot.lane.b32.xlu0 %v1250, 108
  %v1277 = vpop.permute.xlu0 %1276
  %1278 = vrot.lane.b32.xlu0 %v1251, 108
  %v1279 = vpop.permute.xlu0 %1278
  %1280 = vrot.lane.b32.xlu0 %v1252, 108
  %v1281 = vpop.permute.xlu0 %1280
  %1282 = vrot.lane.b32.xlu0 %v1253, 108
  %v1283 = vpop.permute.xlu0 %1282
  %vm1284 = vcmask 883712
  %v1285 = vsel %vm1284, %v1265, %v1267
  %v1286 = vsel %vm1284, %v1267, %v1269
  %v1287 = vsel %vm1284, %v1269, %v1271
  %v1288 = vsel %vm1284, %v1271, %v1273
  %v1289 = vsel %vm1284, %v1275, %v1277
  %v1290 = vsel %vm1284, %v1277, %v1279
  %v1291 = vsel %vm1284, %v1279, %v1281
  %v1292 = vsel %vm1284, %v1281, %v1283
  %v1303 = vmax.f32 %v1244, %v1285
  %v1304 = vmax.f32 %v1245, %v1286
  %v1305 = vmax.f32 %v1246, %v1287
  %v1306 = vmax.f32 %v1247, %v1288
  %v1307 = vmax.f32 %v1248, %v1273
  %v1308 = vmax.f32 %v1249, %v1289
  %v1309 = vmax.f32 %v1250, %v1290
  %v1310 = vmax.f32 %v1251, %v1291
  %v1311 = vmax.f32 %v1252, %v1292
  %v1312 = vmax.f32 %v1253, %v1283
  %v1313 = vadd.f32 %v1244, %v1285
  %v1314 = vadd.f32 %v1245, %v1286
  %v1315 = vadd.f32 %v1246, %v1287
  %v1316 = vadd.f32 %v1247, %v1288
  %v1317 = vadd.f32 %v1248, %v1273
  %v1318 = vadd.f32 %v1249, %v1289
  %v1319 = vadd.f32 %v1250, %v1290
  %v1320 = vadd.f32 %v1251, %v1291
  %v1321 = vadd.f32 %v1252, %v1292
  %v1322 = vadd.f32 %v1253, %v1283
  %1333 = vrot.lane.b32.xlu0 %v1303, 127
  %v1334 = vpop.permute.xlu0 %1333
  %1335 = vrot.lane.b32.xlu0 %v1304, 127
  %v1336 = vpop.permute.xlu0 %1335
  %1337 = vrot.lane.b32.xlu0 %v1305, 127
  %v1338 = vpop.permute.xlu0 %1337
  %1339 = vrot.lane.b32.xlu0 %v1306, 127
  %v1340 = vpop.permute.xlu0 %1339
  %1341 = vrot.lane.b32.xlu0 %v1307, 127
  %v1342 = vpop.permute.xlu0 %1341
  %1343 = vrot.lane.b32.xlu0 %v1308, 127
  %v1344 = vpop.permute.xlu0 %1343
  %1345 = vrot.lane.b32.xlu0 %v1309, 127
  %v1346 = vpop.permute.xlu0 %1345
  %1347 = vrot.lane.b32.xlu0 %v1310, 127
  %v1348 = vpop.permute.xlu0 %1347
  %1349 = vrot.lane.b32.xlu0 %v1311, 127
  %v1350 = vpop.permute.xlu0 %1349
  %1351 = vrot.lane.b32.xlu0 %v1312, 127
  %v1352 = vpop.permute.xlu0 %1351
  %vm1353 = vcmask 1039360
  %v1354 = vsel %vm1353, %v1334, %v1336
  %v1355 = vsel %vm1353, %v1336, %v1338
  %v1356 = vsel %vm1353, %v1338, %v1340
  %v1357 = vsel %vm1353, %v1340, %v1342
  %v1358 = vsel %vm1353, %v1344, %v1346
  %v1359 = vsel %vm1353, %v1346, %v1348
  %v1360 = vsel %vm1353, %v1348, %v1350
  %v1361 = vsel %vm1353, %v1350, %v1352
  %v1372 = vmax.f32 %v1303, %v1354
  %v1373 = vmax.f32 %v1304, %v1355
  %v1374 = vmax.f32 %v1305, %v1356
  %v1375 = vmax.f32 %v1306, %v1357
  %v1376 = vmax.f32 %v1307, %v1342
  %v1377 = vmax.f32 %v1308, %v1358
  %v1378 = vmax.f32 %v1309, %v1359
  %v1379 = vmax.f32 %v1310, %v1360
  %v1380 = vmax.f32 %v1311, %v1361
  %v1381 = vmax.f32 %v1312, %v1352
  %1392 = vrot.lane.b32.xlu0 %v1313, 127
  %v1393 = vpop.permute.xlu0 %1392
  %1394 = vrot.lane.b32.xlu0 %v1314, 127
  %v1395 = vpop.permute.xlu0 %1394
  %1396 = vrot.lane.b32.xlu0 %v1315, 127
  %v1397 = vpop.permute.xlu0 %1396
  %1398 = vrot.lane.b32.xlu0 %v1316, 127
  %v1399 = vpop.permute.xlu0 %1398
  %1400 = vrot.lane.b32.xlu0 %v1317, 127
  %v1401 = vpop.permute.xlu0 %1400
  %1402 = vrot.lane.b32.xlu0 %v1318, 127
  %v1403 = vpop.permute.xlu0 %1402
  %1404 = vrot.lane.b32.xlu0 %v1319, 127
  %v1405 = vpop.permute.xlu0 %1404
  %1406 = vrot.lane.b32.xlu0 %v1320, 127
  %v1407 = vpop.permute.xlu0 %1406
  %1408 = vrot.lane.b32.xlu0 %v1321, 127
  %v1409 = vpop.permute.xlu0 %1408
  %1410 = vrot.lane.b32.xlu0 %v1322, 127
  %v1411 = vpop.permute.xlu0 %1410
  %v1412 = vsel %vm1353, %v1393, %v1395
  %v1413 = vsel %vm1353, %v1395, %v1397
  %v1414 = vsel %vm1353, %v1397, %v1399
  %v1415 = vsel %vm1353, %v1399, %v1401
  %v1416 = vsel %vm1353, %v1403, %v1405
  %v1417 = vsel %vm1353, %v1405, %v1407
  %v1418 = vsel %vm1353, %v1407, %v1409
  %v1419 = vsel %vm1353, %v1409, %v1411
  %v1430 = vadd.f32 %v1313, %v1412
  %v1431 = vadd.f32 %v1314, %v1413
  %v1432 = vadd.f32 %v1315, %v1414
  %v1433 = vadd.f32 %v1316, %v1415
  %v1434 = vadd.f32 %v1317, %v1401
  %v1435 = vadd.f32 %v1318, %v1416
  %v1436 = vadd.f32 %v1319, %v1417
  %v1437 = vadd.f32 %v1320, %v1418
  %v1438 = vadd.f32 %v1321, %v1419
  %v1439 = vadd.f32 %v1322, %v1411
  %v1440 = vmul.f32 %v1430, 0.25
  %v1441 = vmul.f32 %v1431, 0.25
  %v1442 = vmul.f32 %v1432, 0.25
  %v1443 = vmul.f32 %v1433, 0.25
  %v1444 = vmul.f32 %v1434, 0.25
  %v1445 = vmul.f32 %v1435, 0.25
  %v1446 = vmul.f32 %v1436, 0.25
  %v1447 = vmul.f32 %v1437, 0.25
  %v1448 = vmul.f32 %v1438, 0.25
  %v1449 = vmul.f32 %v1439, 0.25
  %v1450 = vadd.f32 %v1372, %v1440
  %v1451 = vadd.f32 %v1373, %v1441
  %v1452 = vadd.f32 %v1374, %v1442
  %v1453 = vadd.f32 %v1375, %v1443
  %v1454 = vadd.f32 %v1376, %v1444
  %v1455 = vadd.f32 %v1377, %v1445
  %v1456 = vadd.f32 %v1378, %v1446
  %v1457 = vadd.f32 %v1379, %v1447
  %v1458 = vadd.f32 %v1380, %v1448
  %v1459 = vadd.f32 %v1381, %v1449
  %v1460 = vpack.c.bf16 %v1455, %v1450
  %v1461 = vpack.c.bf16 %v1456, %v1451
  %v1462 = vpack.c.bf16 %v1457, %v1452
  %v1463 = vpack.c.bf16 %v1458, %v1453
  %v1464 = vpack.c.bf16 %v1459, %v1454
  %v1465 = vld [vmem:[%s5] sm:$0xff]
  %v1466 = vld [vmem:[%s5 + $0x8] sm:$0xff]
  %v1467 = vld [vmem:[%s5 + $0x10] sm:$0xff]
  %v1468 = vld [vmem:[%s5 + $0x18] sm:$0xff]
  %v1469 = vld [vmem:[%s5 + $0x20] sm:$0xff]
  %v1470 = vld [vmem:[%s5 + $0x28] sm:$0xff]
  %v1471 = vld [vmem:[%s5 + $0x30] sm:$0xff]
  %v1472 = vld [vmem:[%s5 + $0x38] sm:$0xff]
  %v1473 = vld [vmem:[%s5 + $0x40] sm:$0xff]
  %v1474 = vld [vmem:[%s5 + $0x48] sm:$0xff]
  %v1475 = vld [vmem:[%s5 + $0x50] sm:$0xff]
  %v1476 = vld [vmem:[%s5 + $0x58] sm:$0xff]
  %v1477 = vld [vmem:[%s5 + $0x60] sm:$0xff]
  %v1478 = vld [vmem:[%s5 + $0x68] sm:$0xff]
  %v1479 = vld [vmem:[%s5 + $0x70] sm:$0xff]
  %v1480 = vld [vmem:[%s5 + $0x78] sm:$0xff]
  %v1481 = vld [vmem:[%s5 + $0x80] sm:$0xff]
  %v1482 = vld [vmem:[%s5 + $0x88] sm:$0xff]
  %v1483 = vld [vmem:[%s5 + $0x90] sm:$0xff]
  %v1484 = vld [vmem:[%s5 + $0x98] sm:$0xff]
  %v1485 = vld [vmem:[%s5 + $0xa0] sm:$0xff]
  %v1486 = vld [vmem:[%s5 + $0xa8] sm:$0xff]
  %v1487 = vld [vmem:[%s5 + $0xb0] sm:$0xff]
  %v1488 = vld [vmem:[%s5 + $0xb8] sm:$0xff]
  %v1489 = vld [vmem:[%s5 + $0xc0] sm:$0xff]
  %v1490 = vld [vmem:[%s5 + $0xc8] sm:$0xff]
  %v1491 = vld [vmem:[%s5 + $0xd0] sm:$0xff]
  %v1492 = vld [vmem:[%s5 + $0xd8] sm:$0xff]
  %v1493 = vld [vmem:[%s5 + $0xe0] sm:$0xff]
  %v1494 = vld [vmem:[%s5 + $0xe8] sm:$0xff]
  %v1495 = vld [vmem:[%s5 + $0xf0] sm:$0xff]
  %v1496 = vld [vmem:[%s5 + $0xf8] sm:$0xff]
  %v1497 = vld [vmem:[%s5 + $0x100] sm:$0xff]
  %v1498 = vld [vmem:[%s5 + $0x108] sm:$0xff]
  %v1499 = vld [vmem:[%s5 + $0x110] sm:$0xff]
  %v1500 = vld [vmem:[%s5 + $0x118] sm:$0xff]
  %v1501 = vld [vmem:[%s5 + $0x120] sm:$0xff]
  %v1502 = vld [vmem:[%s5 + $0x128] sm:$0xff]
  %v1503 = vld [vmem:[%s5 + $0x130] sm:$0xff]
  %v1504 = vld [vmem:[%s5 + $0x138] sm:$0xff]
  %v1505 = vld [vmem:[%s5 + $0x140] sm:$0xff]
  %v1506 = vld [vmem:[%s5 + $0x148] sm:$0xff]
  %v1507 = vld [vmem:[%s5 + $0x150] sm:$0xff]
  %v1508 = vld [vmem:[%s5 + $0x158] sm:$0xff]
  %v1509 = vld [vmem:[%s5 + $0x160] sm:$0xff]
  %v1510 = vld [vmem:[%s5 + $0x168] sm:$0xff]
  %v1511 = vld [vmem:[%s5 + $0x170] sm:$0xff]
  %v1512 = vld [vmem:[%s5 + $0x178] sm:$0xff]
  %v1513 = vld [vmem:[%s5 + $0x180] sm:$0xff]
  %v1514 = vld [vmem:[%s5 + $0x188] sm:$0xff]
  %v1515 = vld [vmem:[%s5 + $0x190] sm:$0xff]
  %v1516 = vld [vmem:[%s5 + $0x198] sm:$0xff]
  %v1517 = vld [vmem:[%s5 + $0x1a0] sm:$0xff]
  %v1518 = vld [vmem:[%s5 + $0x1a8] sm:$0xff]
  %v1519 = vld [vmem:[%s5 + $0x1b0] sm:$0xff]
  %v1520 = vld [vmem:[%s5 + $0x1b8] sm:$0xff]
  %v1521 = vld [vmem:[%s5 + $0x1c0] sm:$0xff]
  %v1522 = vld [vmem:[%s5 + $0x1c8] sm:$0xff]
  %v1523 = vld [vmem:[%s5 + $0x1d0] sm:$0xff]
  %v1524 = vld [vmem:[%s5 + $0x1d8] sm:$0xff]
  %v1525 = vld [vmem:[%s5 + $0x1e0] sm:$0xff]
  %v1526 = vld [vmem:[%s5 + $0x1e8] sm:$0xff]
  %v1527 = vld [vmem:[%s5 + $0x1f0] sm:$0xff]
  %v1528 = vld [vmem:[%s5 + $0x1f8] sm:$0xff]
  %v1529 = vld [vmem:[%s5 + $0x200] sm:$0xff]
  %v1530 = vld [vmem:[%s5 + $0x208] sm:$0xff]
  %v1531 = vld [vmem:[%s5 + $0x210] sm:$0xff]
  %v1532 = vld [vmem:[%s5 + $0x218] sm:$0xff]
  %v1533 = vld [vmem:[%s5 + $0x220] sm:$0xff]
  %v1534 = vld [vmem:[%s5 + $0x228] sm:$0xff]
  %v1535 = vld [vmem:[%s5 + $0x230] sm:$0xff]
  %v1536 = vld [vmem:[%s5 + $0x238] sm:$0xff]
  %v1537 = vld [vmem:[%s5 + $0x240] sm:$0xff]
  %v1538 = vld [vmem:[%s5 + $0x248] sm:$0xff]
  %v1539 = vld [vmem:[%s5 + $0x250] sm:$0xff]
  %v1540 = vld [vmem:[%s5 + $0x258] sm:$0xff]
  %v1541 = vld [vmem:[%s5 + $0x260] sm:$0xff]
  %v1542 = vld [vmem:[%s5 + $0x268] sm:$0x33]
  %v1621 = vunpack.c.l.b16 %v1465
  %v1622 = vunpack.c.h.b16 %v1465
  %v1623 = vunpack.c.l.b16 %v1466
  %v1624 = vunpack.c.h.b16 %v1466
  %v1625 = vunpack.c.l.b16 %v1467
  %v1626 = vunpack.c.h.b16 %v1467
  %v1627 = vunpack.c.l.b16 %v1468
  %v1628 = vunpack.c.h.b16 %v1468
  %v1629 = vunpack.c.l.b16 %v1469
  %v1630 = vunpack.c.h.b16 %v1469
  %v1631 = vunpack.c.l.b16 %v1470
  %v1632 = vunpack.c.h.b16 %v1470
  %v1633 = vunpack.c.l.b16 %v1471
  %v1634 = vunpack.c.h.b16 %v1471
  %v1635 = vunpack.c.l.b16 %v1472
  %v1636 = vunpack.c.h.b16 %v1472
  %v1637 = vunpack.c.l.b16 %v1473
  %v1638 = vunpack.c.h.b16 %v1473
  %v1639 = vunpack.c.l.b16 %v1474
  %v1640 = vunpack.c.h.b16 %v1474
  %v1641 = vunpack.c.l.b16 %v1475
  %v1642 = vunpack.c.h.b16 %v1475
  %v1643 = vunpack.c.l.b16 %v1476
  %v1644 = vunpack.c.h.b16 %v1476
  %v1645 = vunpack.c.l.b16 %v1477
  %v1646 = vunpack.c.h.b16 %v1477
  %v1647 = vunpack.c.l.b16 %v1478
  %v1648 = vunpack.c.h.b16 %v1478
  %v1649 = vunpack.c.l.b16 %v1479
  %v1650 = vunpack.c.h.b16 %v1479
  %v1651 = vunpack.c.l.b16 %v1480
  %v1652 = vunpack.c.h.b16 %v1480
  %v1653 = vunpack.c.l.b16 %v1481
  %v1654 = vunpack.c.h.b16 %v1481
  %v1655 = vunpack.c.l.b16 %v1482
  %v1656 = vunpack.c.h.b16 %v1482
  %v1657 = vunpack.c.l.b16 %v1483
  %v1658 = vunpack.c.h.b16 %v1483
  %v1659 = vunpack.c.l.b16 %v1484
  %v1660 = vunpack.c.h.b16 %v1484
  %v1661 = vunpack.c.l.b16 %v1485
  %v1662 = vunpack.c.h.b16 %v1485
  %v1663 = vunpack.c.l.b16 %v1486
  %v1664 = vunpack.c.h.b16 %v1486
  %v1665 = vunpack.c.l.b16 %v1487
  %v1666 = vunpack.c.h.b16 %v1487
  %v1667 = vunpack.c.l.b16 %v1488
  %v1668 = vunpack.c.h.b16 %v1488
  %v1669 = vunpack.c.l.b16 %v1489
  %v1670 = vunpack.c.h.b16 %v1489
  %v1671 = vunpack.c.l.b16 %v1490
  %v1672 = vunpack.c.h.b16 %v1490
  %v1673 = vunpack.c.l.b16 %v1491
  %v1674 = vunpack.c.h.b16 %v1491
  %v1675 = vunpack.c.l.b16 %v1492
  %v1676 = vunpack.c.h.b16 %v1492
  %v1677 = vunpack.c.l.b16 %v1493
  %v1678 = vunpack.c.h.b16 %v1493
  %v1679 = vunpack.c.l.b16 %v1494
  %v1680 = vunpack.c.h.b16 %v1494
  %v1681 = vunpack.c.l.b16 %v1495
  %v1682 = vunpack.c.h.b16 %v1495
  %v1683 = vunpack.c.l.b16 %v1496
  %v1684 = vunpack.c.h.b16 %v1496
  %v1685 = vunpack.c.l.b16 %v1497
  %v1686 = vunpack.c.h.b16 %v1497
  %v1687 = vunpack.c.l.b16 %v1498
  %v1688 = vunpack.c.h.b16 %v1498
  %v1689 = vunpack.c.l.b16 %v1499
  %v1690 = vunpack.c.h.b16 %v1499
  %v1691 = vunpack.c.l.b16 %v1500
  %v1692 = vunpack.c.h.b16 %v1500
  %v1693 = vunpack.c.l.b16 %v1501
  %v1694 = vunpack.c.h.b16 %v1501
  %v1695 = vunpack.c.l.b16 %v1502
  %v1696 = vunpack.c.h.b16 %v1502
  %v1697 = vunpack.c.l.b16 %v1503
  %v1698 = vunpack.c.h.b16 %v1503
  %v1699 = vunpack.c.l.b16 %v1504
  %v1700 = vunpack.c.h.b16 %v1504
  %v1701 = vunpack.c.l.b16 %v1505
  %v1702 = vunpack.c.h.b16 %v1505
  %v1703 = vunpack.c.l.b16 %v1506
  %v1704 = vunpack.c.h.b16 %v1506
  %v1705 = vunpack.c.l.b16 %v1507
  %v1706 = vunpack.c.h.b16 %v1507
  %v1707 = vunpack.c.l.b16 %v1508
  %v1708 = vunpack.c.h.b16 %v1508
  %v1709 = vunpack.c.l.b16 %v1509
  %v1710 = vunpack.c.h.b16 %v1509
  %v1711 = vunpack.c.l.b16 %v1510
  %v1712 = vunpack.c.h.b16 %v1510
  %v1713 = vunpack.c.l.b16 %v1511
  %v1714 = vunpack.c.h.b16 %v1511
  %v1715 = vunpack.c.l.b16 %v1512
  %v1716 = vunpack.c.h.b16 %v1512
  %v1717 = vunpack.c.l.b16 %v1513
  %v1718 = vunpack.c.h.b16 %v1513
  %v1719 = vunpack.c.l.b16 %v1514
  %v1720 = vunpack.c.h.b16 %v1514
  %v1721 = vunpack.c.l.b16 %v1515
  %v1722 = vunpack.c.h.b16 %v1515
  %v1723 = vunpack.c.l.b16 %v1516
  %v1724 = vunpack.c.h.b16 %v1516
  %v1725 = vunpack.c.l.b16 %v1517
  %v1726 = vunpack.c.h.b16 %v1517
  %v1727 = vunpack.c.l.b16 %v1518
  %v1728 = vunpack.c.h.b16 %v1518
  %v1729 = vunpack.c.l.b16 %v1519
  %v1730 = vunpack.c.h.b16 %v1519
  %v1731 = vunpack.c.l.b16 %v1520
  %v1732 = vunpack.c.h.b16 %v1520
  %v1733 = vunpack.c.l.b16 %v1521
  %v1734 = vunpack.c.h.b16 %v1521
  %v1735 = vunpack.c.l.b16 %v1522
  %v1736 = vunpack.c.h.b16 %v1522
  %v1737 = vunpack.c.l.b16 %v1523
  %v1738 = vunpack.c.h.b16 %v1523
  %v1739 = vunpack.c.l.b16 %v1524
  %v1740 = vunpack.c.h.b16 %v1524
  %v1741 = vunpack.c.l.b16 %v1525
  %v1742 = vunpack.c.h.b16 %v1525
  %v1743 = vunpack.c.l.b16 %v1526
  %v1744 = vunpack.c.h.b16 %v1526
  %v1745 = vunpack.c.l.b16 %v1527
  %v1746 = vunpack.c.h.b16 %v1527
  %v1747 = vunpack.c.l.b16 %v1528
  %v1748 = vunpack.c.h.b16 %v1528
  %v1749 = vunpack.c.l.b16 %v1529
  %v1750 = vunpack.c.h.b16 %v1529
  %v1751 = vunpack.c.l.b16 %v1530
  %v1752 = vunpack.c.h.b16 %v1530
  %v1753 = vunpack.c.l.b16 %v1531
  %v1754 = vunpack.c.h.b16 %v1531
  %v1755 = vunpack.c.l.b16 %v1532
  %v1756 = vunpack.c.h.b16 %v1532
  %v1757 = vunpack.c.l.b16 %v1533
  %v1758 = vunpack.c.h.b16 %v1533
  %v1759 = vunpack.c.l.b16 %v1534
  %v1760 = vunpack.c.h.b16 %v1534
  %v1761 = vunpack.c.l.b16 %v1535
  %v1762 = vunpack.c.h.b16 %v1535
  %v1763 = vunpack.c.l.b16 %v1536
  %v1764 = vunpack.c.h.b16 %v1536
  %v1765 = vunpack.c.l.b16 %v1537
  %v1766 = vunpack.c.h.b16 %v1537
  %v1767 = vunpack.c.l.b16 %v1538
  %v1768 = vunpack.c.h.b16 %v1538
  %v1769 = vunpack.c.l.b16 %v1539
  %v1770 = vunpack.c.h.b16 %v1539
  %v1771 = vunpack.c.l.b16 %v1540
  %v1772 = vunpack.c.h.b16 %v1540
  %v1773 = vunpack.c.l.b16 %v1541
  %v1774 = vunpack.c.h.b16 %v1541
  %v1775 = vunpack.c.l.b16 %v1542
  %v1776 = vunpack.c.h.b16 %v1542
  %v1777 = vpack.c.b16 %v1623, %v1621
  %v1778 = vpack.c.b16 %v1624, %v1622
  %v1779 = vpack.c.b16 %v1627, %v1625
  %v1780 = vpack.c.b16 %v1628, %v1626
  %v1781 = vpack.c.b16 %v1631, %v1629
  %v1782 = vpack.c.b16 %v1632, %v1630
  %v1783 = vpack.c.b16 %v1635, %v1633
  %v1784 = vpack.c.b16 %v1636, %v1634
  %v1785 = vpack.c.b16 %v1639, %v1637
  %v1786 = vpack.c.b16 %v1640, %v1638
  %v1787 = vpack.c.b16 %v1643, %v1641
  %v1788 = vpack.c.b16 %v1644, %v1642
  %v1789 = vpack.c.b16 %v1647, %v1645
  %v1790 = vpack.c.b16 %v1648, %v1646
  %v1791 = vpack.c.b16 %v1651, %v1649
  %v1792 = vpack.c.b16 %v1652, %v1650
  %v1793 = vpack.c.b16 %v1655, %v1653
  %v1794 = vpack.c.b16 %v1656, %v1654
  %v1795 = vpack.c.b16 %v1659, %v1657
  %v1796 = vpack.c.b16 %v1660, %v1658
  %v1797 = vpack.c.b16 %v1663, %v1661
  %v1798 = vpack.c.b16 %v1664, %v1662
  %v1799 = vpack.c.b16 %v1667, %v1665
  %v1800 = vpack.c.b16 %v1668, %v1666
  %v1801 = vpack.c.b16 %v1671, %v1669
  %v1802 = vpack.c.b16 %v1672, %v1670
  %v1803 = vpack.c.b16 %v1675, %v1673
  %v1804 = vpack.c.b16 %v1676, %v1674
  %v1805 = vpack.c.b16 %v1679, %v1677
  %v1806 = vpack.c.b16 %v1680, %v1678
  %v1807 = vpack.c.b16 %v1683, %v1681
  %v1808 = vpack.c.b16 %v1684, %v1682
  %v1809 = vpack.c.b16 %v1687, %v1685
  %v1810 = vpack.c.b16 %v1688, %v1686
  %v1811 = vpack.c.b16 %v1691, %v1689
  %v1812 = vpack.c.b16 %v1692, %v1690
  %v1813 = vpack.c.b16 %v1695, %v1693
  %v1814 = vpack.c.b16 %v1696, %v1694
  %v1815 = vpack.c.b16 %v1699, %v1697
  %v1816 = vpack.c.b16 %v1700, %v1698
  %v1817 = vpack.c.b16 %v1703, %v1701
  %v1818 = vpack.c.b16 %v1704, %v1702
  %v1819 = vpack.c.b16 %v1707, %v1705
  %v1820 = vpack.c.b16 %v1708, %v1706
  %v1821 = vpack.c.b16 %v1711, %v1709
  %v1822 = vpack.c.b16 %v1712, %v1710
  %v1823 = vpack.c.b16 %v1715, %v1713
  %v1824 = vpack.c.b16 %v1716, %v1714
  %v1825 = vpack.c.b16 %v1719, %v1717
  %v1826 = vpack.c.b16 %v1720, %v1718
  %v1827 = vpack.c.b16 %v1723, %v1721
  %v1828 = vpack.c.b16 %v1724, %v1722
  %v1829 = vpack.c.b16 %v1727, %v1725
  %v1830 = vpack.c.b16 %v1728, %v1726
  %v1831 = vpack.c.b16 %v1731, %v1729
  %v1832 = vpack.c.b16 %v1732, %v1730
  %v1833 = vpack.c.b16 %v1735, %v1733
  %v1834 = vpack.c.b16 %v1736, %v1734
  %v1835 = vpack.c.b16 %v1739, %v1737
  %v1836 = vpack.c.b16 %v1740, %v1738
  %v1837 = vpack.c.b16 %v1743, %v1741
  %v1838 = vpack.c.b16 %v1744, %v1742
  %v1839 = vpack.c.b16 %v1747, %v1745
  %v1840 = vpack.c.b16 %v1748, %v1746
  %v1841 = vpack.c.b16 %v1751, %v1749
  %v1842 = vpack.c.b16 %v1752, %v1750
  %v1843 = vpack.c.b16 %v1755, %v1753
  %v1844 = vpack.c.b16 %v1756, %v1754
  %v1845 = vpack.c.b16 %v1759, %v1757
  %v1846 = vpack.c.b16 %v1760, %v1758
  %v1847 = vpack.c.b16 %v1763, %v1761
  %v1848 = vpack.c.b16 %v1764, %v1762
  %v1849 = vpack.c.b16 %v1767, %v1765
  %v1850 = vpack.c.b16 %v1768, %v1766
  %v1851 = vpack.c.b16 %v1771, %v1769
  %v1852 = vpack.c.b16 %v1772, %v1770
  %v1853 = vpack.c.b16 %v1775, %v1773
  %v1854 = vpack.c.b16 %v1776, %v1774
  %vm1931 = vcmask 875520
  %v1933 = vsel %vm1931, %v1464, 0
  %vm1935 = vcmask 1044480
  %vm1936 = vcmask 1045504
  %v1937 = vsel %vm1935, 4294967295, 65535
  %v1938 = vsel %vm1936, %v1937, 0
  %v1940 = vand.u32 %v1853, %v1938
  %v1943 = vand.u32 %v1854, %v1938
  %1945 = vmatprep.subr.bf16.mxu0 %v1778
  %1946 = vmatpush1.bf16.msra.mxu0 %v1777
  %1947 = vmatprep.subr.bf16.mxu0 %v1780
  %1948 = vmatpush1.bf16.msra.mxu0 %v1779
  %1949 = vmatprep.subr.bf16.mxu0 %v1782
  %1950 = vmatpush1.bf16.msra.mxu0 %v1781
  %1951 = vmatprep.subr.bf16.mxu0 %v1784
  %1952 = vmatpush1.bf16.msra.mxu0 %v1783
  %1953 = vmatprep.subr.bf16.mxu0 %v1786
  %1954 = vmatpush1.bf16.msra.mxu0 %v1785
  %1955 = vmatprep.subr.bf16.mxu0 %v1788
  %1956 = vmatpush1.bf16.msra.mxu0 %v1787
  %1957 = vmatprep.subr.bf16.mxu0 %v1790
  %1958 = vmatpush1.bf16.msra.mxu0 %v1789
  %1959 = vmatprep.subr.bf16.mxu0 %v1792
  %1960 = vmatpush1.bf16.msra.mxu0 %v1791
  %1961 = vmatprep.subr.bf16.mxu0 %v1794
  %1962 = vmatpush1.bf16.msra.mxu0 %v1793
  %1963 = vmatprep.subr.bf16.mxu0 %v1796
  %1964 = vmatpush1.bf16.msra.mxu0 %v1795
  %1965 = vmatprep.subr.bf16.mxu0 %v1798
  %1966 = vmatpush1.bf16.msra.mxu0 %v1797
  %1967 = vmatprep.subr.bf16.mxu0 %v1800
  %1968 = vmatpush1.bf16.msra.mxu0 %v1799
  %1969 = vmatprep.subr.bf16.mxu0 %v1802
  %1970 = vmatpush1.bf16.msra.mxu0 %v1801
  %1971 = vmatprep.subr.bf16.mxu0 %v1804
  %1972 = vmatpush1.bf16.msra.mxu0 %v1803
  %1973 = vmatprep.subr.bf16.mxu0 %v1806
  %1974 = vmatpush1.bf16.msra.mxu0 %v1805
  %1975 = vmatprep.subr.bf16.mxu0 %v1808
  %1976 = vmatpush1.bf16.msra.mxu0 %v1807
  %1977 = vmatprep.mubr.bf16.mxu0 %v1461
  %1978 = vmatmul.mubr.bf16.gmra.mrb[0].mxu0 %v1460
  %v1979 = vpop.f32.mrb[0].mxu0
  %v1980 = vadd.f32 0.0, %v1979
  %v1981 = vpop.f32.mrb[0].mxu0
  %v1982 = vadd.f32 0.0, %v1981
  %v1983 = vpop.f32.mrb[0].mxu0
  %v1984 = vadd.f32 0.0, %v1983
  %v1985 = vpop.f32.mrb[0].mxu0
  %v1986 = vadd.f32 0.0, %v1985
  %1987 = vdwg.mxu0
  %1988 = vmatprep.subr.bf16.mxu0 %v1810
  %1989 = vmatpush1.bf16.msra.mxu0 %v1809
  %1990 = vmatprep.subr.bf16.mxu0 %v1812
  %1991 = vmatpush1.bf16.msra.mxu0 %v1811
  %1992 = vmatprep.subr.bf16.mxu0 %v1814
  %1993 = vmatpush1.bf16.msra.mxu0 %v1813
  %1994 = vmatprep.subr.bf16.mxu0 %v1816
  %1995 = vmatpush1.bf16.msra.mxu0 %v1815
  %1996 = vmatprep.subr.bf16.mxu0 %v1818
  %1997 = vmatpush1.bf16.msra.mxu0 %v1817
  %1998 = vmatprep.subr.bf16.mxu0 %v1820
  %1999 = vmatpush1.bf16.msra.mxu0 %v1819
  %2000 = vmatprep.subr.bf16.mxu0 %v1822
  %2001 = vmatpush1.bf16.msra.mxu0 %v1821
  %2002 = vmatprep.subr.bf16.mxu0 %v1824
  %2003 = vmatpush1.bf16.msra.mxu0 %v1823
  %2004 = vmatprep.subr.bf16.mxu0 %v1826
  %2005 = vmatpush1.bf16.msra.mxu0 %v1825
  %2006 = vmatprep.subr.bf16.mxu0 %v1828
  %2007 = vmatpush1.bf16.msra.mxu0 %v1827
  %2008 = vmatprep.subr.bf16.mxu0 %v1830
  %2009 = vmatpush1.bf16.msra.mxu0 %v1829
  %2010 = vmatprep.subr.bf16.mxu0 %v1832
  %2011 = vmatpush1.bf16.msra.mxu0 %v1831
  %2012 = vmatprep.subr.bf16.mxu0 %v1834
  %2013 = vmatpush1.bf16.msra.mxu0 %v1833
  %2014 = vmatprep.subr.bf16.mxu0 %v1836
  %2015 = vmatpush1.bf16.msra.mxu0 %v1835
  %2016 = vmatprep.subr.bf16.mxu0 %v1838
  %2017 = vmatpush1.bf16.msra.mxu0 %v1837
  %2018 = vmatprep.subr.bf16.mxu0 %v1840
  %2019 = vmatpush1.bf16.msra.mxu0 %v1839
  %2020 = vmatprep.mubr.bf16.mxu0 %v1463
  %2021 = vmatmul.mubr.bf16.gmra.mrb[0].mxu0 %v1462
  %v2022 = vpop.f32.mrb[0].mxu0
  %v2023 = vadd.f32 %v1980, %v2022
  %v2024 = vpop.f32.mrb[0].mxu0
  %v2025 = vadd.f32 %v1982, %v2024
  %v2026 = vpop.f32.mrb[0].mxu0
  %v2027 = vadd.f32 %v1984, %v2026
  %v2028 = vpop.f32.mrb[0].mxu0
  %v2029 = vadd.f32 %v1986, %v2028
  %2030 = vdwg.mxu0
  %2031 = vmatprep.subr.bf16.mxu0 %v1842
  %2032 = vmatpush1.bf16.msra.mxu0 %v1841
  %2033 = vmatprep.subr.bf16.mxu0 %v1844
  %2034 = vmatpush1.bf16.msra.mxu0 %v1843
  %2035 = vmatprep.subr.bf16.mxu0 %v1846
  %2036 = vmatpush1.bf16.msra.mxu0 %v1845
  %2037 = vmatprep.subr.bf16.mxu0 %v1848
  %2038 = vmatpush1.bf16.msra.mxu0 %v1847
  %2039 = vmatprep.subr.bf16.mxu0 %v1850
  %2040 = vmatpush1.bf16.msra.mxu0 %v1849
  %2041 = vmatprep.subr.bf16.mxu0 %v1852
  %2042 = vmatpush1.bf16.msra.mxu0 %v1851
  %2043 = vmatprep.subr.bf16.mxu0 %v1943
  %2044 = vmatpush1.bf16.msra.mxu0 %v1940
  %2045 = vmatprep.subr.bf16.mxu0 0
  %2046 = vmatpush1.bf16.msra.mxu0 0
  %2047 = vmatprep.subr.bf16.mxu0 0
  %2048 = vmatpush1.bf16.msra.mxu0 0
  %2049 = vmatprep.subr.bf16.mxu0 0
  %2050 = vmatpush1.bf16.msra.mxu0 0
  %2051 = vmatprep.subr.bf16.mxu0 0
  %2052 = vmatpush1.bf16.msra.mxu0 0
  %2053 = vmatprep.subr.bf16.mxu0 0
  %2054 = vmatpush1.bf16.msra.mxu0 0
  %2055 = vmatprep.subr.bf16.mxu0 0
  %2056 = vmatpush1.bf16.msra.mxu0 0
  %2057 = vmatprep.subr.bf16.mxu0 0
  %2058 = vmatpush1.bf16.msra.mxu0 0
  %2059 = vmatprep.subr.bf16.mxu0 0
  %2060 = vmatpush1.bf16.msra.mxu0 0
  %2061 = vmatprep.subr.bf16.mxu0 0
  %2062 = vmatpush1.bf16.msra.mxu0 0
  %2063 = vmatprep.mubr.bf16.mxu0 0
  %2064 = vmatmul.mubr.bf16.gmra.mrb[0].mxu0 %v1933
  %v2065 = vpop.f32.mrb[0].mxu0
  %v2066 = vadd.f32 %v2023, %v2065
  %v2067 = vpop.f32.mrb[0].mxu0
  %v2068 = vadd.f32 %v2025, %v2067
  %v2069 = vpop.f32.mrb[0].mxu0
  %v2070 = vadd.f32 %v2027, %v2069
  %v2071 = vpop.f32.mrb[0].mxu0
  %v2072 = vadd.f32 %v2029, %v2071
  %2073 = vdwg.mxu0
  %v2074 = vpack.c.bf16 %v2070, %v2066
  %v2075 = vpack.c.bf16 %v2072, %v2068
  %2076 = vst [vmem:[#allocation3] sm:$0xff] %v2074
  %vm2077 = vcmask 752640
  %2078 = vst.msk [vmem:[#allocation3 + $0x8] sm:$0xff] %vm2077, %v2075
  %v2079 = vld [vmem:[#allocation3] sm:$0xff]
  %vm2080 = vcmask 654336
  %2081 = vst.msk [vmem:[#allocation2] sm:$0xff] %vm2080, %v2079
  %2083 = vrot.lane.b32.xlu0 %v2079, 127
  %v2084 = vpop.permute.xlu0 %2083
  %2086 = vst.msk [vmem:[#allocation2 + $0x28] sm:$0xff] %vm2080, %v2084
  %2087 = vrot.lane.b32.xlu0 %v2079, 126
  %v2088 = vpop.permute.xlu0 %2087
  %2090 = vst.msk [vmem:[#allocation2 + $0x50] sm:$0xff] %vm2080, %v2088
  %2091 = vrot.lane.b32.xlu0 %v2079, 118
  %v2092 = vpop.permute.xlu0 %2091
  %2094 = vst.msk [vmem:[#allocation2 + $0x78] sm:$0xff] %vm2080, %v2092
  %2095 = vrot.lane.b32.xlu0 %v2079, 117
  %v2096 = vpop.permute.xlu0 %2095
  %2098 = vst.msk [vmem:[#allocation2 + $0xa0] sm:$0xff] %vm2080, %v2096
  %2099 = vrot.lane.b32.xlu0 %v2079, 116
  %v2100 = vpop.permute.xlu0 %2099
  %2102 = vst.msk [vmem:[#allocation2 + $0xc8] sm:$0xff] %vm2080, %v2100
  %2103 = vrot.lane.b32.xlu0 %v2079, 108
  %v2104 = vpop.permute.xlu0 %2103
  %2106 = vst.msk [vmem:[#allocation2 + $0xf0] sm:$0xff] %vm2080, %v2104
  %2107 = vrot.lane.b32.xlu0 %v2079, 107
  %v2108 = vpop.permute.xlu0 %2107
  %2110 = vst.msk [vmem:[#allocation2 + $0x118] sm:$0xff] %vm2080, %v2108
  %2111 = vrot.lane.b32.xlu0 %v2079, 106
  %v2112 = vpop.permute.xlu0 %2111
  %2114 = vst.msk [vmem:[#allocation2 + $0x140] sm:$0xff] %vm2080, %v2112
  %v2115 = vld [vmem:[#allocation3] sm:$0xff]
  %v2116 = vld [vmem:[#allocation3 + $0x8] sm:$0xff]
  %2119 = vrot.lane.b32.xlu0 %v2115, 98
  %v2120 = vpop.permute.xlu0 %2119
  %2121 = vrot.lane.b32.xlu0 %v2116, 98
  %v2122 = vpop.permute.xlu0 %2121
  %vm2123 = vcmask 801792
  %v2124 = vsel %vm2123, %v2120, %v2122
  %vm2127 = vcmask 1048192
  %2128 = vst.msk [vmem:[#allocation2] sm:$0xff] %vm2127, %v2124
  %vm2129 = vcmask 261120
  %2130 = vst.msk [vmem:[#allocation2 + $0x8] sm:$0xff] %vm2129, %v2122
  %2131 = vrot.lane.b32.xlu0 %v2115, 97
  %v2132 = vpop.permute.xlu0 %2131
  %2133 = vrot.lane.b32.xlu0 %v2116, 97
  %v2134 = vpop.permute.xlu0 %2133
  %vm2135 = vcmask 793600
  %v2136 = vsel %vm2135, %v2132, %v2134
  %2139 = vst.msk [vmem:[#allocation2 + $0x28] sm:$0xff] %vm2127, %v2136
  %2140 = vst.msk [vmem:[#allocation2 + $0x30] sm:$0xff] %vm2129, %v2134
  %2141 = vrot.lane.b32.xlu0 %v2115, 96
  %v2142 = vpop.permute.xlu0 %2141
  %2143 = vrot.lane.b32.xlu0 %v2116, 96
  %v2144 = vpop.permute.xlu0 %2143
  %vm2145 = vcmask 785408
  %v2146 = vsel %vm2145, %v2142, %v2144
  %2149 = vst.msk [vmem:[#allocation2 + $0x50] sm:$0xff] %vm2127, %v2146
  %2150 = vst.msk [vmem:[#allocation2 + $0x58] sm:$0xff] %vm2129, %v2144
  %2151 = vrot.lane.b32.xlu0 %v2115, 88
  %v2152 = vpop.permute.xlu0 %2151
  %2153 = vrot.lane.b32.xlu0 %v2116, 88
  %v2154 = vpop.permute.xlu0 %2153
  %v2155 = vsel %vm189, %v2152, %v2154
  %2158 = vst.msk [vmem:[#allocation2 + $0x78] sm:$0xff] %vm2127, %v2155
  %2159 = vst.msk [vmem:[#allocation2 + $0x80] sm:$0xff] %vm2129, %v2154
  %2160 = vrot.lane.b32.xlu0 %v2115, 87
  %v2161 = vpop.permute.xlu0 %2160
  %2162 = vrot.lane.b32.xlu0 %v2116, 87
  %v2163 = vpop.permute.xlu0 %2162
  %v2164 = vsel %vm204, %v2161, %v2163
  %2167 = vst.msk [vmem:[#allocation2 + $0xa0] sm:$0xff] %vm2127, %v2164
  %2168 = vst.msk [vmem:[#allocation2 + $0xa8] sm:$0xff] %vm2129, %v2163
  %2169 = vrot.lane.b32.xlu0 %v2115, 86
  %v2170 = vpop.permute.xlu0 %2169
  %2171 = vrot.lane.b32.xlu0 %v2116, 86
  %v2172 = vpop.permute.xlu0 %2171
  %v2173 = vsel %vm219, %v2170, %v2172
  %2176 = vst.msk [vmem:[#allocation2 + $0xc8] sm:$0xff] %vm2127, %v2173
  %2177 = vst.msk [vmem:[#allocation2 + $0xd0] sm:$0xff] %vm2129, %v2172
  %2178 = vrot.lane.b32.xlu0 %v2116, 78
  %v2179 = vpop.permute.xlu0 %2178
  %2181 = vst.msk [vmem:[#allocation2 + $0xf0] sm:$0xff] %vm2127, %v2179
  %2182 = vst.msk [vmem:[#allocation2 + $0xf8] sm:$0xff] %vm2129, %v2179
  %2183 = vrot.lane.b32.xlu0 %v2116, 77
  %v2184 = vpop.permute.xlu0 %2183
  %2186 = vst.msk [vmem:[#allocation2 + $0x118] sm:$0xff] %vm2127, %v2184
  %2187 = vst.msk [vmem:[#allocation2 + $0x120] sm:$0xff] %vm2129, %v2184
  %2188 = vrot.lane.b32.xlu0 %v2116, 76
  %v2189 = vpop.permute.xlu0 %2188
  %2191 = vst.msk [vmem:[#allocation2 + $0x140] sm:$0xff] %vm2127, %v2189
  %2192 = vst.msk [vmem:[#allocation2 + $0x148] sm:$0xff] %vm2129, %v2189
  %v2193 = vld [vmem:[%s3 + $0x20] sm:$0xff]
  %v2194 = vld [vmem:[%s4 + $0x10] sm:$0xff]
  %v2195 = vld [vmem:[#allocation2] sm:$0xff]
  %v2196 = vld [vmem:[#allocation2 + $0x8] sm:$0xff]
  %v2197 = vld [vmem:[#allocation2 + $0x28] sm:$0xff]
  %v2198 = vld [vmem:[#allocation2 + $0x30] sm:$0xff]
  %v2199 = vld [vmem:[#allocation2 + $0x50] sm:$0xff]
  %v2200 = vld [vmem:[#allocation2 + $0x58] sm:$0xff]
  %v2201 = vld [vmem:[#allocation2 + $0x78] sm:$0xff]
  %v2202 = vld [vmem:[#allocation2 + $0x80] sm:$0xff]
  %v2203 = vld [vmem:[#allocation2 + $0xa0] sm:$0xff]
  %v2204 = vld [vmem:[#allocation2 + $0xa8] sm:$0xff]
  %v2205 = vld [vmem:[#allocation2 + $0xc8] sm:$0xff]
  %v2206 = vld [vmem:[#allocation2 + $0xd0] sm:$0xff]
  %v2207 = vld [vmem:[#allocation2 + $0xf0] sm:$0xff]
  %v2208 = vld [vmem:[#allocation2 + $0xf8] sm:$0xff]
  %v2209 = vld [vmem:[#allocation2 + $0x118] sm:$0xff]
  %v2210 = vld [vmem:[#allocation2 + $0x120] sm:$0xff]
  %v2211 = vld [vmem:[#allocation2 + $0x140] sm:$0xff]
  %v2212 = vld [vmem:[#allocation2 + $0x148] sm:$0xff]
  %2214 = vset.pattern.permute.xlu0 0
  %2215 = vperm.xlu0 %2214, %v2194
  %v2216 = vpop.permute.xlu0 %2215
  %v2219 = vunpack.c.l.b16 %v2193
  %v2220 = vunpack.c.h.b16 %v2193
  %v2221 = vpack.c.b16 %v2219, %v2219
  %v2222 = vpack.c.b16 %v2220, %v2220
  %v2225 = vsel %vm986, %v2222, 0
  %2227 = vmatprep.subr.bf16.mxu0 %v2196
  %2228 = vmatpush1.bf16.msra.mxu0 %v2195
  %2229 = vmatprep.subr.bf16.mxu0 %v2198
  %2230 = vmatpush1.bf16.msra.mxu0 %v2197
  %2231 = vmatprep.subr.bf16.mxu0 %v2200
  %2232 = vmatpush1.bf16.msra.mxu0 %v2199
  %2233 = vmatprep.subr.bf16.mxu0 %v2202
  %2234 = vmatpush1.bf16.msra.mxu0 %v2201
  %2235 = vmatprep.subr.bf16.mxu0 %v2204
  %2236 = vmatpush1.bf16.msra.mxu0 %v2203
  %2237 = vmatprep.subr.bf16.mxu0 %v2206
  %2238 = vmatpush1.bf16.msra.mxu0 %v2205
  %2239 = vmatprep.subr.bf16.mxu0 %v2208
  %2240 = vmatpush1.bf16.msra.mxu0 %v2207
  %2241 = vmatprep.subr.bf16.mxu0 %v2210
  %2242 = vmatpush1.bf16.msra.mxu0 %v2209
  %2243 = vmatprep.subr.bf16.mxu0 %v2212
  %2244 = vmatpush1.bf16.msra.mxu0 %v2211
  %2245 = vmatprep.subr.bf16.mxu0 0
  %2246 = vmatpush1.bf16.msra.mxu0 0
  %2247 = vmatprep.subr.bf16.mxu0 0
  %2248 = vmatpush1.bf16.msra.mxu0 0
  %2249 = vmatprep.subr.bf16.mxu0 0
  %2250 = vmatpush1.bf16.msra.mxu0 0
  %2251 = vmatprep.subr.bf16.mxu0 0
  %2252 = vmatpush1.bf16.msra.mxu0 0
  %2253 = vmatprep.subr.bf16.mxu0 0
  %2254 = vmatpush1.bf16.msra.mxu0 0
  %2255 = vmatprep.subr.bf16.mxu0 0
  %2256 = vmatpush1.bf16.msra.mxu0 0
  %2257 = vmatprep.subr.bf16.mxu0 0
  %2258 = vmatpush1.bf16.msra.mxu0 0
  %2259 = vmatprep.mubr.bf16.mxu0 %v2225
  %2260 = vmatmul.mubr.bf16.gmra.mrb[0].mxu0 %v2221
  %v2261 = vpop.f32.mrb[0].mxu0
  %v2262 = vadd.f32 %v2216, %v2261
  %v2263 = vpop.f32.mrb[0].mxu0
  %v2264 = vadd.f32 %v2216, %v2263
  %v2265 = vpop.f32.mrb[0].mxu0
  %v2266 = vpop.f32.mrb[0].mxu0
  %2267 = vdwg.mxu0
  %v2268 = vmax.f32 %v2262, 0.0
  %v2269 = vmax.f32 %v2264, 0.0
  %v2270 = vld [vmem:[%s1] sm:$0xf]
  %vm2271 = vcmask 650240
  %2272 = vst.msk [vmem:[#allocation2] sm:$0xf] %vm2271, %v2270
  %v2274 = vunpack.c.l.b16 %v2270
  %v2275 = vpack.c.b16 %v2274, %v2274
  %2276 = vrot.lane.b32.xlu0 %v2275, 127
  %v2277 = vpop.permute.xlu0 %2276
  %vm2279 = vcmask 654340
  %2280 = vst.msk [vmem:[#allocation2] sm:$0xf0] %vm2279, %v2277
  %2281 = vrot.lane.b32.xlu0 %v2275, 126
  %v2282 = vpop.permute.xlu0 %2281
  %2284 = vst.msk [vmem:[#allocation2 + $0x28] sm:$0xf] %vm2271, %v2282
  %2285 = vrot.lane.b32.xlu0 %v2275, 118
  %v2286 = vpop.permute.xlu0 %2285
  %2288 = vst.msk [vmem:[#allocation2 + $0x28] sm:$0xf0] %vm2279, %v2286
  %2289 = vrot.lane.b32.xlu0 %v2275, 117
  %v2290 = vpop.permute.xlu0 %2289
  %2292 = vst.msk [vmem:[#allocation2 + $0x50] sm:$0xf] %vm2271, %v2290
  %2293 = vrot.lane.b32.xlu0 %v2275, 116
  %v2294 = vpop.permute.xlu0 %2293
  %2296 = vst.msk [vmem:[#allocation2 + $0x50] sm:$0xf0] %vm2279, %v2294
  %2297 = vrot.lane.b32.xlu0 %v2275, 108
  %v2298 = vpop.permute.xlu0 %2297
  %2300 = vst.msk [vmem:[#allocation2 + $0x78] sm:$0xf] %vm2271, %v2298
  %2301 = vrot.lane.b32.xlu0 %v2275, 107
  %v2302 = vpop.permute.xlu0 %2301
  %2304 = vst.msk [vmem:[#allocation2 + $0x78] sm:$0xf0] %vm2279, %v2302
  %2305 = vrot.lane.b32.xlu0 %v2275, 106
  %v2306 = vpop.permute.xlu0 %2305
  %2308 = vst.msk [vmem:[#allocation2 + $0xa0] sm:$0xf] %vm2271, %v2306
  %s2309 = scalar_lea.vmem %s1, 4
  %v2310 = vld [vmem:[%s2309] sm:$0xf]
  %v2312 = vunpack.c.l.b16 %v2310
  %v2313 = vpack.c.b16 %v2312, %v2312
  %2314 = vrot.lane.b32.xlu0 %v2313, 80
  %v2315 = vpop.permute.xlu0 %2314
  %vm2317 = vcmask 1044096
  %2318 = vst.msk [vmem:[#allocation2] sm:$0xf] %vm2317, %v2315
  %vm2319 = vcmask 257024
  %2320 = vst.msk [vmem:[#allocation2 + $0x8] sm:$0xf] %vm2319, %v2315
  %2321 = vrot.lane.b32.xlu0 %v2313, 79
  %v2322 = vpop.permute.xlu0 %2321
  %vm2324 = vcmask 1048196
  %2325 = vst.msk [vmem:[#allocation2] sm:$0xf0] %vm2324, %v2322
  %vm2326 = vcmask 261124
  %2327 = vst.msk [vmem:[#allocation2 + $0x8] sm:$0xf0] %vm2326, %v2322
  %2328 = vrot.lane.b32.xlu0 %v2313, 78
  %v2329 = vpop.permute.xlu0 %2328
  %2331 = vst.msk [vmem:[#allocation2 + $0x28] sm:$0xf] %vm2317, %v2329
  %2332 = vst.msk [vmem:[#allocation2 + $0x30] sm:$0xf] %vm2319, %v2329
  %2333 = vrot.lane.b32.xlu0 %v2313, 70
  %v2334 = vpop.permute.xlu0 %2333
  %2336 = vst.msk [vmem:[#allocation2 + $0x28] sm:$0xf0] %vm2324, %v2334
  %2337 = vst.msk [vmem:[#allocation2 + $0x30] sm:$0xf0] %vm2326, %v2334
  %2338 = vrot.lane.b32.xlu0 %v2313, 69
  %v2339 = vpop.permute.xlu0 %2338
  %2341 = vst.msk [vmem:[#allocation2 + $0x50] sm:$0xf] %vm2317, %v2339
  %2342 = vst.msk [vmem:[#allocation2 + $0x58] sm:$0xf] %vm2319, %v2339
  %2343 = vrot.lane.b32.xlu0 %v2313, 68
  %v2344 = vpop.permute.xlu0 %2343
  %2346 = vst.msk [vmem:[#allocation2 + $0x50] sm:$0xf0] %vm2324, %v2344
  %2347 = vst.msk [vmem:[#allocation2 + $0x58] sm:$0xf0] %vm2326, %v2344
  %2348 = vrot.lane.b32.xlu0 %v2313, 60
  %v2349 = vpop.permute.xlu0 %2348
  %2351 = vst.msk [vmem:[#allocation2 + $0x78] sm:$0xf] %vm2317, %v2349
  %2352 = vst.msk [vmem:[#allocation2 + $0x80] sm:$0xf] %vm2319, %v2349
  %2353 = vrot.lane.b32.xlu0 %v2313, 59
  %v2354 = vpop.permute.xlu0 %2353
  %2356 = vst.msk [vmem:[#allocation2 + $0x78] sm:$0xf0] %vm2324, %v2354
  %2357 = vst.msk [vmem:[#allocation2 + $0x80] sm:$0xf0] %vm2326, %v2354
  %2358 = vrot.lane.b32.xlu0 %v2313, 58
  %v2359 = vpop.permute.xlu0 %2358
  %2361 = vst.msk [vmem:[#allocation2 + $0xa0] sm:$0xf] %vm2317, %v2359
  %2362 = vst.msk [vmem:[#allocation2 + $0xa8] sm:$0xf] %vm2319, %v2359
  %v2363 = vld [vmem:[%s3 + $0x30] sm:$0xf]
  %v2364 = vld [vmem:[%s4 + $0x18] sm:$0xff]
  %v2365 = vld [vmem:[#allocation2] sm:$0xff]
  %v2366 = vld [vmem:[#allocation2 + $0x8] sm:$0xff]
  %v2367 = vld [vmem:[#allocation2 + $0x28] sm:$0xff]
  %v2368 = vld [vmem:[#allocation2 + $0x30] sm:$0xff]
  %v2369 = vld [vmem:[#allocation2 + $0x50] sm:$0xff]
  %v2370 = vld [vmem:[#allocation2 + $0x58] sm:$0xff]
  %v2371 = vld [vmem:[#allocation2 + $0x78] sm:$0xff]
  %v2372 = vld [vmem:[#allocation2 + $0x80] sm:$0xff]
  %v2373 = vld [vmem:[#allocation2 + $0xa0] sm:$0xf]
  %v2374 = vld [vmem:[#allocation2 + $0xa8] sm:$0xf]
  %2376 = vset.pattern.permute.xlu0 0
  %2377 = vperm.xlu0 %2376, %v2364
  %v2378 = vpop.permute.xlu0 %2377
  %vm2380 = vcmask 588800
  %v2382 = vsel %vm2380, %v2363, 0
  %vm2384 = vcmask 1043456
  %v2386 = vsel %vm2384, %v2373, 0
  %v2389 = vsel %vm2384, %v2374, 0
  %2391 = vmatprep.subr.bf16.mxu0 %v2366
  %2392 = vmatpush1.bf16.msra.mxu0 %v2365
  %2393 = vmatprep.subr.bf16.mxu0 %v2368
  %2394 = vmatpush1.bf16.msra.mxu0 %v2367
  %2395 = vmatprep.subr.bf16.mxu0 %v2370
  %2396 = vmatpush1.bf16.msra.mxu0 %v2369
  %2397 = vmatprep.subr.bf16.mxu0 %v2372
  %2398 = vmatpush1.bf16.msra.mxu0 %v2371
  %2399 = vmatprep.subr.bf16.mxu0 %v2389
  %2400 = vmatpush1.bf16.msra.mxu0 %v2386
  %2401 = vmatprep.subr.bf16.mxu0 0
  %2402 = vmatpush1.bf16.msra.mxu0 0
  %2403 = vmatprep.subr.bf16.mxu0 0
  %2404 = vmatpush1.bf16.msra.mxu0 0
  %2405 = vmatprep.subr.bf16.mxu0 0
  %2406 = vmatpush1.bf16.msra.mxu0 0
  %2407 = vmatprep.subr.bf16.mxu0 0
  %2408 = vmatpush1.bf16.msra.mxu0 0
  %2409 = vmatprep.subr.bf16.mxu0 0
  %2410 = vmatpush1.bf16.msra.mxu0 0
  %2411 = vmatprep.subr.bf16.mxu0 0
  %2412 = vmatpush1.bf16.msra.mxu0 0
  %2413 = vmatprep.subr.bf16.mxu0 0
  %2414 = vmatpush1.bf16.msra.mxu0 0
  %2415 = vmatprep.subr.bf16.mxu0 0
  %2416 = vmatpush1.bf16.msra.mxu0 0
  %2417 = vmatprep.subr.bf16.mxu0 0
  %2418 = vmatpush1.bf16.msra.mxu0 0
  %2419 = vmatprep.subr.bf16.mxu0 0
  %2420 = vmatpush1.bf16.msra.mxu0 0
  %2421 = vmatprep.subr.bf16.mxu0 0
  %2422 = vmatpush1.bf16.msra.mxu0 0
  %2423 = vmatprep.mubr.bf16.mxu0 0
  %2424 = vmatmul.mubr.bf16.gmra.mrb[0].mxu0 %v2382
  %v2425 = vpop.f32.mrb[0].mxu0
  %v2426 = vadd.f32 %v2378, %v2425
  %v2427 = vpop.f32.mrb[0].mxu0
  %v2428 = vadd.f32 %v2378, %v2427
  %v2429 = vpop.f32.mrb[0].mxu0
  %v2430 = vpop.f32.mrb[0].mxu0
  %2431 = vdwg.mxu0
  %v2432 = vmax.f32 %v2426, 0.0
  %v2433 = vmax.f32 %v2428, 0.0
  %v2434 = vld [vmem:[%s2] sm:$0xf]
  %vm2435 = vcmask 191488
  %2436 = vst.msk [vmem:[#allocation2] sm:$0xf] %vm2435, %v2434
  %v2438 = vunpack.c.l.b16 %v2434
  %v2439 = vpack.c.b16 %v2438, %v2438
  %2440 = vrot.lane.b32.xlu0 %v2439, 127
  %v2441 = vpop.permute.xlu0 %2440
  %vm2443 = vcmask 195588
  %2444 = vst.msk [vmem:[#allocation2] sm:$0xf0] %vm2443, %v2441
  %2445 = vrot.lane.b32.xlu0 %v2439, 126
  %v2446 = vpop.permute.xlu0 %2445
  %2448 = vst.msk [vmem:[#allocation2 + $0x28] sm:$0xf] %vm2435, %v2446
  %2449 = vrot.lane.b32.xlu0 %v2439, 122
  %v2450 = vpop.permute.xlu0 %2449
  %2452 = vst.msk [vmem:[#allocation2 + $0x28] sm:$0xf0] %vm2443, %v2450
  %2453 = vrot.lane.b32.xlu0 %v2439, 121
  %v2454 = vpop.permute.xlu0 %2453
  %2456 = vst.msk [vmem:[#allocation2 + $0x50] sm:$0xf] %vm2435, %v2454
  %2457 = vrot.lane.b32.xlu0 %v2439, 120
  %v2458 = vpop.permute.xlu0 %2457
  %2460 = vst.msk [vmem:[#allocation2 + $0x50] sm:$0xf0] %vm2443, %v2458
  %2461 = vrot.lane.b32.xlu0 %v2439, 116
  %v2462 = vpop.permute.xlu0 %2461
  %2464 = vst.msk [vmem:[#allocation2 + $0x78] sm:$0xf] %vm2435, %v2462
  %2465 = vrot.lane.b32.xlu0 %v2439, 115
  %v2466 = vpop.permute.xlu0 %2465
  %2468 = vst.msk [vmem:[#allocation2 + $0x78] sm:$0xf0] %vm2443, %v2466
  %2469 = vrot.lane.b32.xlu0 %v2439, 114
  %v2470 = vpop.permute.xlu0 %2469
  %2472 = vst.msk [vmem:[#allocation2 + $0xa0] sm:$0xf] %vm2435, %v2470
  %s2473 = scalar_lea.vmem %s2, 4
  %v2474 = vld [vmem:[%s2473] sm:$0xf]
  %v2476 = vunpack.c.l.b16 %v2474
  %v2477 = vpack.c.b16 %v2476, %v2476
  %2478 = vrot.lane.b32.xlu0 %v2477, 24
  %v2479 = vpop.permute.xlu0 %2478
  %vm2481 = vcmask 388288
  %2482 = vst.msk [vmem:[#allocation2] sm:$0xf] %vm2481, %v2479
  %2483 = vrot.lane.b32.xlu0 %v2477, 23
  %v2484 = vpop.permute.xlu0 %2483
  %vm2486 = vcmask 392388
  %2487 = vst.msk [vmem:[#allocation2] sm:$0xf0] %vm2486, %v2484
  %2488 = vrot.lane.b32.xlu0 %v2477, 22
  %v2489 = vpop.permute.xlu0 %2488
  %2491 = vst.msk [vmem:[#allocation2 + $0x28] sm:$0xf] %vm2481, %v2489
  %2492 = vrot.lane.b32.xlu0 %v2477, 18
  %v2493 = vpop.permute.xlu0 %2492
  %2495 = vst.msk [vmem:[#allocation2 + $0x28] sm:$0xf0] %vm2486, %v2493
  %2496 = vrot.lane.b32.xlu0 %v2477, 17
  %v2497 = vpop.permute.xlu0 %2496
  %2499 = vst.msk [vmem:[#allocation2 + $0x50] sm:$0xf] %vm2481, %v2497
  %2500 = vrot.lane.b32.xlu0 %v2477, 16
  %v2501 = vpop.permute.xlu0 %2500
  %2503 = vst.msk [vmem:[#allocation2 + $0x50] sm:$0xf0] %vm2486, %v2501
  %2504 = vrot.lane.b32.xlu0 %v2477, 12
  %v2505 = vpop.permute.xlu0 %2504
  %2507 = vst.msk [vmem:[#allocation2 + $0x78] sm:$0xf] %vm2481, %v2505
  %2508 = vrot.lane.b32.xlu0 %v2477, 11
  %v2509 = vpop.permute.xlu0 %2508
  %2511 = vst.msk [vmem:[#allocation2 + $0x78] sm:$0xf0] %vm2486, %v2509
  %2512 = vrot.lane.b32.xlu0 %v2477, 10
  %v2513 = vpop.permute.xlu0 %2512
  %2515 = vst.msk [vmem:[#allocation2 + $0xa0] sm:$0xf] %vm2481, %v2513
  %v2516 = vld [vmem:[%s3 + $0x40] sm:$0xf]
  %v2517 = vld [vmem:[%s4 + $0x20] sm:$0xff]
  %v2518 = vld [vmem:[#allocation2] sm:$0xff]
  %v2519 = vld [vmem:[#allocation2 + $0x28] sm:$0xff]
  %v2520 = vld [vmem:[#allocation2 + $0x50] sm:$0xff]
  %v2521 = vld [vmem:[#allocation2 + $0x78] sm:$0xff]
  %v2522 = vld [vmem:[#allocation2 + $0xa0] sm:$0xf]
  %2524 = vset.pattern.permute.xlu0 0
  %2525 = vperm.xlu0 %2524, %v2517
  %v2526 = vpop.permute.xlu0 %2525
  %v2529 = vsel %vm2380, %v2516, 0
  %v2532 = vsel %vm2384, %v2522, 0
  %2534 = vmatprep.subr.bf16.mxu0 0
  %2535 = vmatpush1.bf16.msra.mxu0 %v2518
  %2536 = vmatprep.subr.bf16.mxu0 0
  %2537 = vmatpush1.bf16.msra.mxu0 %v2519
  %2538 = vmatprep.subr.bf16.mxu0 0
  %2539 = vmatpush1.bf16.msra.mxu0 %v2520
  %2540 = vmatprep.subr.bf16.mxu0 0
  %2541 = vmatpush1.bf16.msra.mxu0 %v2521
  %2542 = vmatprep.subr.bf16.mxu0 0
  %2543 = vmatpush1.bf16.msra.mxu0 %v2532
  %2544 = vmatprep.subr.bf16.mxu0 0
  %2545 = vmatpush1.bf16.msra.mxu0 0
  %2546 = vmatprep.subr.bf16.mxu0 0
  %2547 = vmatpush1.bf16.msra.mxu0 0
  %2548 = vmatprep.subr.bf16.mxu0 0
  %2549 = vmatpush1.bf16.msra.mxu0 0
  %2550 = vmatprep.subr.bf16.mxu0 0
  %2551 = vmatpush1.bf16.msra.mxu0 0
  %2552 = vmatprep.subr.bf16.mxu0 0
  %2553 = vmatpush1.bf16.msra.mxu0 0
  %2554 = vmatprep.subr.bf16.mxu0 0
  %2555 = vmatpush1.bf16.msra.mxu0 0
  %2556 = vmatprep.subr.bf16.mxu0 0
  %2557 = vmatpush1.bf16.msra.mxu0 0
  %2558 = vmatprep.subr.bf16.mxu0 0
  %2559 = vmatpush1.bf16.msra.mxu0 0
  %2560 = vmatprep.subr.bf16.mxu0 0
  %2561 = vmatpush1.bf16.msra.mxu0 0
  %2562 = vmatprep.subr.bf16.mxu0 0
  %2563 = vmatpush1.bf16.msra.mxu0 0
  %2564 = vmatprep.subr.bf16.mxu0 0
  %2565 = vmatpush1.bf16.msra.mxu0 0
  %2566 = vmatprep.mubr.bf16.mxu0 0
  %2567 = vmatmul.mubr.bf16.gmra.mrb[0].mxu0 %v2529
  %v2568 = vpop.f32.mrb[0].mxu0
  %v2569 = vadd.f32 %v2526, %v2568
  %v2570 = vpop.f32.mrb[0].mxu0
  %v2571 = vpop.f32.mrb[0].mxu0
  %v2572 = vpop.f32.mrb[0].mxu0
  %2573 = vdwg.mxu0
  %v2574 = vmax.f32 %v2569, 0.0
  %v2575 = vpack.c.bf16 %v2574, %v2574
  %v2576 = vld [vmem:[%s5 + $0x270] sm:$0xff]
  %v2577 = vld [vmem:[%s5 + $0x278] sm:$0xff]
  %v2578 = vld [vmem:[%s5 + $0x280] sm:$0xff]
  %v2579 = vld [vmem:[%s5 + $0x288] sm:$0xff]
  %v2580 = vld [vmem:[%s5 + $0x290] sm:$0xff]
  %v2581 = vld [vmem:[%s5 + $0x298] sm:$0xff]
  %v2588 = vunpack.c.l.b16 %v2576
  %v2589 = vunpack.c.h.b16 %v2576
  %v2590 = vunpack.c.l.b16 %v2577
  %v2591 = vunpack.c.h.b16 %v2577
  %v2592 = vunpack.c.l.b16 %v2578
  %v2593 = vunpack.c.h.b16 %v2578
  %v2594 = vunpack.c.l.b16 %v2579
  %v2595 = vunpack.c.h.b16 %v2579
  %v2596 = vunpack.c.l.b16 %v2580
  %v2597 = vunpack.c.h.b16 %v2580
  %v2598 = vunpack.c.l.b16 %v2581
  %v2599 = vunpack.c.h.b16 %v2581
  %v2600 = vpack.c.b16 %v2590, %v2588
  %v2601 = vpack.c.b16 %v2591, %v2589
  %v2602 = vpack.c.b16 %v2594, %v2592
  %v2603 = vpack.c.b16 %v2595, %v2593
  %v2604 = vpack.c.b16 %v2598, %v2596
  %v2605 = vpack.c.b16 %v2599, %v2597
  %vm2612 = vcmask 392192
  %v2614 = vsel %vm2612, %v2575, 0
  %2616 = vmatprep.subr.bf16.mxu0 %v2601
  %2617 = vmatpush1.bf16.msra.mxu0 %v2600
  %2618 = vmatprep.subr.bf16.mxu0 %v2603
  %2619 = vmatpush1.bf16.msra.mxu0 %v2602
  %2620 = vmatprep.subr.bf16.mxu0 %v2605
  %2621 = vmatpush1.bf16.msra.mxu0 %v2604
  %2622 = vmatprep.subr.bf16.mxu0 0
  %2623 = vmatpush1.bf16.msra.mxu0 0
  %2624 = vmatprep.subr.bf16.mxu0 0
  %2625 = vmatpush1.bf16.msra.mxu0 0
  %2626 = vmatprep.subr.bf16.mxu0 0
  %2627 = vmatpush1.bf16.msra.mxu0 0
  %2628 = vmatprep.subr.bf16.mxu0 0
  %2629 = vmatpush1.bf16.msra.mxu0 0
  %2630 = vmatprep.subr.bf16.mxu0 0
  %2631 = vmatpush1.bf16.msra.mxu0 0
  %2632 = vmatprep.subr.bf16.mxu0 0
  %2633 = vmatpush1.bf16.msra.mxu0 0
  %2634 = vmatprep.subr.bf16.mxu0 0
  %2635 = vmatpush1.bf16.msra.mxu0 0
  %2636 = vmatprep.subr.bf16.mxu0 0
  %2637 = vmatpush1.bf16.msra.mxu0 0
  %2638 = vmatprep.subr.bf16.mxu0 0
  %2639 = vmatpush1.bf16.msra.mxu0 0
  %2640 = vmatprep.subr.bf16.mxu0 0
  %2641 = vmatpush1.bf16.msra.mxu0 0
  %2642 = vmatprep.subr.bf16.mxu0 0
  %2643 = vmatpush1.bf16.msra.mxu0 0
  %2644 = vmatprep.subr.bf16.mxu0 0
  %2645 = vmatpush1.bf16.msra.mxu0 0
  %2646 = vmatprep.subr.bf16.mxu0 0
  %2647 = vmatpush1.bf16.msra.mxu0 0
  %2648 = vmatprep.mubr.bf16.mxu0 0
  %2649 = vmatmul.mubr.bf16.gmra.mrb[0].mxu0 %v2614
  %v2650 = vpop.f32.mrb[0].mxu0
  %v2651 = vadd.f32 0.0, %v2650
  %v2652 = vpop.f32.mrb[0].mxu0
  %v2653 = vadd.f32 0.0, %v2652
  %v2654 = vpop.f32.mrb[0].mxu0
  %v2655 = vpop.f32.mrb[0].mxu0
  %2656 = vdwg.mxu0
  %v2657 = vpack.c.bf16 %v2651, %v2651
  %v2658 = vpack.c.bf16 %v2653, %v2653
  %2659 = vst [vmem:[#allocation3] sm:$0xf] %v2657
  %vm2660 = vcmask 748544
  %2661 = vst.msk [vmem:[#allocation3 + $0x8] sm:$0xf] %vm2660, %v2658
  %v2662 = vld [vmem:[#allocation3] sm:$0xf]
  %2663 = vst.msk [vmem:[#allocation2] sm:$0xf] %vm2271, %v2662
  %v2665 = vrot.slane %v2662, 4
  %2666 = vrot.lane.b32.xlu0 %v2665, 127
  %v2667 = vpop.permute.xlu0 %2666
  %2669 = vst.msk [vmem:[#allocation2] sm:$0xf0] %vm2279, %v2667
  %2670 = vrot.lane.b32.xlu0 %v2662, 126
  %v2671 = vpop.permute.xlu0 %2670
  %2673 = vst.msk [vmem:[#allocation2 + $0x28] sm:$0xf] %vm2271, %v2671
  %2674 = vrot.lane.b32.xlu0 %v2665, 118
  %v2675 = vpop.permute.xlu0 %2674
  %2677 = vst.msk [vmem:[#allocation2 + $0x28] sm:$0xf0] %vm2279, %v2675
  %2678 = vrot.lane.b32.xlu0 %v2662, 117
  %v2679 = vpop.permute.xlu0 %2678
  %2681 = vst.msk [vmem:[#allocation2 + $0x50] sm:$0xf] %vm2271, %v2679
  %2682 = vrot.lane.b32.xlu0 %v2665, 116
  %v2683 = vpop.permute.xlu0 %2682
  %2685 = vst.msk [vmem:[#allocation2 + $0x50] sm:$0xf0] %vm2279, %v2683
  %2686 = vrot.lane.b32.xlu0 %v2662, 108
  %v2687 = vpop.permute.xlu0 %2686
  %2689 = vst.msk [vmem:[#allocation2 + $0x78] sm:$0xf] %vm2271, %v2687
  %2690 = vrot.lane.b32.xlu0 %v2665, 107
  %v2691 = vpop.permute.xlu0 %2690
  %2693 = vst.msk [vmem:[#allocation2 + $0x78] sm:$0xf0] %vm2279, %v2691
  %2694 = vrot.lane.b32.xlu0 %v2662, 106
  %v2695 = vpop.permute.xlu0 %2694
  %2697 = vst.msk [vmem:[#allocation2 + $0xa0] sm:$0xf] %vm2271, %v2695
  %v2698 = vld [vmem:[#allocation3] sm:$0xf]
  %v2699 = vld [vmem:[#allocation3 + $0x8] sm:$0xf]
  %2702 = vrot.lane.b32.xlu0 %v2698, 98
  %v2703 = vpop.permute.xlu0 %2702
  %2704 = vrot.lane.b32.xlu0 %v2699, 98
  %v2705 = vpop.permute.xlu0 %2704
  %v2706 = vsel %vm2123, %v2703, %v2705
  %2709 = vst.msk [vmem:[#allocation2] sm:$0xf] %vm2317, %v2706
  %2710 = vst.msk [vmem:[#allocation2 + $0x8] sm:$0xf] %vm2319, %v2705
  %v2711 = vrot.slane %v2698, 4
  %v2712 = vrot.slane %v2699, 4
  %2713 = vrot.lane.b32.xlu0 %v2711, 97
  %v2714 = vpop.permute.xlu0 %2713
  %2715 = vrot.lane.b32.xlu0 %v2712, 97
  %v2716 = vpop.permute.xlu0 %2715
  %v2717 = vsel %vm2135, %v2714, %v2716
  %2720 = vst.msk [vmem:[#allocation2] sm:$0xf0] %vm2324, %v2717
  %2721 = vst.msk [vmem:[#allocation2 + $0x8] sm:$0xf0] %vm2326, %v2716
  %2722 = vrot.lane.b32.xlu0 %v2698, 96
  %v2723 = vpop.permute.xlu0 %2722
  %2724 = vrot.lane.b32.xlu0 %v2699, 96
  %v2725 = vpop.permute.xlu0 %2724
  %v2726 = vsel %vm2145, %v2723, %v2725
  %2729 = vst.msk [vmem:[#allocation2 + $0x28] sm:$0xf] %vm2317, %v2726
  %2730 = vst.msk [vmem:[#allocation2 + $0x30] sm:$0xf] %vm2319, %v2725
  %2731 = vrot.lane.b32.xlu0 %v2711, 88
  %v2732 = vpop.permute.xlu0 %2731
  %2733 = vrot.lane.b32.xlu0 %v2712, 88
  %v2734 = vpop.permute.xlu0 %2733
  %v2735 = vsel %vm189, %v2732, %v2734
  %2738 = vst.msk [vmem:[#allocation2 + $0x28] sm:$0xf0] %vm2324, %v2735
  %2739 = vst.msk [vmem:[#allocation2 + $0x30] sm:$0xf0] %vm2326, %v2734
  %2740 = vrot.lane.b32.xlu0 %v2698, 87
  %v2741 = vpop.permute.xlu0 %2740
  %2742 = vrot.lane.b32.xlu0 %v2699, 87
  %v2743 = vpop.permute.xlu0 %2742
  %v2744 = vsel %vm204, %v2741, %v2743
  %2747 = vst.msk [vmem:[#allocation2 + $0x50] sm:$0xf] %vm2317, %v2744
  %2748 = vst.msk [vmem:[#allocation2 + $0x58] sm:$0xf] %vm2319, %v2743
  %2749 = vrot.lane.b32.xlu0 %v2711, 86
  %v2750 = vpop.permute.xlu0 %2749
  %2751 = vrot.lane.b32.xlu0 %v2712, 86
  %v2752 = vpop.permute.xlu0 %2751
  %v2753 = vsel %vm219, %v2750, %v2752
  %2756 = vst.msk [vmem:[#allocation2 + $0x50] sm:$0xf0] %vm2324, %v2753
  %2757 = vst.msk [vmem:[#allocation2 + $0x58] sm:$0xf0] %vm2326, %v2752
  %2758 = vrot.lane.b32.xlu0 %v2699, 78
  %v2759 = vpop.permute.xlu0 %2758
  %2761 = vst.msk [vmem:[#allocation2 + $0x78] sm:$0xf] %vm2317, %v2759
  %2762 = vst.msk [vmem:[#allocation2 + $0x80] sm:$0xf] %vm2319, %v2759
  %2763 = vrot.lane.b32.xlu0 %v2712, 77
  %v2764 = vpop.permute.xlu0 %2763
  %2766 = vst.msk [vmem:[#allocation2 + $0x78] sm:$0xf0] %vm2324, %v2764
  %2767 = vst.msk [vmem:[#allocation2 + $0x80] sm:$0xf0] %vm2326, %v2764
  %2768 = vrot.lane.b32.xlu0 %v2699, 76
  %v2769 = vpop.permute.xlu0 %2768
  %2771 = vst.msk [vmem:[#allocation2 + $0xa0] sm:$0xf] %vm2317, %v2769
  %2772 = vst.msk [vmem:[#allocation2 + $0xa8] sm:$0xf] %vm2319, %v2769
  %v2773 = vld [vmem:[%s3 + $0x50] sm:$0xf]
  %v2774 = vld [vmem:[%s4 + $0x28] sm:$0xff]
  %v2775 = vld [vmem:[#allocation2] sm:$0xff]
  %v2776 = vld [vmem:[#allocation2 + $0x8] sm:$0xff]
  %v2777 = vld [vmem:[#allocation2 + $0x28] sm:$0xff]
  %v2778 = vld [vmem:[#allocation2 + $0x30] sm:$0xff]
  %v2779 = vld [vmem:[#allocation2 + $0x50] sm:$0xff]
  %v2780 = vld [vmem:[#allocation2 + $0x58] sm:$0xff]
  %v2781 = vld [vmem:[#allocation2 + $0x78] sm:$0xff]
  %v2782 = vld [vmem:[#allocation2 + $0x80] sm:$0xff]
  %v2783 = vld [vmem:[#allocation2 + $0xa0] sm:$0xf]
  %v2784 = vld [vmem:[#allocation2 + $0xa8] sm:$0xf]
  %2786 = vset.pattern.permute.xlu0 0
  %2787 = vperm.xlu0 %2786, %v2774
  %v2788 = vpop.permute.xlu0 %2787
  %v2791 = vsel %vm2380, %v2773, 0
  %v2794 = vsel %vm2384, %v2783, 0
  %v2797 = vsel %vm2384, %v2784, 0
  %2799 = vmatprep.subr.bf16.mxu0 %v2776
  %2800 = vmatpush1.bf16.msra.mxu0 %v2775
  %2801 = vmatprep.subr.bf16.mxu0 %v2778
  %2802 = vmatpush1.bf16.msra.mxu0 %v2777
  %2803 = vmatprep.subr.bf16.mxu0 %v2780
  %2804 = vmatpush1.bf16.msra.mxu0 %v2779
  %2805 = vmatprep.subr.bf16.mxu0 %v2782
  %2806 = vmatpush1.bf16.msra.mxu0 %v2781
  %2807 = vmatprep.subr.bf16.mxu0 %v2797
  %2808 = vmatpush1.bf16.msra.mxu0 %v2794
  %2809 = vmatprep.subr.bf16.mxu0 0
  %2810 = vmatpush1.bf16.msra.mxu0 0
  %2811 = vmatprep.subr.bf16.mxu0 0
  %2812 = vmatpush1.bf16.msra.mxu0 0
  %2813 = vmatprep.subr.bf16.mxu0 0
  %2814 = vmatpush1.bf16.msra.mxu0 0
  %2815 = vmatprep.subr.bf16.mxu0 0
  %2816 = vmatpush1.bf16.msra.mxu0 0
  %2817 = vmatprep.subr.bf16.mxu0 0
  %2818 = vmatpush1.bf16.msra.mxu0 0
  %2819 = vmatprep.subr.bf16.mxu0 0
  %2820 = vmatpush1.bf16.msra.mxu0 0
  %2821 = vmatprep.subr.bf16.mxu0 0
  %2822 = vmatpush1.bf16.msra.mxu0 0
  %2823 = vmatprep.subr.bf16.mxu0 0
  %2824 = vmatpush1.bf16.msra.mxu0 0
  %2825 = vmatprep.subr.bf16.mxu0 0
  %2826 = vmatpush1.bf16.msra.mxu0 0
  %2827 = vmatprep.subr.bf16.mxu0 0
  %2828 = vmatpush1.bf16.msra.mxu0 0
  %2829 = vmatprep.subr.bf16.mxu0 0
  %2830 = vmatpush1.bf16.msra.mxu0 0
  %2831 = vmatprep.mubr.bf16.mxu0 0
  %2832 = vmatmul.mubr.bf16.gmra.mrb[0].mxu0 %v2791
  %v2833 = vpop.f32.mrb[0].mxu0
  %v2834 = vadd.f32 %v2788, %v2833
  %v2835 = vpop.f32.mrb[0].mxu0
  %v2836 = vadd.f32 %v2788, %v2835
  %v2837 = vpop.f32.mrb[0].mxu0
  %v2838 = vpop.f32.mrb[0].mxu0
  %2839 = vdwg.mxu0
  %v2840 = vmax.f32 %v2834, 0.0
  %v2841 = vmax.f32 %v2836, 0.0
  %v2842 = vld [vmem:[%s3 + $0x60] sm:$0xf]
  %v2843 = vld [vmem:[%s4 + $0x30] sm:$0xff]
  %v2844 = vpack.c.bf16 %v2268, %v2268
  %v2845 = vpack.c.bf16 %v2269, %v2269
  %v2846 = vpack.c.bf16 %v2432, %v2432
  %v2847 = vpack.c.bf16 %v2433, %v2433
  %v2849 = vunpack.c.l.b16 %v2842
  %v2850 = vpack.c.b16 %v2849, %v2849
  %2851 = vrot.lane.b32.xlu0 %v2850, 120
  %v2852 = vpop.permute.xlu0 %2851
  %vm2853 = vcmask 64512
  %v2855 = vsel %vm2853, %v2852, 0
  %v2858 = vsel %vm2384, %v2846, 0
  %v2861 = vsel %vm2384, %v2847, 0
  %2863 = vmatprep.subr.bf16.mxu0 %v2861
  %2864 = vmatpush1.bf16.msra.mxu0 %v2858
  %2865 = vmatprep.subr.bf16.mxu0 0
  %2866 = vmatpush1.bf16.msra.mxu0 0
  %2867 = vmatprep.subr.bf16.mxu0 0
  %2868 = vmatpush1.bf16.msra.mxu0 0
  %2869 = vmatprep.subr.bf16.mxu0 0
  %2870 = vmatpush1.bf16.msra.mxu0 0
  %2871 = vmatprep.subr.bf16.mxu0 0
  %2872 = vmatpush1.bf16.msra.mxu0 0
  %2873 = vmatprep.subr.bf16.mxu0 0
  %2874 = vmatpush1.bf16.msra.mxu0 0
  %2875 = vmatprep.subr.bf16.mxu0 0
  %2876 = vmatpush1.bf16.msra.mxu0 0
  %2877 = vmatprep.subr.bf16.mxu0 0
  %2878 = vmatpush1.bf16.msra.mxu0 0
  %2879 = vmatprep.subr.bf16.mxu0 0
  %2880 = vmatpush1.bf16.msra.mxu0 0
  %2881 = vmatprep.subr.bf16.mxu0 0
  %2882 = vmatpush1.bf16.msra.mxu0 0
  %2883 = vmatprep.subr.bf16.mxu0 0
  %2884 = vmatpush1.bf16.msra.mxu0 0
  %2885 = vmatprep.subr.bf16.mxu0 0
  %2886 = vmatpush1.bf16.msra.mxu0 0
  %2887 = vmatprep.subr.bf16.mxu0 0
  %2888 = vmatpush1.bf16.msra.mxu0 0
  %2889 = vmatprep.subr.bf16.mxu0 0
  %2890 = vmatpush1.bf16.msra.mxu0 0
  %2891 = vmatprep.subr.bf16.mxu0 0
  %2892 = vmatpush1.bf16.msra.mxu0 0
  %2893 = vmatprep.subr.bf16.mxu0 0
  %2894 = vmatpush1.bf16.msra.mxu0 0
  %2895 = vmatprep.mubr.bf16.mxu0 0
  %2896 = vmatmul.mubr.bf16.gmra.mrb[0].mxu0 %v2855
  %v2897 = vpop.f32.mrb[0].mxu0
  %v2898 = vadd.f32 0.0, %v2897
  %v2899 = vpop.f32.mrb[0].mxu0
  %v2900 = vadd.f32 0.0, %v2899
  %v2901 = vpop.f32.mrb[0].mxu0
  %v2902 = vpop.f32.mrb[0].mxu0
  %2903 = vdwg.mxu0
  %v2905 = vsel %vm2853, %v2842, 0
  %v2908 = vsel %vm2384, %v2844, 0
  %v2911 = vsel %vm2384, %v2845, 0
  %2913 = vmatprep.subr.bf16.mxu0 %v2911
  %2914 = vmatpush1.bf16.msra.mxu0 %v2908
  %2915 = vmatprep.subr.bf16.mxu0 0
  %2916 = vmatpush1.bf16.msra.mxu0 0
  %2917 = vmatprep.subr.bf16.mxu0 0
  %2918 = vmatpush1.bf16.msra.mxu0 0
  %2919 = vmatprep.subr.bf16.mxu0 0
  %2920 = vmatpush1.bf16.msra.mxu0 0
  %2921 = vmatprep.subr.bf16.mxu0 0
  %2922 = vmatpush1.bf16.msra.mxu0 0
  %2923 = vmatprep.subr.bf16.mxu0 0
  %2924 = vmatpush1.bf16.msra.mxu0 0
  %2925 = vmatprep.subr.bf16.mxu0 0
  %2926 = vmatpush1.bf16.msra.mxu0 0
  %2927 = vmatprep.subr.bf16.mxu0 0
  %2928 = vmatpush1.bf16.msra.mxu0 0
  %2929 = vmatprep.subr.bf16.mxu0 0
  %2930 = vmatpush1.bf16.msra.mxu0 0
  %2931 = vmatprep.subr.bf16.mxu0 0
  %2932 = vmatpush1.bf16.msra.mxu0 0
  %2933 = vmatprep.subr.bf16.mxu0 0
  %2934 = vmatpush1.bf16.msra.mxu0 0
  %2935 = vmatprep.subr.bf16.mxu0 0
  %2936 = vmatpush1.bf16.msra.mxu0 0
  %2937 = vmatprep.subr.bf16.mxu0 0
  %2938 = vmatpush1.bf16.msra.mxu0 0
  %2939 = vmatprep.subr.bf16.mxu0 0
  %2940 = vmatpush1.bf16.msra.mxu0 0
  %2941 = vmatprep.subr.bf16.mxu0 0
  %2942 = vmatpush1.bf16.msra.mxu0 0
  %2943 = vmatprep.subr.bf16.mxu0 0
  %2944 = vmatpush1.bf16.msra.mxu0 0
  %2945 = vmatprep.mubr.bf16.mxu0 0
  %2946 = vmatmul.mubr.bf16.gmra.mrb[0].mxu0 %v2905
  %v2947 = vpop.f32.mrb[0].mxu0
  %v2948 = vadd.f32 %v2898, %v2947
  %v2949 = vpop.f32.mrb[0].mxu0
  %v2950 = vadd.f32 %v2900, %v2949
  %v2951 = vpop.f32.mrb[0].mxu0
  %v2952 = vpop.f32.mrb[0].mxu0
  %2953 = vdwg.mxu0
  %v2954 = vpack.c.bf16 %v2840, %v2840
  %v2955 = vpack.c.bf16 %v2841, %v2841
  %2956 = vrot.lane.b32.xlu0 %v2850, 112
  %v2957 = vpop.permute.xlu0 %2956
  %v2959 = vsel %vm2853, %v2957, 0
  %v2962 = vsel %vm2384, %v2954, 0
  %v2965 = vsel %vm2384, %v2955, 0
  %2967 = vmatprep.subr.bf16.mxu0 %v2965
  %2968 = vmatpush1.bf16.msra.mxu0 %v2962
  %2969 = vmatprep.subr.bf16.mxu0 0
  %2970 = vmatpush1.bf16.msra.mxu0 0
  %2971 = vmatprep.subr.bf16.mxu0 0
  %2972 = vmatpush1.bf16.msra.mxu0 0
  %2973 = vmatprep.subr.bf16.mxu0 0
  %2974 = vmatpush1.bf16.msra.mxu0 0
  %2975 = vmatprep.subr.bf16.mxu0 0
  %2976 = vmatpush1.bf16.msra.mxu0 0
  %2977 = vmatprep.subr.bf16.mxu0 0
  %2978 = vmatpush1.bf16.msra.mxu0 0
  %2979 = vmatprep.subr.bf16.mxu0 0
  %2980 = vmatpush1.bf16.msra.mxu0 0
  %2981 = vmatprep.subr.bf16.mxu0 0
  %2982 = vmatpush1.bf16.msra.mxu0 0
  %2983 = vmatprep.subr.bf16.mxu0 0
  %2984 = vmatpush1.bf16.msra.mxu0 0
  %2985 = vmatprep.subr.bf16.mxu0 0
  %2986 = vmatpush1.bf16.msra.mxu0 0
  %2987 = vmatprep.subr.bf16.mxu0 0
  %2988 = vmatpush1.bf16.msra.mxu0 0
  %2989 = vmatprep.subr.bf16.mxu0 0
  %2990 = vmatpush1.bf16.msra.mxu0 0
  %2991 = vmatprep.subr.bf16.mxu0 0
  %2992 = vmatpush1.bf16.msra.mxu0 0
  %2993 = vmatprep.subr.bf16.mxu0 0
  %2994 = vmatpush1.bf16.msra.mxu0 0
  %2995 = vmatprep.subr.bf16.mxu0 0
  %2996 = vmatpush1.bf16.msra.mxu0 0
  %2997 = vmatprep.subr.bf16.mxu0 0
  %2998 = vmatpush1.bf16.msra.mxu0 0
  %2999 = vmatprep.mubr.bf16.mxu0 0
  %3000 = vmatmul.mubr.bf16.gmra.mrb[0].mxu0 %v2959
  %v3001 = vpop.f32.mrb[0].mxu0
  %v3002 = vadd.f32 0.0, %v3001
  %v3003 = vpop.f32.mrb[0].mxu0
  %v3004 = vadd.f32 0.0, %v3003
  %v3005 = vpop.f32.mrb[0].mxu0
  %v3006 = vpop.f32.mrb[0].mxu0
  %3007 = vdwg.mxu0
  %v3008 = vadd.f32 %v2948, %v3002
  %v3009 = vadd.f32 %v2950, %v3004
  %3011 = vset.pattern.permute.xlu0 0
  %3012 = vperm.xlu0 %3011, %v2843
  %v3013 = vpop.permute.xlu0 %3012
  %v3015 = vadd.f32 %v3008, %v3013
  %v3016 = vadd.f32 %v3009, %v3013
  %v3017 = vmax.f32 %v3015, 0.0
  %v3018 = vmax.f32 %v3016, 0.0
  %v3019 = vpack.c.bf16 %v3017, %v3017
  %v3020 = vpack.c.bf16 %v3018, %v3018
  %v3021 = vld [vmem:[%s5 + $0x2a0] sm:$0xff]
  %v3022 = vld [vmem:[%s5 + $0x2a8] sm:$0xff]
  %v3023 = vld [vmem:[%s5 + $0x2b0] sm:$0xff]
  %v3024 = vld [vmem:[%s5 + $0x2b8] sm:$0xff]
  %v3025 = vld [vmem:[%s5 + $0x2c0] sm:$0xff]
  %v3026 = vld [vmem:[%s5 + $0x2c8] sm:$0xff]
  %v3027 = vld [vmem:[%s5 + $0x2d0] sm:$0xff]
  %v3028 = vld [vmem:[%s5 + $0x2d8] sm:$0xff]
  %v3029 = vld [vmem:[%s5 + $0x2e0] sm:$0xff]
  %v3030 = vld [vmem:[%s5 + $0x2e8] sm:$0xff]
  %v3031 = vld [vmem:[%s5 + $0x2f0] sm:$0xff]
  %v3032 = vld [vmem:[%s5 + $0x2f8] sm:$0xff]
  %v3033 = vld [vmem:[%s5 + $0x300] sm:$0xff]
  %v3034 = vld [vmem:[%s5 + $0x308] sm:$0xff]
  %v3035 = vld [vmem:[%s5 + $0x310] sm:$0xff]
  %v3036 = vld [vmem:[%s5 + $0x318] sm:$0xff]
  %v3037 = vld [vmem:[%s5 + $0x320] sm:$0xff]
  %v3038 = vld [vmem:[%s5 + $0x328] sm:$0xff]
  %v3039 = vld [vmem:[%s5 + $0x330] sm:$0xff]
  %v3040 = vld [vmem:[%s5 + $0x338] sm:$0xff]
  %v3061 = vunpack.c.l.b16 %v3021
  %v3062 = vunpack.c.h.b16 %v3021
  %v3063 = vunpack.c.l.b16 %v3022
  %v3064 = vunpack.c.h.b16 %v3022
  %v3065 = vunpack.c.l.b16 %v3023
  %v3066 = vunpack.c.h.b16 %v3023
  %v3067 = vunpack.c.l.b16 %v3024
  %v3068 = vunpack.c.h.b16 %v3024
  %v3069 = vunpack.c.l.b16 %v3025
  %v3070 = vunpack.c.h.b16 %v3025
  %v3071 = vunpack.c.l.b16 %v3026
  %v3072 = vunpack.c.h.b16 %v3026
  %v3073 = vunpack.c.l.b16 %v3027
  %v3074 = vunpack.c.h.b16 %v3027
  %v3075 = vunpack.c.l.b16 %v3028
  %v3076 = vunpack.c.h.b16 %v3028
  %v3077 = vunpack.c.l.b16 %v3029
  %v3078 = vunpack.c.h.b16 %v3029
  %v3079 = vunpack.c.l.b16 %v3030
  %v3080 = vunpack.c.h.b16 %v3030
  %v3081 = vunpack.c.l.b16 %v3031
  %v3082 = vunpack.c.h.b16 %v3031
  %v3083 = vunpack.c.l.b16 %v3032
  %v3084 = vunpack.c.h.b16 %v3032
  %v3085 = vunpack.c.l.b16 %v3033
  %v3086 = vunpack.c.h.b16 %v3033
  %v3087 = vunpack.c.l.b16 %v3034
  %v3088 = vunpack.c.h.b16 %v3034
  %v3089 = vunpack.c.l.b16 %v3035
  %v3090 = vunpack.c.h.b16 %v3035
  %v3091 = vunpack.c.l.b16 %v3036
  %v3092 = vunpack.c.h.b16 %v3036
  %v3093 = vunpack.c.l.b16 %v3037
  %v3094 = vunpack.c.h.b16 %v3037
  %v3095 = vunpack.c.l.b16 %v3038
  %v3096 = vunpack.c.h.b16 %v3038
  %v3097 = vunpack.c.l.b16 %v3039
  %v3098 = vunpack.c.h.b16 %v3039
  %v3099 = vunpack.c.l.b16 %v3040
  %v3100 = vunpack.c.h.b16 %v3040
  %v3101 = vpack.c.b16 %v3063, %v3061
  %v3102 = vpack.c.b16 %v3064, %v3062
  %v3103 = vpack.c.b16 %v3067, %v3065
  %v3104 = vpack.c.b16 %v3068, %v3066
  %v3105 = vpack.c.b16 %v3071, %v3069
  %v3106 = vpack.c.b16 %v3072, %v3070
  %v3107 = vpack.c.b16 %v3075, %v3073
  %v3108 = vpack.c.b16 %v3076, %v3074
  %v3109 = vpack.c.b16 %v3079, %v3077
  %v3110 = vpack.c.b16 %v3080, %v3078
  %v3111 = vpack.c.b16 %v3083, %v3081
  %v3112 = vpack.c.b16 %v3084, %v3082
  %v3113 = vpack.c.b16 %v3087, %v3085
  %v3114 = vpack.c.b16 %v3088, %v3086
  %v3115 = vpack.c.b16 %v3091, %v3089
  %v3116 = vpack.c.b16 %v3092, %v3090
  %v3117 = vpack.c.b16 %v3095, %v3093
  %v3118 = vpack.c.b16 %v3096, %v3094
  %v3119 = vpack.c.b16 %v3099, %v3097
  %v3120 = vpack.c.b16 %v3100, %v3098
  %v3142 = vsel %vm2129, %v3020, 0
  %3144 = vmatprep.subr.bf16.mxu0 %v3102
  %3145 = vmatpush1.bf16.msra.mxu0 %v3101
  %3146 = vmatprep.subr.bf16.mxu0 %v3104
  %3147 = vmatpush1.bf16.msra.mxu0 %v3103
  %3148 = vmatprep.subr.bf16.mxu0 %v3106
  %3149 = vmatpush1.bf16.msra.mxu0 %v3105
  %3150 = vmatprep.subr.bf16.mxu0 %v3108
  %3151 = vmatpush1.bf16.msra.mxu0 %v3107
  %3152 = vmatprep.subr.bf16.mxu0 %v3110
  %3153 = vmatpush1.bf16.msra.mxu0 %v3109
  %3154 = vmatprep.subr.bf16.mxu0 %v3112
  %3155 = vmatpush1.bf16.msra.mxu0 %v3111
  %3156 = vmatprep.subr.bf16.mxu0 %v3114
  %3157 = vmatpush1.bf16.msra.mxu0 %v3113
  %3158 = vmatprep.subr.bf16.mxu0 %v3116
  %3159 = vmatpush1.bf16.msra.mxu0 %v3115
  %3160 = vmatprep.subr.bf16.mxu0 %v3118
  %3161 = vmatpush1.bf16.msra.mxu0 %v3117
  %3162 = vmatprep.subr.bf16.mxu0 %v3120
  %3163 = vmatpush1.bf16.msra.mxu0 %v3119
  %3164 = vmatprep.subr.bf16.mxu0 0
  %3165 = vmatpush1.bf16.msra.mxu0 0
  %3166 = vmatprep.subr.bf16.mxu0 0
  %3167 = vmatpush1.bf16.msra.mxu0 0
  %3168 = vmatprep.subr.bf16.mxu0 0
  %3169 = vmatpush1.bf16.msra.mxu0 0
  %3170 = vmatprep.subr.bf16.mxu0 0
  %3171 = vmatpush1.bf16.msra.mxu0 0
  %3172 = vmatprep.subr.bf16.mxu0 0
  %3173 = vmatpush1.bf16.msra.mxu0 0
  %3174 = vmatprep.subr.bf16.mxu0 0
  %3175 = vmatpush1.bf16.msra.mxu0 0
  %3176 = vmatprep.mubr.bf16.mxu0 %v3142
  %3177 = vmatmul.mubr.bf16.gmra.mrb[0].mxu0 %v3019
  %v3178 = vpop.f32.mrb[0].mxu0
  %v3179 = vadd.f32 0.0, %v3178
  %v3180 = vpop.f32.mrb[0].mxu0
  %v3181 = vadd.f32 0.0, %v3180
  %v3182 = vpop.f32.mrb[0].mxu0
  %v3183 = vpop.f32.mrb[0].mxu0
  %3184 = vdwg.mxu0
  %v3185 = vpack.c.bf16 %v3179, %v3179
  %v3186 = vpack.c.bf16 %v3181, %v3181
  %3187 = vst [vmem:[#allocation3] sm:$0xf] %v3185
  %3188 = vst.msk [vmem:[#allocation3 + $0x8] sm:$0xf] %vm2660, %v3186
  %v3189 = vld [vmem:[#allocation3] sm:$0xf]
  %3190 = vst.msk [vmem:[#allocation2] sm:$0xf] %vm2271, %v3189
  %v3192 = vrot.slane %v3189, 4
  %3193 = vrot.lane.b32.xlu0 %v3192, 127
  %v3194 = vpop.permute.xlu0 %3193
  %3196 = vst.msk [vmem:[#allocation2] sm:$0xf0] %vm2279, %v3194
  %3197 = vrot.lane.b32.xlu0 %v3189, 126
  %v3198 = vpop.permute.xlu0 %3197
  %3200 = vst.msk [vmem:[#allocation2 + $0x28] sm:$0xf] %vm2271, %v3198
  %3201 = vrot.lane.b32.xlu0 %v3192, 118
  %v3202 = vpop.permute.xlu0 %3201
  %3204 = vst.msk [vmem:[#allocation2 + $0x28] sm:$0xf0] %vm2279, %v3202
  %3205 = vrot.lane.b32.xlu0 %v3189, 117
  %v3206 = vpop.permute.xlu0 %3205
  %3208 = vst.msk [vmem:[#allocation2 + $0x50] sm:$0xf] %vm2271, %v3206
  %3209 = vrot.lane.b32.xlu0 %v3192, 116
  %v3210 = vpop.permute.xlu0 %3209
  %3212 = vst.msk [vmem:[#allocation2 + $0x50] sm:$0xf0] %vm2279, %v3210
  %3213 = vrot.lane.b32.xlu0 %v3189, 108
  %v3214 = vpop.permute.xlu0 %3213
  %3216 = vst.msk [vmem:[#allocation2 + $0x78] sm:$0xf] %vm2271, %v3214
  %3217 = vrot.lane.b32.xlu0 %v3192, 107
  %v3218 = vpop.permute.xlu0 %3217
  %3220 = vst.msk [vmem:[#allocation2 + $0x78] sm:$0xf0] %vm2279, %v3218
  %3221 = vrot.lane.b32.xlu0 %v3189, 106
  %v3222 = vpop.permute.xlu0 %3221
  %3224 = vst.msk [vmem:[#allocation2 + $0xa0] sm:$0xf] %vm2271, %v3222
  %v3225 = vld [vmem:[#allocation3] sm:$0xf]
  %v3226 = vld [vmem:[#allocation3 + $0x8] sm:$0xf]
  %3229 = vrot.lane.b32.xlu0 %v3225, 98
  %v3230 = vpop.permute.xlu0 %3229
  %3231 = vrot.lane.b32.xlu0 %v3226, 98
  %v3232 = vpop.permute.xlu0 %3231
  %v3233 = vsel %vm2123, %v3230, %v3232
  %3236 = vst.msk [vmem:[#allocation2] sm:$0xf] %vm2317, %v3233
  %3237 = vst.msk [vmem:[#allocation2 + $0x8] sm:$0xf] %vm2319, %v3232
  %v3238 = vrot.slane %v3225, 4
  %v3239 = vrot.slane %v3226, 4
  %3240 = vrot.lane.b32.xlu0 %v3238, 97
  %v3241 = vpop.permute.xlu0 %3240
  %3242 = vrot.lane.b32.xlu0 %v3239, 97
  %v3243 = vpop.permute.xlu0 %3242
  %v3244 = vsel %vm2135, %v3241, %v3243
  %3247 = vst.msk [vmem:[#allocation2] sm:$0xf0] %vm2324, %v3244
  %3248 = vst.msk [vmem:[#allocation2 + $0x8] sm:$0xf0] %vm2326, %v3243
  %3249 = vrot.lane.b32.xlu0 %v3225, 96
  %v3250 = vpop.permute.xlu0 %3249
  %3251 = vrot.lane.b32.xlu0 %v3226, 96
  %v3252 = vpop.permute.xlu0 %3251
  %v3253 = vsel %vm2145, %v3250, %v3252
  %3256 = vst.msk [vmem:[#allocation2 + $0x28] sm:$0xf] %vm2317, %v3253
  %3257 = vst.msk [vmem:[#allocation2 + $0x30] sm:$0xf] %vm2319, %v3252
  %3258 = vrot.lane.b32.xlu0 %v3238, 88
  %v3259 = vpop.permute.xlu0 %3258
  %3260 = vrot.lane.b32.xlu0 %v3239, 88
  %v3261 = vpop.permute.xlu0 %3260
  %v3262 = vsel %vm189, %v3259, %v3261
  %3265 = vst.msk [vmem:[#allocation2 + $0x28] sm:$0xf0] %vm2324, %v3262
  %3266 = vst.msk [vmem:[#allocation2 + $0x30] sm:$0xf0] %vm2326, %v3261
  %3267 = vrot.lane.b32.xlu0 %v3225, 87
  %v3268 = vpop.permute.xlu0 %3267
  %3269 = vrot.lane.b32.xlu0 %v3226, 87
  %v3270 = vpop.permute.xlu0 %3269
  %v3271 = vsel %vm204, %v3268, %v3270
  %3274 = vst.msk [vmem:[#allocation2 + $0x50] sm:$0xf] %vm2317, %v3271
  %3275 = vst.msk [vmem:[#allocation2 + $0x58] sm:$0xf] %vm2319, %v3270
  %3276 = vrot.lane.b32.xlu0 %v3238, 86
  %v3277 = vpop.permute.xlu0 %3276
  %3278 = vrot.lane.b32.xlu0 %v3239, 86
  %v3279 = vpop.permute.xlu0 %3278
  %v3280 = vsel %vm219, %v3277, %v3279
  %3283 = vst.msk [vmem:[#allocation2 + $0x50] sm:$0xf0] %vm2324, %v3280
  %3284 = vst.msk [vmem:[#allocation2 + $0x58] sm:$0xf0] %vm2326, %v3279
  %3285 = vrot.lane.b32.xlu0 %v3226, 78
  %v3286 = vpop.permute.xlu0 %3285
  %3288 = vst.msk [vmem:[#allocation2 + $0x78] sm:$0xf] %vm2317, %v3286
  %3289 = vst.msk [vmem:[#allocation2 + $0x80] sm:$0xf] %vm2319, %v3286
  %3290 = vrot.lane.b32.xlu0 %v3239, 77
  %v3291 = vpop.permute.xlu0 %3290
  %3293 = vst.msk [vmem:[#allocation2 + $0x78] sm:$0xf0] %vm2324, %v3291
  %3294 = vst.msk [vmem:[#allocation2 + $0x80] sm:$0xf0] %vm2326, %v3291
  %3295 = vrot.lane.b32.xlu0 %v3226, 76
  %v3296 = vpop.permute.xlu0 %3295
  %3298 = vst.msk [vmem:[#allocation2 + $0xa0] sm:$0xf] %vm2317, %v3296
  %3299 = vst.msk [vmem:[#allocation2 + $0xa8] sm:$0xf] %vm2319, %v3296
  %v3300 = vld [vmem:[%s3 + $0x70] sm:$0xf]
  %v3301 = vld [vmem:[%s3 + $0x80] sm:$0xf]
  %v3302 = vld [vmem:[%s4 + $0x38] sm:$0xff]
  %v3303 = vld [vmem:[%s4 + $0x40] sm:$0xff]
  %v3304 = vld [vmem:[#allocation2] sm:$0xff]
  %v3305 = vld [vmem:[#allocation2 + $0x8] sm:$0xff]
  %v3306 = vld [vmem:[#allocation2 + $0x28] sm:$0xff]
  %v3307 = vld [vmem:[#allocation2 + $0x30] sm:$0xff]
  %v3308 = vld [vmem:[#allocation2 + $0x50] sm:$0xff]
  %v3309 = vld [vmem:[#allocation2 + $0x58] sm:$0xff]
  %v3310 = vld [vmem:[#allocation2 + $0x78] sm:$0xff]
  %v3311 = vld [vmem:[#allocation2 + $0x80] sm:$0xff]
  %v3312 = vld [vmem:[#allocation2 + $0xa0] sm:$0xf]
  %v3313 = vld [vmem:[#allocation2 + $0xa8] sm:$0xf]
  %3315 = vset.pattern.permute.xlu0 0
  %3316 = vperm.xlu0 %3315, %v3302
  %v3317 = vpop.permute.xlu0 %3316
  %3320 = vset.pattern.permute.xlu0 0
  %3321 = vperm.xlu0 %3320, %v3303
  %v3322 = vpop.permute.xlu0 %3321
  %v3326 = vunpack.c.l.b16 %v3300
  %v3327 = vunpack.c.l.b16 %v3301
  %v3328 = vpack.c.b16 %v3327, %v3326
  %v3330 = vsel %vm2380, %v3328, 0
  %v3333 = vsel %vm2384, %v3312, 0
  %v3336 = vsel %vm2384, %v3313, 0
  %3338 = vmatprep.subr.bf16.mxu0 %v3305
  %3339 = vmatpush1.bf16.msra.mxu0 %v3304
  %3340 = vmatprep.subr.bf16.mxu0 %v3307
  %3341 = vmatpush1.bf16.msra.mxu0 %v3306
  %3342 = vmatprep.subr.bf16.mxu0 %v3309
  %3343 = vmatpush1.bf16.msra.mxu0 %v3308
  %3344 = vmatprep.subr.bf16.mxu0 %v3311
  %3345 = vmatpush1.bf16.msra.mxu0 %v3310
  %3346 = vmatprep.subr.bf16.mxu0 %v3336
  %3347 = vmatpush1.bf16.msra.mxu0 %v3333
  %3348 = vmatprep.subr.bf16.mxu0 0
  %3349 = vmatpush1.bf16.msra.mxu0 0
  %3350 = vmatprep.subr.bf16.mxu0 0
  %3351 = vmatpush1.bf16.msra.mxu0 0
  %3352 = vmatprep.subr.bf16.mxu0 0
  %3353 = vmatpush1.bf16.msra.mxu0 0
  %3354 = vmatprep.subr.bf16.mxu0 0
  %3355 = vmatpush1.bf16.msra.mxu0 0
  %3356 = vmatprep.subr.bf16.mxu0 0
  %3357 = vmatpush1.bf16.msra.mxu0 0
  %3358 = vmatprep.subr.bf16.mxu0 0
  %3359 = vmatpush1.bf16.msra.mxu0 0
  %3360 = vmatprep.subr.bf16.mxu0 0
  %3361 = vmatpush1.bf16.msra.mxu0 0
  %3362 = vmatprep.subr.bf16.mxu0 0
  %3363 = vmatpush1.bf16.msra.mxu0 0
  %3364 = vmatprep.subr.bf16.mxu0 0
  %3365 = vmatpush1.bf16.msra.mxu0 0
  %3366 = vmatprep.subr.bf16.mxu0 0
  %3367 = vmatpush1.bf16.msra.mxu0 0
  %3368 = vmatprep.subr.bf16.mxu0 0
  %3369 = vmatpush1.bf16.msra.mxu0 0
  %3370 = vmatprep.mubr.bf16.mxu0 0
  %3371 = vmatmul.mubr.bf16.gmra.mrb[0].mxu0 %v3330
  %v3372 = vpop.f32.mrb[0].mxu0
  %v3373 = vadd.f32 %v3317, %v3372
  %v3374 = vpop.f32.mrb[0].mxu0
  %v3375 = vadd.f32 %v3317, %v3374
  %v3376 = vpop.f32.mrb[0].mxu0
  %v3377 = vadd.f32 %v3322, %v3376
  %v3378 = vpop.f32.mrb[0].mxu0
  %v3379 = vadd.f32 %v3322, %v3378
  %3380 = vdwg.mxu0
  %v3381 = vmax.f32 %v3373, 0.0
  %v3382 = vmax.f32 %v3375, 0.0
  %v3383 = vmax.f32 %v3377, 0.0
  %v3384 = vmax.f32 %v3379, 0.0
  %v3385 = vld [vmem:[%s3 + $0x90] sm:$0x3]
  %v3386 = vpack.c.bf16 %v3383, %v3381
  %v3387 = vpack.c.bf16 %v3384, %v3382
  %v3388 = vld [vmem:[%s4 + $0x48] sm:$0x7]
  %3390 = vset.pattern.permute.xlu0 0
  %3391 = vperm.xlu0 %3390, %v3388
  %v3392 = vpop.permute.xlu0 %3391
  %v3395 = vsel %vm986, %v3385, 0
  %3397 = vmatprep.subr.bf16.mxu0 %v3387
  %3398 = vmatpush1.bf16.msra.mxu0 %v3386
  %3399 = vmatprep.subr.bf16.mxu0 0
  %3400 = vmatpush1.bf16.msra.mxu0 0
  %3401 = vmatprep.subr.bf16.mxu0 0
  %3402 = vmatpush1.bf16.msra.mxu0 0
  %3403 = vmatprep.subr.bf16.mxu0 0
  %3404 = vmatpush1.bf16.msra.mxu0 0
  %3405 = vmatprep.subr.bf16.mxu0 0
  %3406 = vmatpush1.bf16.msra.mxu0 0
  %3407 = vmatprep.subr.bf16.mxu0 0
  %3408 = vmatpush1.bf16.msra.mxu0 0
  %3409 = vmatprep.subr.bf16.mxu0 0
  %3410 = vmatpush1.bf16.msra.mxu0 0
  %3411 = vmatprep.subr.bf16.mxu0 0
  %3412 = vmatpush1.bf16.msra.mxu0 0
  %3413 = vmatprep.subr.bf16.mxu0 0
  %3414 = vmatpush1.bf16.msra.mxu0 0
  %3415 = vmatprep.subr.bf16.mxu0 0
  %3416 = vmatpush1.bf16.msra.mxu0 0
  %3417 = vmatprep.subr.bf16.mxu0 0
  %3418 = vmatpush1.bf16.msra.mxu0 0
  %3419 = vmatprep.subr.bf16.mxu0 0
  %3420 = vmatpush1.bf16.msra.mxu0 0
  %3421 = vmatprep.subr.bf16.mxu0 0
  %3422 = vmatpush1.bf16.msra.mxu0 0
  %3423 = vmatprep.subr.bf16.mxu0 0
  %3424 = vmatpush1.bf16.msra.mxu0 0
  %3425 = vmatprep.subr.bf16.mxu0 0
  %3426 = vmatpush1.bf16.msra.mxu0 0
  %3427 = vmatprep.subr.bf16.mxu0 0
  %3428 = vmatpush1.bf16.msra.mxu0 0
  %3429 = vmatprep.mubr.bf16.mxu0 0
  %3430 = vmatmul.mubr.bf16.gmra.mrb[0].mxu0 %v3395
  %v3431 = vpop.f32.mrb[0].mxu0
  %v3432 = vadd.f32 %v3392, %v3431
  %v3433 = vpop.f32.mrb[0].mxu0
  %v3434 = vadd.f32 %v3392, %v3433
  %v3435 = vpop.f32.mrb[0].mxu0
  %v3436 = vpop.f32.mrb[0].mxu0
  %3437 = vdwg.mxu0
  %v3440 = vrot.slane %v3432, 1
  %v3441 = vrot.slane %v3434, 1
  %v3444 = vmax.f32 %v3432, %v3440
  %v3445 = vmax.f32 %v3434, %v3441
  %v3446 = vrot.slane %v3432, 2
  %v3447 = vrot.slane %v3434, 2
  %v3450 = vmax.f32 %v3444, %v3446
  %v3451 = vmax.f32 %v3445, %v3447
  %v3452 = vsub.f32 %v3432, %v3450
  %v3453 = vsub.f32 %v3434, %v3451
  %v3454 = vmul.f32 %v3452, 1.442695
  %v3455 = vpow.pop %v3454
  %v3456 = vmul.f32 %v3453, 1.442695
  %v3457 = vpow.pop %v3456
  %v3460 = vrot.slane %v3450, 7
  %v3461 = vrot.slane %v3451, 7
  %v3464 = vsub.f32 %v3432, %v3460
  %v3465 = vsub.f32 %v3434, %v3461
  %v3466 = vmul.f32 %v3464, 1.442695
  %v3467 = vpow.pop %v3466
  %v3468 = vmul.f32 %v3465, 1.442695
  %v3469 = vpow.pop %v3468
  %v3470 = vrot.slane %v3450, 6
  %v3471 = vrot.slane %v3451, 6
  %v3474 = vsub.f32 %v3432, %v3470
  %v3475 = vsub.f32 %v3434, %v3471
  %v3476 = vmul.f32 %v3474, 1.442695
  %v3477 = vpow.pop %v3476
  %v3478 = vmul.f32 %v3475, 1.442695
  %v3479 = vpow.pop %v3478
  %v3482 = vrot.slane %v3467, 1
  %v3483 = vrot.slane %v3469, 1
  %v3486 = vadd.f32 %v3455, %v3482
  %v3487 = vadd.f32 %v3457, %v3483
  %v3490 = vrot.slane %v3477, 2
  %v3491 = vrot.slane %v3479, 2
  %v3494 = vadd.f32 %v3486, %v3490
  %v3495 = vadd.f32 %v3487, %v3491
  %v3496 = vrcp.pop %v3494
  %v3497 = vmul.f32 1.0, %v3496
  %v3498 = vrcp.pop %v3495
  %v3499 = vmul.f32 1.0, %v3498
  %v3500 = vmul.f32 %v3455, %v3497
  %v3501 = vmul.f32 %v3457, %v3499
  %v3502 = vlaneseq
  %v3503 = vshrl.u32 %v3502, 7
  %v3504 = vsub.s32 0, %v3503
  %v3505 = vrot.slane %v3500, %v3504
  %v3506 = vlaneseq
  %v3507 = vshrl.u32 %v3506, 7
  %v3508 = vsub.s32 0, %v3507
  %v3509 = vrot.slane %v3501, %v3508
  %v3510 = vmul.f32 %v3505, %v2268
  %v3511 = vmul.f32 %v3509, %v2269
  %v3514 = vrot.slane %v3497, 7
  %v3515 = vrot.slane %v3499, 7
  %v3518 = vmul.f32 %v3467, %v3514
  %v3519 = vmul.f32 %v3469, %v3515
  %v3520 = vlaneseq
  %v3521 = vshrl.u32 %v3520, 7
  %v3522 = vsub.s32 1, %v3521
  %v3523 = vrot.slane %v3518, %v3522
  %v3524 = vlaneseq
  %v3525 = vshrl.u32 %v3524, 7
  %v3526 = vsub.s32 1, %v3525
  %v3527 = vrot.slane %v3519, %v3526
  %v3528 = vmul.f32 %v3523, %v2432
  %v3529 = vmul.f32 %v3527, %v2433
  %v3530 = vadd.f32 %v3510, %v3528
  %v3531 = vadd.f32 %v3511, %v3529
  %v3532 = vrot.slane %v3497, 6
  %v3533 = vrot.slane %v3499, 6
  %v3536 = vmul.f32 %v3477, %v3532
  %v3537 = vmul.f32 %v3479, %v3533
  %v3538 = vlaneseq
  %v3539 = vshrl.u32 %v3538, 7
  %v3540 = vsub.s32 2, %v3539
  %v3541 = vrot.slane %v3536, %v3540
  %v3542 = vlaneseq
  %v3543 = vshrl.u32 %v3542, 7
  %v3544 = vsub.s32 2, %v3543
  %v3545 = vrot.slane %v3537, %v3544
  %v3546 = vmul.f32 %v3541, %v2840
  %v3547 = vmul.f32 %v3545, %v2841
  %v3548 = vadd.f32 %v3530, %v3546
  %v3549 = vadd.f32 %v3531, %v3547
  %3551 = vrot.lane.b32.xlu0 %v3548, 118
  %v3552 = vpop.permute.xlu0 %3551
  %3554 = vrot.lane.b32.xlu0 %v3548, 108
  %v3555 = vpop.permute.xlu0 %3554
  %3557 = vrot.lane.b32.xlu0 %v3548, 98
  %v3558 = vpop.permute.xlu0 %3557
  %3560 = vrot.lane.b32.xlu0 %v3548, 88
  %v3561 = vpop.permute.xlu0 %3560
  %3563 = vrot.lane.b32.xlu0 %v3548, 78
  %v3564 = vpop.permute.xlu0 %3563
  %3566 = vrot.lane.b32.xlu0 %v3548, 68
  %v3567 = vpop.permute.xlu0 %3566
  %3569 = vrot.lane.b32.xlu0 %v3548, 58
  %v3570 = vpop.permute.xlu0 %3569
  %3572 = vrot.lane.b32.xlu0 %v3548, 48
  %v3573 = vpop.permute.xlu0 %3572
  %3575 = vrot.lane.b32.xlu0 %v3548, 38
  %v3576 = vpop.permute.xlu0 %3575
  %3578 = vrot.lane.b32.xlu0 %v3548, 28
  %v3579 = vpop.permute.xlu0 %3578
  %3581 = vrot.lane.b32.xlu0 %v3548, 18
  %v3582 = vpop.permute.xlu0 %3581
  %3585 = vrot.lane.b32.xlu0 %v3548, 8
  %v3586 = vpop.permute.xlu0 %3585
  %3587 = vrot.lane.b32.xlu0 %v3549, 8
  %v3588 = vpop.permute.xlu0 %3587
  %v3589 = vsel %vm2853, %v3586, %v3588
  %3591 = vrot.lane.b32.xlu0 %v3549, 126
  %v3592 = vpop.permute.xlu0 %3591
  %3594 = vrot.lane.b32.xlu0 %v3549, 116
  %v3595 = vpop.permute.xlu0 %3594
  %3597 = vrot.lane.b32.xlu0 %v3549, 106
  %v3598 = vpop.permute.xlu0 %3597
  %v3600 = vcombine.low %v3548, %v3555
  %v3601 = vcombine.high %v3548, %v3555
  %v3603 = vunpack.c.l.s4 1983009808
  %v3604 = vunpack.c.0.s8 %v3603
  %v3605 = vlaneseq
  %v3606 = vshrl.u32 %v3605, 7
  %v3607 = vsub.s32 %v3604, %v3606
  %v3608 = vrot.slane %v3600, %v3607
  %v3610 = vunpack.c.l.s4 1983009808
  %v3611 = vunpack.c.0.s8 %v3610
  %v3612 = vlaneseq
  %v3613 = vshrl.u32 %v3612, 7
  %v3614 = vsub.s32 %v3611, %v3613
  %v3615 = vrot.slane %v3601, %v3614
  %v3616 = vcombine.low %v3552, %v3558
  %v3617 = vcombine.high %v3552, %v3558
  %v3619 = vunpack.c.l.s4 1983009808
  %v3620 = vunpack.c.0.s8 %v3619
  %v3621 = vlaneseq
  %v3622 = vshrl.u32 %v3621, 7
  %v3623 = vsub.s32 %v3620, %v3622
  %v3624 = vrot.slane %v3616, %v3623
  %v3626 = vunpack.c.l.s4 1983009808
  %v3627 = vunpack.c.0.s8 %v3626
  %v3628 = vlaneseq
  %v3629 = vshrl.u32 %v3628, 7
  %v3630 = vsub.s32 %v3627, %v3629
  %v3631 = vrot.slane %v3617, %v3630
  %v3632 = vcombine.low %v3561, %v3567
  %v3633 = vcombine.high %v3561, %v3567
  %v3635 = vunpack.c.l.s4 1983009808
  %v3636 = vunpack.c.0.s8 %v3635
  %v3637 = vlaneseq
  %v3638 = vshrl.u32 %v3637, 7
  %v3639 = vsub.s32 %v3636, %v3638
  %v3640 = vrot.slane %v3632, %v3639
  %v3642 = vunpack.c.l.s4 1983009808
  %v3643 = vunpack.c.0.s8 %v3642
  %v3644 = vlaneseq
  %v3645 = vshrl.u32 %v3644, 7
  %v3646 = vsub.s32 %v3643, %v3645
  %v3647 = vrot.slane %v3633, %v3646
  %v3648 = vcombine.low %v3564, %v3570
  %v3649 = vcombine.high %v3564, %v3570
  %v3651 = vunpack.c.l.s4 1983009808
  %v3652 = vunpack.c.0.s8 %v3651
  %v3653 = vlaneseq
  %v3654 = vshrl.u32 %v3653, 7
  %v3655 = vsub.s32 %v3652, %v3654
  %v3656 = vrot.slane %v3648, %v3655
  %v3658 = vunpack.c.l.s4 1983009808
  %v3659 = vunpack.c.0.s8 %v3658
  %v3660 = vlaneseq
  %v3661 = vshrl.u32 %v3660, 7
  %v3662 = vsub.s32 %v3659, %v3661
  %v3663 = vrot.slane %v3649, %v3662
  %v3664 = vcombine.low %v3608, %v3624
  %v3665 = vcombine.high %v3608, %v3624
  %v3667 = vunpack.c.l.s4 1934713408
  %v3668 = vunpack.c.0.s8 %v3667
  %v3669 = vlaneseq
  %v3670 = vshrl.u32 %v3669, 7
  %v3671 = vsub.s32 %v3668, %v3670
  %v3672 = vrot.slane %v3664, %v3671
  %v3674 = vunpack.c.l.s4 1934713408
  %v3675 = vunpack.c.0.s8 %v3674
  %v3676 = vlaneseq
  %v3677 = vshrl.u32 %v3676, 7
  %v3678 = vsub.s32 %v3675, %v3677
  %v3679 = vrot.slane %v3665, %v3678
  %v3680 = vcombine.low %v3615, %v3631
  %v3681 = vcombine.high %v3615, %v3631
  %v3683 = vunpack.c.l.s4 1934713408
  %v3684 = vunpack.c.0.s8 %v3683
  %v3685 = vlaneseq
  %v3686 = vshrl.u32 %v3685, 7
  %v3687 = vsub.s32 %v3684, %v3686
  %v3688 = vrot.slane %v3680, %v3687
  %v3690 = vunpack.c.l.s4 1934713408
  %v3691 = vunpack.c.0.s8 %v3690
  %v3692 = vlaneseq
  %v3693 = vshrl.u32 %v3692, 7
  %v3694 = vsub.s32 %v3691, %v3693
  %v3695 = vrot.slane %v3681, %v3694
  %v3696 = vcombine.low %v3640, %v3656
  %v3697 = vcombine.high %v3640, %v3656
  %v3699 = vunpack.c.l.s4 1934713408
  %v3700 = vunpack.c.0.s8 %v3699
  %v3701 = vlaneseq
  %v3702 = vshrl.u32 %v3701, 7
  %v3703 = vsub.s32 %v3700, %v3702
  %v3704 = vrot.slane %v3696, %v3703
  %v3706 = vunpack.c.l.s4 1934713408
  %v3707 = vunpack.c.0.s8 %v3706
  %v3708 = vlaneseq
  %v3709 = vshrl.u32 %v3708, 7
  %v3710 = vsub.s32 %v3707, %v3709
  %v3711 = vrot.slane %v3697, %v3710
  %v3712 = vcombine.low %v3647, %v3663
  %v3713 = vcombine.high %v3647, %v3663
  %v3715 = vunpack.c.l.s4 1934713408
  %v3716 = vunpack.c.0.s8 %v3715
  %v3717 = vlaneseq
  %v3718 = vshrl.u32 %v3717, 7
  %v3719 = vsub.s32 %v3716, %v3718
  %v3720 = vrot.slane %v3712, %v3719
  %v3722 = vunpack.c.l.s4 1934713408
  %v3723 = vunpack.c.0.s8 %v3722
  %v3724 = vlaneseq
  %v3725 = vshrl.u32 %v3724, 7
  %v3726 = vsub.s32 %v3723, %v3725
  %v3727 = vrot.slane %v3713, %v3726
  %v3728 = vcombine.low %v3672, %v3704
  %v3729 = vcombine.high %v3672, %v3704
  %v3730 = vcombine.low %v3679, %v3711
  %v3731 = vcombine.high %v3679, %v3711
  %v3732 = vcombine.low %v3688, %v3720
  %v3733 = vcombine.high %v3688, %v3720
  %v3734 = vcombine.low %v3695, %v3727
  %v3735 = vcombine.high %v3695, %v3727
  %v3736 = vcombine.low %v3573, %v3579
  %v3737 = vcombine.high %v3573, %v3579
  %v3739 = vunpack.c.l.s4 1983009808
  %v3740 = vunpack.c.0.s8 %v3739
  %v3741 = vlaneseq
  %v3742 = vshrl.u32 %v3741, 7
  %v3743 = vsub.s32 %v3740, %v3742
  %v3744 = vrot.slane %v3736, %v3743
  %v3746 = vunpack.c.l.s4 1983009808
  %v3747 = vunpack.c.0.s8 %v3746
  %v3748 = vlaneseq
  %v3749 = vshrl.u32 %v3748, 7
  %v3750 = vsub.s32 %v3747, %v3749
  %v3751 = vrot.slane %v3737, %v3750
  %v3752 = vcombine.low %v3576, %v3582
  %v3753 = vcombine.high %v3576, %v3582
  %v3755 = vunpack.c.l.s4 1983009808
  %v3756 = vunpack.c.0.s8 %v3755
  %v3757 = vlaneseq
  %v3758 = vshrl.u32 %v3757, 7
  %v3759 = vsub.s32 %v3756, %v3758
  %v3760 = vrot.slane %v3752, %v3759
  %v3762 = vunpack.c.l.s4 1983009808
  %v3763 = vunpack.c.0.s8 %v3762
  %v3764 = vlaneseq
  %v3765 = vshrl.u32 %v3764, 7
  %v3766 = vsub.s32 %v3763, %v3765
  %v3767 = vrot.slane %v3753, %v3766
  %v3768 = vcombine.low %v3589, %v3595
  %v3769 = vcombine.high %v3589, %v3595
  %v3771 = vunpack.c.l.s4 1983009808
  %v3772 = vunpack.c.0.s8 %v3771
  %v3773 = vlaneseq
  %v3774 = vshrl.u32 %v3773, 7
  %v3775 = vsub.s32 %v3772, %v3774
  %v3776 = vrot.slane %v3768, %v3775
  %v3778 = vunpack.c.l.s4 1983009808
  %v3779 = vunpack.c.0.s8 %v3778
  %v3780 = vlaneseq
  %v3781 = vshrl.u32 %v3780, 7
  %v3782 = vsub.s32 %v3779, %v3781
  %v3783 = vrot.slane %v3769, %v3782
  %v3784 = vcombine.low %v3592, %v3598
  %v3785 = vcombine.high %v3592, %v3598
  %v3787 = vunpack.c.l.s4 1983009808
  %v3788 = vunpack.c.0.s8 %v3787
  %v3789 = vlaneseq
  %v3790 = vshrl.u32 %v3789, 7
  %v3791 = vsub.s32 %v3788, %v3790
  %v3792 = vrot.slane %v3784, %v3791
  %v3794 = vunpack.c.l.s4 1983009808
  %v3795 = vunpack.c.0.s8 %v3794
  %v3796 = vlaneseq
  %v3797 = vshrl.u32 %v3796, 7
  %v3798 = vsub.s32 %v3795, %v3797
  %v3799 = vrot.slane %v3785, %v3798
  %v3800 = vcombine.low %v3744, %v3760
  %v3801 = vcombine.high %v3744, %v3760
  %v3803 = vunpack.c.l.s4 1934713408
  %v3804 = vunpack.c.0.s8 %v3803
  %v3805 = vlaneseq
  %v3806 = vshrl.u32 %v3805, 7
  %v3807 = vsub.s32 %v3804, %v3806
  %v3808 = vrot.slane %v3800, %v3807
  %v3810 = vunpack.c.l.s4 1934713408
  %v3811 = vunpack.c.0.s8 %v3810
  %v3812 = vlaneseq
  %v3813 = vshrl.u32 %v3812, 7
  %v3814 = vsub.s32 %v3811, %v3813
  %v3815 = vrot.slane %v3801, %v3814
  %v3816 = vcombine.low %v3751, %v3767
  %v3817 = vcombine.high %v3751, %v3767
  %v3819 = vunpack.c.l.s4 1934713408
  %v3820 = vunpack.c.0.s8 %v3819
  %v3821 = vlaneseq
  %v3822 = vshrl.u32 %v3821, 7
  %v3823 = vsub.s32 %v3820, %v3822
  %v3824 = vrot.slane %v3816, %v3823
  %v3826 = vunpack.c.l.s4 1934713408
  %v3827 = vunpack.c.0.s8 %v3826
  %v3828 = vlaneseq
  %v3829 = vshrl.u32 %v3828, 7
  %v3830 = vsub.s32 %v3827, %v3829
  %v3831 = vrot.slane %v3817, %v3830
  %v3832 = vcombine.low %v3776, %v3792
  %v3833 = vcombine.high %v3776, %v3792
  %v3835 = vunpack.c.l.s4 1934713408
  %v3836 = vunpack.c.0.s8 %v3835
  %v3837 = vlaneseq
  %v3838 = vshrl.u32 %v3837, 7
  %v3839 = vsub.s32 %v3836, %v3838
  %v3840 = vrot.slane %v3832, %v3839
  %v3842 = vunpack.c.l.s4 1934713408
  %v3843 = vunpack.c.0.s8 %v3842
  %v3844 = vlaneseq
  %v3845 = vshrl.u32 %v3844, 7
  %v3846 = vsub.s32 %v3843, %v3845
  %v3847 = vrot.slane %v3833, %v3846
  %v3848 = vcombine.low %v3783, %v3799
  %v3849 = vcombine.high %v3783, %v3799
  %v3851 = vunpack.c.l.s4 1934713408
  %v3852 = vunpack.c.0.s8 %v3851
  %v3853 = vlaneseq
  %v3854 = vshrl.u32 %v3853, 7
  %v3855 = vsub.s32 %v3852, %v3854
  %v3856 = vrot.slane %v3848, %v3855
  %v3858 = vunpack.c.l.s4 1934713408
  %v3859 = vunpack.c.0.s8 %v3858
  %v3860 = vlaneseq
  %v3861 = vshrl.u32 %v3860, 7
  %v3862 = vsub.s32 %v3859, %v3861
  %v3863 = vrot.slane %v3849, %v3862
  %v3864 = vcombine.low %v3808, %v3840
  %v3865 = vcombine.high %v3808, %v3840
  %v3866 = vcombine.low %v3815, %v3847
  %v3867 = vcombine.high %v3815, %v3847
  %v3868 = vcombine.low %v3824, %v3856
  %v3869 = vcombine.high %v3824, %v3856
  %v3870 = vcombine.low %v3831, %v3863
  %v3871 = vcombine.high %v3831, %v3863
  %v3872 = vcombine.low %v3728, %v3730
  %v3873 = vcombine.high %v3728, %v3730
  %v3875 = vunpack.c.l.s4 1983009808
  %v3876 = vunpack.c.0.s8 %v3875
  %v3877 = vlaneseq
  %v3878 = vshrl.u32 %v3877, 7
  %v3879 = vsub.s32 %v3876, %v3878
  %v3880 = vrot.slane %v3872, %v3879
  %v3882 = vunpack.c.l.s4 1983009808
  %v3883 = vunpack.c.0.s8 %v3882
  %v3884 = vlaneseq
  %v3885 = vshrl.u32 %v3884, 7
  %v3886 = vsub.s32 %v3883, %v3885
  %v3887 = vrot.slane %v3873, %v3886
  %v3888 = vcombine.low %v3729, %v3731
  %v3889 = vcombine.high %v3729, %v3731
  %v3891 = vunpack.c.l.s4 1983009808
  %v3892 = vunpack.c.0.s8 %v3891
  %v3893 = vlaneseq
  %v3894 = vshrl.u32 %v3893, 7
  %v3895 = vsub.s32 %v3892, %v3894
  %v3896 = vrot.slane %v3888, %v3895
  %v3898 = vunpack.c.l.s4 1983009808
  %v3899 = vunpack.c.0.s8 %v3898
  %v3900 = vlaneseq
  %v3901 = vshrl.u32 %v3900, 7
  %v3902 = vsub.s32 %v3899, %v3901
  %v3903 = vrot.slane %v3889, %v3902
  %v3904 = vcombine.low %v3732, %v3734
  %v3905 = vcombine.high %v3732, %v3734
  %v3907 = vunpack.c.l.s4 1983009808
  %v3908 = vunpack.c.0.s8 %v3907
  %v3909 = vlaneseq
  %v3910 = vshrl.u32 %v3909, 7
  %v3911 = vsub.s32 %v3908, %v3910
  %v3912 = vrot.slane %v3904, %v3911
  %v3914 = vunpack.c.l.s4 1983009808
  %v3915 = vunpack.c.0.s8 %v3914
  %v3916 = vlaneseq
  %v3917 = vshrl.u32 %v3916, 7
  %v3918 = vsub.s32 %v3915, %v3917
  %v3919 = vrot.slane %v3905, %v3918
  %v3920 = vcombine.low %v3733, %v3735
  %v3921 = vcombine.high %v3733, %v3735
  %v3923 = vunpack.c.l.s4 1983009808
  %v3924 = vunpack.c.0.s8 %v3923
  %v3925 = vlaneseq
  %v3926 = vshrl.u32 %v3925, 7
  %v3927 = vsub.s32 %v3924, %v3926
  %v3928 = vrot.slane %v3920, %v3927
  %v3930 = vunpack.c.l.s4 1983009808
  %v3931 = vunpack.c.0.s8 %v3930
  %v3932 = vlaneseq
  %v3933 = vshrl.u32 %v3932, 7
  %v3934 = vsub.s32 %v3931, %v3933
  %v3935 = vrot.slane %v3921, %v3934
  %v3936 = vcombine.low %v3880, %v3896
  %v3937 = vcombine.high %v3880, %v3896
  %v3939 = vunpack.c.l.s4 1934713408
  %v3940 = vunpack.c.0.s8 %v3939
  %v3941 = vlaneseq
  %v3942 = vshrl.u32 %v3941, 7
  %v3943 = vsub.s32 %v3940, %v3942
  %v3944 = vrot.slane %v3936, %v3943
  %v3946 = vunpack.c.l.s4 1934713408
  %v3947 = vunpack.c.0.s8 %v3946
  %v3948 = vlaneseq
  %v3949 = vshrl.u32 %v3948, 7
  %v3950 = vsub.s32 %v3947, %v3949
  %v3951 = vrot.slane %v3937, %v3950
  %v3952 = vcombine.low %v3887, %v3903
  %v3953 = vcombine.high %v3887, %v3903
  %v3955 = vunpack.c.l.s4 1934713408
  %v3956 = vunpack.c.0.s8 %v3955
  %v3957 = vlaneseq
  %v3958 = vshrl.u32 %v3957, 7
  %v3959 = vsub.s32 %v3956, %v3958
  %v3960 = vrot.slane %v3952, %v3959
  %v3962 = vunpack.c.l.s4 1934713408
  %v3963 = vunpack.c.0.s8 %v3962
  %v3964 = vlaneseq
  %v3965 = vshrl.u32 %v3964, 7
  %v3966 = vsub.s32 %v3963, %v3965
  %v3967 = vrot.slane %v3953, %v3966
  %v3968 = vcombine.low %v3912, %v3928
  %v3969 = vcombine.high %v3912, %v3928
  %v3971 = vunpack.c.l.s4 1934713408
  %v3972 = vunpack.c.0.s8 %v3971
  %v3973 = vlaneseq
  %v3974 = vshrl.u32 %v3973, 7
  %v3975 = vsub.s32 %v3972, %v3974
  %v3976 = vrot.slane %v3968, %v3975
  %v3978 = vunpack.c.l.s4 1934713408
  %v3979 = vunpack.c.0.s8 %v3978
  %v3980 = vlaneseq
  %v3981 = vshrl.u32 %v3980, 7
  %v3982 = vsub.s32 %v3979, %v3981
  %v3983 = vrot.slane %v3969, %v3982
  %v3984 = vcombine.low %v3919, %v3935
  %v3985 = vcombine.high %v3919, %v3935
  %v3987 = vunpack.c.l.s4 1934713408
  %v3988 = vunpack.c.0.s8 %v3987
  %v3989 = vlaneseq
  %v3990 = vshrl.u32 %v3989, 7
  %v3991 = vsub.s32 %v3988, %v3990
  %v3992 = vrot.slane %v3984, %v3991
  %v3994 = vunpack.c.l.s4 1934713408
  %v3995 = vunpack.c.0.s8 %v3994
  %v3996 = vlaneseq
  %v3997 = vshrl.u32 %v3996, 7
  %v3998 = vsub.s32 %v3995, %v3997
  %v3999 = vrot.slane %v3985, %v3998
  %v4000 = vcombine.low %v3944, %v3976
  %v4001 = vcombine.high %v3944, %v3976
  %v4002 = vcombine.low %v3951, %v3983
  %v4003 = vcombine.high %v3951, %v3983
  %v4004 = vcombine.low %v3960, %v3992
  %v4005 = vcombine.high %v3960, %v3992
  %v4006 = vcombine.low %v3967, %v3999
  %v4007 = vcombine.high %v3967, %v3999
  %v4008 = vcombine.low %v3864, %v3866
  %v4009 = vcombine.high %v3864, %v3866
  %v4011 = vunpack.c.l.s4 1983009808
  %v4012 = vunpack.c.0.s8 %v4011
  %v4013 = vlaneseq
  %v4014 = vshrl.u32 %v4013, 7
  %v4015 = vsub.s32 %v4012, %v4014
  %v4016 = vrot.slane %v4008, %v4015
  %v4018 = vunpack.c.l.s4 1983009808
  %v4019 = vunpack.c.0.s8 %v4018
  %v4020 = vlaneseq
  %v4021 = vshrl.u32 %v4020, 7
  %v4022 = vsub.s32 %v4019, %v4021
  %v4023 = vrot.slane %v4009, %v4022
  %v4024 = vcombine.low %v3865, %v3867
  %v4025 = vcombine.high %v3865, %v3867
  %v4027 = vunpack.c.l.s4 1983009808
  %v4028 = vunpack.c.0.s8 %v4027
  %v4029 = vlaneseq
  %v4030 = vshrl.u32 %v4029, 7
  %v4031 = vsub.s32 %v4028, %v4030
  %v4032 = vrot.slane %v4024, %v4031
  %v4034 = vunpack.c.l.s4 1983009808
  %v4035 = vunpack.c.0.s8 %v4034
  %v4036 = vlaneseq
  %v4037 = vshrl.u32 %v4036, 7
  %v4038 = vsub.s32 %v4035, %v4037
  %v4039 = vrot.slane %v4025, %v4038
  %v4040 = vcombine.low %v3868, %v3870
  %v4041 = vcombine.high %v3868, %v3870
  %v4043 = vunpack.c.l.s4 1983009808
  %v4044 = vunpack.c.0.s8 %v4043
  %v4045 = vlaneseq
  %v4046 = vshrl.u32 %v4045, 7
  %v4047 = vsub.s32 %v4044, %v4046
  %v4048 = vrot.slane %v4040, %v4047
  %v4050 = vunpack.c.l.s4 1983009808
  %v4051 = vunpack.c.0.s8 %v4050
  %v4052 = vlaneseq
  %v4053 = vshrl.u32 %v4052, 7
  %v4054 = vsub.s32 %v4051, %v4053
  %v4055 = vrot.slane %v4041, %v4054
  %v4056 = vcombine.low %v3869, %v3871
  %v4057 = vcombine.high %v3869, %v3871
  %v4059 = vunpack.c.l.s4 1983009808
  %v4060 = vunpack.c.0.s8 %v4059
  %v4061 = vlaneseq
  %v4062 = vshrl.u32 %v4061, 7
  %v4063 = vsub.s32 %v4060, %v4062
  %v4064 = vrot.slane %v4056, %v4063
  %v4066 = vunpack.c.l.s4 1983009808
  %v4067 = vunpack.c.0.s8 %v4066
  %v4068 = vlaneseq
  %v4069 = vshrl.u32 %v4068, 7
  %v4070 = vsub.s32 %v4067, %v4069
  %v4071 = vrot.slane %v4057, %v4070
  %v4072 = vcombine.low %v4016, %v4032
  %v4073 = vcombine.high %v4016, %v4032
  %v4075 = vunpack.c.l.s4 1934713408
  %v4076 = vunpack.c.0.s8 %v4075
  %v4077 = vlaneseq
  %v4078 = vshrl.u32 %v4077, 7
  %v4079 = vsub.s32 %v4076, %v4078
  %v4080 = vrot.slane %v4072, %v4079
  %v4082 = vunpack.c.l.s4 1934713408
  %v4083 = vunpack.c.0.s8 %v4082
  %v4084 = vlaneseq
  %v4085 = vshrl.u32 %v4084, 7
  %v4086 = vsub.s32 %v4083, %v4085
  %v4087 = vrot.slane %v4073, %v4086
  %v4088 = vcombine.low %v4023, %v4039
  %v4089 = vcombine.high %v4023, %v4039
  %v4091 = vunpack.c.l.s4 1934713408
  %v4092 = vunpack.c.0.s8 %v4091
  %v4093 = vlaneseq
  %v4094 = vshrl.u32 %v4093, 7
  %v4095 = vsub.s32 %v4092, %v4094
  %v4096 = vrot.slane %v4088, %v4095
  %v4098 = vunpack.c.l.s4 1934713408
  %v4099 = vunpack.c.0.s8 %v4098
  %v4100 = vlaneseq
  %v4101 = vshrl.u32 %v4100, 7
  %v4102 = vsub.s32 %v4099, %v4101
  %v4103 = vrot.slane %v4089, %v4102
  %v4104 = vcombine.low %v4048, %v4064
  %v4105 = vcombine.high %v4048, %v4064
  %v4107 = vunpack.c.l.s4 1934713408
  %v4108 = vunpack.c.0.s8 %v4107
  %v4109 = vlaneseq
  %v4110 = vshrl.u32 %v4109, 7
  %v4111 = vsub.s32 %v4108, %v4110
  %v4112 = vrot.slane %v4104, %v4111
  %v4114 = vunpack.c.l.s4 1934713408
  %v4115 = vunpack.c.0.s8 %v4114
  %v4116 = vlaneseq
  %v4117 = vshrl.u32 %v4116, 7
  %v4118 = vsub.s32 %v4115, %v4117
  %v4119 = vrot.slane %v4105, %v4118
  %v4120 = vcombine.low %v4055, %v4071
  %v4121 = vcombine.high %v4055, %v4071
  %v4123 = vunpack.c.l.s4 1934713408
  %v4124 = vunpack.c.0.s8 %v4123
  %v4125 = vlaneseq
  %v4126 = vshrl.u32 %v4125, 7
  %v4127 = vsub.s32 %v4124, %v4126
  %v4128 = vrot.slane %v4120, %v4127
  %v4130 = vunpack.c.l.s4 1934713408
  %v4131 = vunpack.c.0.s8 %v4130
  %v4132 = vlaneseq
  %v4133 = vshrl.u32 %v4132, 7
  %v4134 = vsub.s32 %v4131, %v4133
  %v4135 = vrot.slane %v4121, %v4134
  %v4136 = vcombine.low %v4080, %v4112
  %v4137 = vcombine.high %v4080, %v4112
  %v4138 = vcombine.low %v4087, %v4119
  %v4139 = vcombine.high %v4087, %v4119
  %v4140 = vcombine.low %v4096, %v4128
  %v4141 = vcombine.high %v4096, %v4128
  %v4142 = vcombine.low %v4103, %v4135
  %v4143 = vcombine.high %v4103, %v4135
  %4145 = vrot.lane.b32.xlu0 %v4001, 8
  %v4146 = vpop.permute.xlu0 %4145
  %4149 = vrot.lane.b32.xlu0 %v4002, 16
  %v4150 = vpop.permute.xlu0 %4149
  %4153 = vrot.lane.b32.xlu0 %v4003, 24
  %v4154 = vpop.permute.xlu0 %4153
  %4157 = vrot.lane.b32.xlu0 %v4004, 32
  %v4158 = vpop.permute.xlu0 %4157
  %4161 = vrot.lane.b32.xlu0 %v4005, 40
  %v4162 = vpop.permute.xlu0 %4161
  %4165 = vrot.lane.b32.xlu0 %v4006, 48
  %v4166 = vpop.permute.xlu0 %4165
  %4169 = vrot.lane.b32.xlu0 %v4007, 56
  %v4170 = vpop.permute.xlu0 %4169
  %4173 = vrot.lane.b32.xlu0 %v4136, 64
  %v4174 = vpop.permute.xlu0 %4173
  %4177 = vrot.lane.b32.xlu0 %v4137, 72
  %v4178 = vpop.permute.xlu0 %4177
  %4181 = vrot.lane.b32.xlu0 %v4138, 80
  %v4182 = vpop.permute.xlu0 %4181
  %4185 = vrot.lane.b32.xlu0 %v4139, 88
  %v4186 = vpop.permute.xlu0 %4185
  %4189 = vrot.lane.b32.xlu0 %v4140, 96
  %v4190 = vpop.permute.xlu0 %4189
  %4193 = vrot.lane.b32.xlu0 %v4141, 104
  %v4194 = vpop.permute.xlu0 %4193
  %4197 = vrot.lane.b32.xlu0 %v4142, 112
  %v4198 = vpop.permute.xlu0 %4197
  %4201 = vrot.lane.b32.xlu0 %v4143, 120
  %v4202 = vpop.permute.xlu0 %4201
  %v4204 = vsel %vm2853, %v4000, %v4146
  %v4205 = vsel %vm986, %v4204, %v4150
  %vm4206 = vcmask 195584
  %v4207 = vsel %vm4206, %v4205, %v4154
  %v4208 = vsel %vm2129, %v4207, %v4158
  %vm4209 = vcmask 326656
  %v4210 = vsel %vm4209, %v4208, %v4162
  %v4211 = vsel %vm2612, %v4210, %v4166
  %vm4212 = vcmask 457728
  %v4213 = vsel %vm4212, %v4211, %v4170
  %v4214 = vsel %vm46, %v4213, %v4174
  %v4215 = vsel %vm2380, %v4214, %v4178
  %v4216 = vsel %vm2080, %v4215, %v4182
  %vm4217 = vcmask 719872
  %v4218 = vsel %vm4217, %v4216, %v4186
  %vm4219 = vcmask 785408
  %v4220 = vsel %vm4219, %v4218, %v4190
  %vm4221 = vcmask 850944
  %v4222 = vsel %vm4221, %v4220, %v4194
  %vm4223 = vcmask 916480
  %v4224 = vsel %vm4223, %v4222, %v4198
  %vm4225 = vcmask 982016
  %v4226 = vsel %vm4225, %v4224, %v4202
  %4227 = vst [vmem:[%s6] sm:$0xff] %v4226
  // Predicated region
  $region26: #{siu_forward.1} parent=0 // pred_check
    _
  $region27: #{siu_forward.1} parent=0 // pred_check_branch
    %4229 = sbr.rel (0) target = $region29
  $region28: #{siu_forward.1} parent=0 // pred_region
    _
  $region29: #{siu_forward.1} parent=0 // pred_fallthru
    _
  // Predicated region
  $region30: #{siu_forward.1} parent=0 // pred_check
    _
  $region31: #{siu_forward.1} parent=0 // pred_check_branch
    %4231 = sbr.rel (0) target = $region33
  $region32: #{siu_forward.1} parent=0 // pred_region
    _
  $region33: #{siu_forward.1} parent=0 // pred_fallthru
    _

</llo_original>
